<compile_context>
chip_gen: v7x
topology: tpu7x:2x2x1
jax: 0.10.0
libtpu: 0.0.40
codegen_flags: <defaults>
</compile_context>

<pallas_src>
import functools
import math

import jax
import jax.numpy as jnp
from jax.experimental import pallas as pl
from jax.experimental.pallas import tpu as pltpu


# ----------------- small ViT hyperparameters (structure of the module) -----------------
B, C, H, W = 2, 3, 16, 16      # batch, channels, image height/width (NCHW)
P = 8                          # patch size  -> 2x2 grid of patches
D = 32                         # hidden dim
HEADS = 4
DH = D // HEADS                # per-head dim
MLP = 64                       # feed-forward dim
LAYERS = 2                     # transformer blocks
NUM_CLASSES = 62               # fc head output (d_out)
NC_PAD = 128                   # fc head padded to lane-dense 128 columns (sliced outside)
GH, GW = H // P, W // P
NPATCH = GH * GW
S = NPATCH + 1                 # sequence length incl. class token
LN_EPS = 1e-6                  # nn.LayerNorm(dim, eps=1e-6) in the reference ViT
ATTN_SCALE = 1.0 / math.sqrt(DH)


# --------------------------------- in-kernel helpers ---------------------------------
def _layernorm(x, g, b):
    mu = jnp.mean(x, axis=-1, keepdims=True)
    var = jnp.mean(jnp.square(x - mu), axis=-1, keepdims=True)   # biased var (torch LN)
    return (x - mu) * jax.lax.rsqrt(var + LN_EPS) * g + b


def _erf(x):
    # TODO(synk): exact lax.erf lowering inside Mosaic is not guaranteed, so erf is
    # computed with the Abramowitz & Stegun 7.1.26 polynomial (|abs err| < 1.5e-7,
    # uses only EUP exp + VPU ops) instead of the erf primitive.
    pp = 0.3275911
    a1, a2, a3, a4, a5 = 0.254829592, -0.284496736, 1.421413741, -1.453152027, 1.061405429
    ax = jnp.abs(x)
    t = 1.0 / (1.0 + pp * ax)
    poly = ((((a5 * t + a4) * t + a3) * t + a2) * t + a1) * t
    y = 1.0 - poly * jnp.exp(-(ax * ax))
    return jnp.where(x >= 0.0, y, -y)


def _gelu(x):
    # GELU(x) = 0.5 x (1 + erf(x / sqrt(2)))  (matches F.gelu exact-erf up to ~1e-7)
    return 0.5 * x * (1.0 + _erf(x * (1.0 / math.sqrt(2.0))))


# --------------------------------- fused ViT kernel ---------------------------------
def _vit_kernel(patches_ref, pw_ref, pb_ref, cls_ref, pos_ref,
                ln1_g_ref, ln1_b_ref, wqkv_ref, bqkv_ref, wo_ref, bo_ref,
                ln2_g_ref, ln2_b_ref, w1_ref, b1_ref, w2_ref, b2_ref,
                lnf_g_ref, lnf_b_ref, fcw_ref, fcb_ref,
                out_ref, *, batch):
    # ---- patch embedding (Conv2d(k=P, stride=P) == im2col matmul), cls token, pos ----
    tok = jnp.dot(patches_ref[...], pw_ref[...],
                  preferred_element_type=jnp.float32) + pb_ref[...]      # (batch*NPATCH, D)
    cls = cls_ref[...]                                                   # (1, D)
    pos = pos_ref[...]                                                   # (S, D)
    z_parts = []
    for bi in range(batch):
        zb = jnp.concatenate([cls, tok[bi * NPATCH:(bi + 1) * NPATCH, :]], axis=0) + pos
        z_parts.append(zb)
    z = jnp.concatenate(z_parts, axis=0)                                 # (batch*S, D)

    # ---- transformer blocks (pre-norm; dropout = identity at inference) ----
    def layer_body(l, z):
        # --- multi-head self-attention ---
        h = _layernorm(z, ln1_g_ref[l], ln1_b_ref[l])
        qkv = jnp.dot(h, wqkv_ref[l], preferred_element_type=jnp.float32) + bqkv_ref[l]
        q = qkv[:, 0 * D:1 * D]
        k = qkv[:, 1 * D:2 * D]
        v = qkv[:, 2 * D:3 * D]
        batch_outs = []
        for bi in range(batch):
            r0, r1 = bi * S, (bi + 1) * S
            head_outs = []
            for hh in range(HEADS):
                c0, c1 = hh * DH, (hh + 1) * DH
                qh = q[r0:r1, c0:c1]                                     # (S, DH)
                kh = k[r0:r1, c0:c1]
                vh = v[r0:r1, c0:c1]
                s = jnp.dot(qh, kh.T, preferred_element_type=jnp.float32) * ATTN_SCALE
                s = s - jnp.max(s, axis=-1, keepdims=True)               # stable softmax
                pr = jnp.exp(s)
                pr = pr / jnp.sum(pr, axis=-1, keepdims=True)
                head_outs.append(jnp.dot(pr, vh, preferred_element_type=jnp.float32))
            batch_outs.append(jnp.concatenate(head_outs, axis=-1))       # (S, D)
        attn = jnp.concatenate(batch_outs, axis=0)                       # (batch*S, D)
        o = jnp.dot(attn, wo_ref[l], preferred_element_type=jnp.float32) + bo_ref[l]
        z = z + o
        # --- MLP (GELU fused in-kernel) ---
        h2 = _layernorm(z, ln2_g_ref[l], ln2_b_ref[l])
        a = jnp.dot(h2, w1_ref[l], preferred_element_type=jnp.float32) + b1_ref[l]
        a = _gelu(a)
        m = jnp.dot(a, w2_ref[l], preferred_element_type=jnp.float32) + b2_ref[l]
        return z + m

    z = jax.lax.fori_loop(0, LAYERS, layer_body, z, unroll=True)

    # ---- final LayerNorm, CLS token, fc head (lane-dense 128-wide padded output) ----
    zf = _layernorm(z, lnf_g_ref[...], lnf_b_ref[...])
    cls_rows = jnp.concatenate([zf[bi * S:bi * S + 1, :] for bi in range(batch)], axis=0)
    out_ref[...] = jnp.dot(cls_rows, fcw_ref[...],
                           preferred_element_type=jnp.float32) + fcb_ref[...]


def _full_block_spec(shape):
    nd = len(shape)
    return pl.BlockSpec(shape, lambda i, _nd=nd: (0,) * _nd)


# --------------------------------- parameters ---------------------------------
def init_params(key):
    def normal(k, shape, scale=0.02):
        return scale * jax.random.normal(k, shape, dtype=jnp.float32)

    ks = iter(jax.random.split(key, 16))
    params = {
        "patch_w": normal(next(ks), (C * P * P, D)),   # Conv2d(C, D, P, stride=P) flattened
        "patch_b": jnp.zeros((1, D), jnp.float32),
        "cls": normal(next(ks), (1, D)),
        "pos": normal(next(ks), (S, D)),
        # per-layer weights stacked along a leading LAYERS axis
        "ln1_g": jnp.ones((LAYERS, 1, D), jnp.float32),
        "ln1_b": jnp.zeros((LAYERS, 1, D), jnp.float32),
        "wqkv": normal(next(ks), (LAYERS, D, 3 * D)),  # fused [Wq | Wk | Wv]
        "bqkv": jnp.zeros((LAYERS, 1, 3 * D), jnp.float32),
        "wo": normal(next(ks), (LAYERS, D, D)),
        "bo": jnp.zeros((LAYERS, 1, D), jnp.float32),
        "ln2_g": jnp.ones((LAYERS, 1, D), jnp.float32),
        "ln2_b": jnp.zeros((LAYERS, 1, D), jnp.float32),
        "w1": normal(next(ks), (LAYERS, D, MLP)),
        "b1": jnp.zeros((LAYERS, 1, MLP), jnp.float32),
        "w2": normal(next(ks), (LAYERS, MLP, D)),
        "b2": jnp.zeros((LAYERS, 1, D), jnp.float32),
        "ln_g": jnp.ones((1, D), jnp.float32),
        "ln_b": jnp.zeros((1, D), jnp.float32),
        "fc_w": normal(next(ks), (D, NUM_CLASSES)),
        "fc_b": jnp.zeros((1, NUM_CLASSES), jnp.float32),
    }
    return params


# --------------------------------- forward pass ---------------------------------
def vit_forward(params, x):
    """x: (batch, C, H, W) NCHW float32 -> (batch, NUM_CLASSES) logits."""
    batch = x.shape[0]

    # im2col patch extraction (plain-JAX glue); flatten order matches
    # torch_conv_weight.reshape(D, C*P*P).T used for the patch-embedding matmul.
    patches = (x.reshape(batch, C, GH, P, GW, P)
                 .transpose(0, 2, 4, 1, 3, 5)
                 .reshape(batch * NPATCH, C * P * P))

    # pad fc head to 128 lane-dense output columns (unmasked stores); sliced back below.
    fc_w = jnp.pad(params["fc_w"], ((0, 0), (0, NC_PAD - NUM_CLASSES)))
    fc_b = jnp.pad(params["fc_b"], ((0, 0), (0, NC_PAD - NUM_CLASSES)))

    inputs = (patches, params["patch_w"], params["patch_b"], params["cls"], params["pos"],
              params["ln1_g"], params["ln1_b"], params["wqkv"], params["bqkv"],
              params["wo"], params["bo"], params["ln2_g"], params["ln2_b"],
              params["w1"], params["b1"], params["w2"], params["b2"],
              params["ln_g"], params["ln_b"], fc_w, fc_b)

    out = pl.pallas_call(
        functools.partial(_vit_kernel, batch=batch),
        out_shape=jax.ShapeDtypeStruct((batch, NC_PAD), jnp.float32),
        grid=(1,),
        in_specs=[_full_block_spec(a.shape) for a in inputs],
        out_specs=pl.BlockSpec((batch, NC_PAD), lambda i: (0, 0)),
        compiler_params=pltpu.CompilerParams(dimension_semantics=("arbitrary",)),
    )(*inputs)

    return out[:, :NUM_CLASSES]


# --------------------------------- driver ---------------------------------
if __name__ == "__main__":
    key = jax.random.PRNGKey(0)
    kp, kx = jax.random.split(key)
    params = init_params(kp)
    x = jax.random.normal(kx, (B, C, H, W), dtype=jnp.float32)   # NCHW input

    fwd = jax.jit(vit_forward)
    out = jax.block_until_ready(fwd(params, x))

    assert out.shape == (B, NUM_CLASSES), out.shape
    assert bool(jnp.all(jnp.isfinite(out)))
    print("KERNEL_OK")
</pallas_src>

<mosaic_0001>
module attributes {stable_mosaic.version = 11 : i64} {
  func.func @_vit_kernel(%arg0: i32, %arg1: memref<8x192xf32, #tpu.memory_space<vmem>>, %arg2: memref<192x32xf32, #tpu.memory_space<vmem>>, %arg3: memref<1x32xf32, #tpu.memory_space<vmem>>, %arg4: memref<1x32xf32, #tpu.memory_space<vmem>>, %arg5: memref<5x32xf32, #tpu.memory_space<vmem>>, %arg6: memref<2x1x32xf32, #tpu.memory_space<vmem>>, %arg7: memref<2x1x32xf32, #tpu.memory_space<vmem>>, %arg8: memref<2x32x96xf32, #tpu.memory_space<vmem>>, %arg9: memref<2x1x96xf32, #tpu.memory_space<vmem>>, %arg10: memref<2x32x32xf32, #tpu.memory_space<vmem>>, %arg11: memref<2x1x32xf32, #tpu.memory_space<vmem>>, %arg12: memref<2x1x32xf32, #tpu.memory_space<vmem>>, %arg13: memref<2x1x32xf32, #tpu.memory_space<vmem>>, %arg14: memref<2x32x64xf32, #tpu.memory_space<vmem>>, %arg15: memref<2x1x64xf32, #tpu.memory_space<vmem>>, %arg16: memref<2x64x32xf32, #tpu.memory_space<vmem>>, %arg17: memref<2x1x32xf32, #tpu.memory_space<vmem>>, %arg18: memref<1x32xf32, #tpu.memory_space<vmem>>, %arg19: memref<1x32xf32, #tpu.memory_space<vmem>>, %arg20: memref<32x128xf32, #tpu.memory_space<vmem>>, %arg21: memref<1x128xf32, #tpu.memory_space<vmem>>, %arg22: memref<2x128xf32, #tpu.memory_space<vmem>>) attributes {dimension_semantics = [#tpu.dimension_semantics<arbitrary>], iteration_bounds = array<i64: 1>, scalar_prefetch = 0 : i64, scratch_operands = 0 : i64, tpu.core_type = #tpu.core_type<tc>, window_params = [{pipeline_mode = #tpu.pipeline_mode<synchronous>, transform_indices = @transform_0, window_bounds = array<i64: 8, 192>}, {pipeline_mode = #tpu.pipeline_mode<synchronous>, transform_indices = @transform_1, window_bounds = array<i64: 192, 32>}, {pipeline_mode = #tpu.pipeline_mode<synchronous>, transform_indices = @transform_2, window_bounds = array<i64: 1, 32>}, {pipeline_mode = #tpu.pipeline_mode<synchronous>, transform_indices = @transform_3, window_bounds = array<i64: 1, 32>}, {pipeline_mode = #tpu.pipeline_mode<synchronous>, transform_indices = @transform_4, window_bounds = array<i64: 5, 32>}, {pipeline_mode = #tpu.pipeline_mode<synchronous>, transform_indices = @transform_5, window_bounds = array<i64: 2, 1, 32>}, {pipeline_mode = #tpu.pipeline_mode<synchronous>, transform_indices = @transform_6, window_bounds = array<i64: 2, 1, 32>}, {pipeline_mode = #tpu.pipeline_mode<synchronous>, transform_indices = @transform_7, window_bounds = array<i64: 2, 32, 96>}, {pipeline_mode = #tpu.pipeline_mode<synchronous>, transform_indices = @transform_8, window_bounds = array<i64: 2, 1, 96>}, {pipeline_mode = #tpu.pipeline_mode<synchronous>, transform_indices = @transform_9, window_bounds = array<i64: 2, 32, 32>}, {pipeline_mode = #tpu.pipeline_mode<synchronous>, transform_indices = @transform_10, window_bounds = array<i64: 2, 1, 32>}, {pipeline_mode = #tpu.pipeline_mode<synchronous>, transform_indices = @transform_11, window_bounds = array<i64: 2, 1, 32>}, {pipeline_mode = #tpu.pipeline_mode<synchronous>, transform_indices = @transform_12, window_bounds = array<i64: 2, 1, 32>}, {pipeline_mode = #tpu.pipeline_mode<synchronous>, transform_indices = @transform_13, window_bounds = array<i64: 2, 32, 64>}, {pipeline_mode = #tpu.pipeline_mode<synchronous>, transform_indices = @transform_14, window_bounds = array<i64: 2, 1, 64>}, {pipeline_mode = #tpu.pipeline_mode<synchronous>, transform_indices = @transform_15, window_bounds = array<i64: 2, 64, 32>}, {pipeline_mode = #tpu.pipeline_mode<synchronous>, transform_indices = @transform_16, window_bounds = array<i64: 2, 1, 32>}, {pipeline_mode = #tpu.pipeline_mode<synchronous>, transform_indices = @transform_17, window_bounds = array<i64: 1, 32>}, {pipeline_mode = #tpu.pipeline_mode<synchronous>, transform_indices = @transform_18, window_bounds = array<i64: 1, 32>}, {pipeline_mode = #tpu.pipeline_mode<synchronous>, transform_indices = @transform_19, window_bounds = array<i64: 32, 128>}, {pipeline_mode = #tpu.pipeline_mode<synchronous>, transform_indices = @transform_20, window_bounds = array<i64: 1, 128>}, {pipeline_mode = #tpu.pipeline_mode<synchronous>, transform_indices = @transform_21, window_bounds = array<i64: 2, 128>}]} {
    %c0 = arith.constant 0 : index
    %c0_0 = arith.constant 0 : index
    %0 = vector.load %arg1[%c0, %c0_0] : memref<8x192xf32, #tpu.memory_space<vmem>>, vector<8x192xf32>
    %c0_1 = arith.constant 0 : index
    %c0_2 = arith.constant 0 : index
    %1 = vector.load %arg2[%c0_1, %c0_2] : memref<192x32xf32, #tpu.memory_space<vmem>>, vector<192x32xf32>
    %cst = arith.constant dense<0.000000e+00> : vector<8x32xf32>
    %2 = tpu.matmul %0, %1, %cst {dimension_numbers = #tpu.dot_dimension_numbers<[1], [0], [0], [1], [0, 0, 1, 1], [], []>} : vector<8x192xf32>, vector<192x32xf32>, vector<8x32xf32> -> vector<8x32xf32>
    %c0_3 = arith.constant 0 : index
    %c0_4 = arith.constant 0 : index
    %3 = vector.load %arg3[%c0_3, %c0_4] : memref<1x32xf32, #tpu.memory_space<vmem>>, vector<1x32xf32>
    %4 = vector.broadcast %3 : vector<1x32xf32> to vector<8x32xf32>
    %5 = arith.addf %2, %4 : vector<8x32xf32>
    %c0_5 = arith.constant 0 : index
    %c0_6 = arith.constant 0 : index
    %6 = vector.load %arg4[%c0_5, %c0_6] : memref<1x32xf32, #tpu.memory_space<vmem>>, vector<1x32xf32>
    %c0_7 = arith.constant 0 : index
    %c0_8 = arith.constant 0 : index
    %7 = vector.load %arg5[%c0_7, %c0_8] : memref<5x32xf32, #tpu.memory_space<vmem>>, vector<5x32xf32>
    %8 = vector.extract_strided_slice %5 {offsets = [0, 0], sizes = [4, 32], strides = [1, 1]} : vector<8x32xf32> to vector<4x32xf32>
    %9 = tpu.concatenate %6, %8 in 0 : vector<1x32xf32>, vector<4x32xf32> -> vector<5x32xf32>
    %10 = arith.addf %9, %7 : vector<5x32xf32>
    %11 = vector.extract_strided_slice %5 {offsets = [4, 0], sizes = [4, 32], strides = [1, 1]} : vector<8x32xf32> to vector<4x32xf32>
    %12 = tpu.concatenate %6, %11 in 0 : vector<1x32xf32>, vector<4x32xf32> -> vector<5x32xf32>
    %13 = arith.addf %12, %7 : vector<5x32xf32>
    %14 = tpu.concatenate %10, %13 in 0 : vector<5x32xf32>, vector<5x32xf32> -> vector<10x32xf32>
    %c0_i32 = arith.constant 0 : i32
    %15 = arith.index_cast %c0_i32 : i32 to index
    %c0_9 = arith.constant 0 : index
    %c0_10 = arith.constant 0 : index
    %16 = vector.load %arg6[%15, %c0_9, %c0_10] : memref<2x1x32xf32, #tpu.memory_space<vmem>>, vector<1x1x32xf32>
    %17 = vector.shape_cast %16 : vector<1x1x32xf32> to vector<1x32xf32>
    %18 = arith.index_cast %c0_i32 : i32 to index
    %c0_11 = arith.constant 0 : index
    %c0_12 = arith.constant 0 : index
    %19 = vector.load %arg7[%18, %c0_11, %c0_12] : memref<2x1x32xf32, #tpu.memory_space<vmem>>, vector<1x1x32xf32>
    %20 = vector.shape_cast %19 : vector<1x1x32xf32> to vector<1x32xf32>
    %cst_13 = arith.constant dense<0.000000e+00> : vector<10xf32>
    %21 = vector.multi_reduction <add>, %14, %cst_13 [1] : vector<10x32xf32> to vector<10xf32>
    %22 = vector.shape_cast %21 : vector<10xf32> to vector<10x1xf32>
    %cst_14 = arith.constant 3.200000e+01 : f32
    %23 = vector.broadcast %cst_14 : f32 to vector<10x1xf32>
    %24 = arith.divf %22, %23 : vector<10x1xf32>
    %25 = vector.broadcast %24 : vector<10x1xf32> to vector<10x32xf32>
    %26 = arith.subf %14, %25 : vector<10x32xf32>
    %27 = arith.mulf %26, %26 : vector<10x32xf32>
    %cst_15 = arith.constant dense<0.000000e+00> : vector<10xf32>
    %28 = vector.multi_reduction <add>, %27, %cst_15 [1] : vector<10x32xf32> to vector<10xf32>
    %29 = vector.shape_cast %28 : vector<10xf32> to vector<10x1xf32>
    %cst_16 = arith.constant 3.200000e+01 : f32
    %30 = vector.broadcast %cst_16 : f32 to vector<10x1xf32>
    %31 = arith.divf %29, %30 : vector<10x1xf32>
    %32 = vector.broadcast %24 : vector<10x1xf32> to vector<10x32xf32>
    %33 = arith.subf %14, %32 : vector<10x32xf32>
    %cst_17 = arith.constant 9.99999997E-7 : f32
    %34 = vector.broadcast %cst_17 : f32 to vector<10x1xf32>
    %35 = arith.addf %31, %34 : vector<10x1xf32>
    %36 = math.rsqrt %35 : vector<10x1xf32>
    %37 = vector.broadcast %36 : vector<10x1xf32> to vector<10x32xf32>
    %38 = arith.mulf %33, %37 : vector<10x32xf32>
    %39 = vector.broadcast %17 : vector<1x32xf32> to vector<10x32xf32>
    %40 = arith.mulf %38, %39 : vector<10x32xf32>
    %41 = vector.broadcast %20 : vector<1x32xf32> to vector<10x32xf32>
    %42 = arith.addf %40, %41 : vector<10x32xf32>
    %43 = arith.index_cast %c0_i32 : i32 to index
    %c0_18 = arith.constant 0 : index
    %c0_19 = arith.constant 0 : index
    %44 = vector.load %arg8[%43, %c0_18, %c0_19] : memref<2x32x96xf32, #tpu.memory_space<vmem>>, vector<1x32x96xf32>
    %45 = vector.shape_cast %44 : vector<1x32x96xf32> to vector<32x96xf32>
    %cst_20 = arith.constant dense<0.000000e+00> : vector<10x96xf32>
    %46 = tpu.matmul %42, %45, %cst_20 {dimension_numbers = #tpu.dot_dimension_numbers<[1], [0], [0], [1], [0, 0, 1, 1], [], []>} : vector<10x32xf32>, vector<32x96xf32>, vector<10x96xf32> -> vector<10x96xf32>
    %47 = arith.index_cast %c0_i32 : i32 to index
    %c0_21 = arith.constant 0 : index
    %c0_22 = arith.constant 0 : index
    %48 = vector.load %arg9[%47, %c0_21, %c0_22] : memref<2x1x96xf32, #tpu.memory_space<vmem>>, vector<1x1x96xf32>
    %49 = vector.shape_cast %48 : vector<1x1x96xf32> to vector<1x96xf32>
    %50 = vector.broadcast %49 : vector<1x96xf32> to vector<10x96xf32>
    %51 = arith.addf %46, %50 : vector<10x96xf32>
    %52 = vector.extract_strided_slice %51 {offsets = [0, 0], sizes = [10, 32], strides = [1, 1]} : vector<10x96xf32> to vector<10x32xf32>
    %53 = vector.extract_strided_slice %51 {offsets = [0, 32], sizes = [10, 32], strides = [1, 1]} : vector<10x96xf32> to vector<10x32xf32>
    %54 = vector.extract_strided_slice %51 {offsets = [0, 64], sizes = [10, 32], strides = [1, 1]} : vector<10x96xf32> to vector<10x32xf32>
    %55 = vector.extract_strided_slice %52 {offsets = [0, 0], sizes = [5, 8], strides = [1, 1]} : vector<10x32xf32> to vector<5x8xf32>
    %56 = vector.extract_strided_slice %53 {offsets = [0, 0], sizes = [5, 8], strides = [1, 1]} : vector<10x32xf32> to vector<5x8xf32>
    %57 = vector.extract_strided_slice %54 {offsets = [0, 0], sizes = [5, 8], strides = [1, 1]} : vector<10x32xf32> to vector<5x8xf32>
    %58 = tpu.transpose %56, [1, 0] : vector<5x8xf32> -> vector<8x5xf32>
    %cst_23 = arith.constant dense<0.000000e+00> : vector<5x5xf32>
    %59 = tpu.matmul %55, %58, %cst_23 {dimension_numbers = #tpu.dot_dimension_numbers<[1], [0], [0], [1], [0, 0, 1, 1], [], []>} : vector<5x8xf32>, vector<8x5xf32>, vector<5x5xf32> -> vector<5x5xf32>
    %cst_24 = arith.constant 0.353553385 : f32
    %60 = vector.broadcast %cst_24 : f32 to vector<5x5xf32>
    %61 = arith.mulf %59, %60 : vector<5x5xf32>
    %cst_25 = arith.constant dense<0xFF800000> : vector<5xf32>
    %62 = vector.multi_reduction <maximumf>, %61, %cst_25 [1] : vector<5x5xf32> to vector<5xf32>
    %63 = vector.shape_cast %62 : vector<5xf32> to vector<5x1xf32>
    %64 = vector.broadcast %63 : vector<5x1xf32> to vector<5x5xf32>
    %65 = arith.subf %61, %64 : vector<5x5xf32>
    %66 = math.exp %65 : vector<5x5xf32>
    %cst_26 = arith.constant dense<0.000000e+00> : vector<5xf32>
    %67 = vector.multi_reduction <add>, %66, %cst_26 [1] : vector<5x5xf32> to vector<5xf32>
    %68 = vector.shape_cast %67 : vector<5xf32> to vector<5x1xf32>
    %69 = vector.broadcast %68 : vector<5x1xf32> to vector<5x5xf32>
    %70 = arith.divf %66, %69 : vector<5x5xf32>
    %cst_27 = arith.constant dense<0.000000e+00> : vector<5x8xf32>
    %71 = tpu.matmul %70, %57, %cst_27 {dimension_numbers = #tpu.dot_dimension_numbers<[1], [0], [0], [1], [0, 0, 1, 1], [], []>} : vector<5x5xf32>, vector<5x8xf32>, vector<5x8xf32> -> vector<5x8xf32>
    %72 = vector.extract_strided_slice %52 {offsets = [0, 8], sizes = [5, 8], strides = [1, 1]} : vector<10x32xf32> to vector<5x8xf32>
    %73 = vector.extract_strided_slice %53 {offsets = [0, 8], sizes = [5, 8], strides = [1, 1]} : vector<10x32xf32> to vector<5x8xf32>
    %74 = vector.extract_strided_slice %54 {offsets = [0, 8], sizes = [5, 8], strides = [1, 1]} : vector<10x32xf32> to vector<5x8xf32>
    %75 = tpu.transpose %73, [1, 0] : vector<5x8xf32> -> vector<8x5xf32>
    %cst_28 = arith.constant dense<0.000000e+00> : vector<5x5xf32>
    %76 = tpu.matmul %72, %75, %cst_28 {dimension_numbers = #tpu.dot_dimension_numbers<[1], [0], [0], [1], [0, 0, 1, 1], [], []>} : vector<5x8xf32>, vector<8x5xf32>, vector<5x5xf32> -> vector<5x5xf32>
    %cst_29 = arith.constant 0.353553385 : f32
    %77 = vector.broadcast %cst_29 : f32 to vector<5x5xf32>
    %78 = arith.mulf %76, %77 : vector<5x5xf32>
    %cst_30 = arith.constant dense<0xFF800000> : vector<5xf32>
    %79 = vector.multi_reduction <maximumf>, %78, %cst_30 [1] : vector<5x5xf32> to vector<5xf32>
    %80 = vector.shape_cast %79 : vector<5xf32> to vector<5x1xf32>
    %81 = vector.broadcast %80 : vector<5x1xf32> to vector<5x5xf32>
    %82 = arith.subf %78, %81 : vector<5x5xf32>
    %83 = math.exp %82 : vector<5x5xf32>
    %cst_31 = arith.constant dense<0.000000e+00> : vector<5xf32>
    %84 = vector.multi_reduction <add>, %83, %cst_31 [1] : vector<5x5xf32> to vector<5xf32>
    %85 = vector.shape_cast %84 : vector<5xf32> to vector<5x1xf32>
    %86 = vector.broadcast %85 : vector<5x1xf32> to vector<5x5xf32>
    %87 = arith.divf %83, %86 : vector<5x5xf32>
    %cst_32 = arith.constant dense<0.000000e+00> : vector<5x8xf32>
    %88 = tpu.matmul %87, %74, %cst_32 {dimension_numbers = #tpu.dot_dimension_numbers<[1], [0], [0], [1], [0, 0, 1, 1], [], []>} : vector<5x5xf32>, vector<5x8xf32>, vector<5x8xf32> -> vector<5x8xf32>
    %89 = vector.extract_strided_slice %52 {offsets = [0, 16], sizes = [5, 8], strides = [1, 1]} : vector<10x32xf32> to vector<5x8xf32>
    %90 = vector.extract_strided_slice %53 {offsets = [0, 16], sizes = [5, 8], strides = [1, 1]} : vector<10x32xf32> to vector<5x8xf32>
    %91 = vector.extract_strided_slice %54 {offsets = [0, 16], sizes = [5, 8], strides = [1, 1]} : vector<10x32xf32> to vector<5x8xf32>
    %92 = tpu.transpose %90, [1, 0] : vector<5x8xf32> -> vector<8x5xf32>
    %cst_33 = arith.constant dense<0.000000e+00> : vector<5x5xf32>
    %93 = tpu.matmul %89, %92, %cst_33 {dimension_numbers = #tpu.dot_dimension_numbers<[1], [0], [0], [1], [0, 0, 1, 1], [], []>} : vector<5x8xf32>, vector<8x5xf32>, vector<5x5xf32> -> vector<5x5xf32>
    %cst_34 = arith.constant 0.353553385 : f32
    %94 = vector.broadcast %cst_34 : f32 to vector<5x5xf32>
    %95 = arith.mulf %93, %94 : vector<5x5xf32>
    %cst_35 = arith.constant dense<0xFF800000> : vector<5xf32>
    %96 = vector.multi_reduction <maximumf>, %95, %cst_35 [1] : vector<5x5xf32> to vector<5xf32>
    %97 = vector.shape_cast %96 : vector<5xf32> to vector<5x1xf32>
    %98 = vector.broadcast %97 : vector<5x1xf32> to vector<5x5xf32>
    %99 = arith.subf %95, %98 : vector<5x5xf32>
    %100 = math.exp %99 : vector<5x5xf32>
    %cst_36 = arith.constant dense<0.000000e+00> : vector<5xf32>
    %101 = vector.multi_reduction <add>, %100, %cst_36 [1] : vector<5x5xf32> to vector<5xf32>
    %102 = vector.shape_cast %101 : vector<5xf32> to vector<5x1xf32>
    %103 = vector.broadcast %102 : vector<5x1xf32> to vector<5x5xf32>
    %104 = arith.divf %100, %103 : vector<5x5xf32>
    %cst_37 = arith.constant dense<0.000000e+00> : vector<5x8xf32>
    %105 = tpu.matmul %104, %91, %cst_37 {dimension_numbers = #tpu.dot_dimension_numbers<[1], [0], [0], [1], [0, 0, 1, 1], [], []>} : vector<5x5xf32>, vector<5x8xf32>, vector<5x8xf32> -> vector<5x8xf32>
    %106 = vector.extract_strided_slice %52 {offsets = [0, 24], sizes = [5, 8], strides = [1, 1]} : vector<10x32xf32> to vector<5x8xf32>
    %107 = vector.extract_strided_slice %53 {offsets = [0, 24], sizes = [5, 8], strides = [1, 1]} : vector<10x32xf32> to vector<5x8xf32>
    %108 = vector.extract_strided_slice %54 {offsets = [0, 24], sizes = [5, 8], strides = [1, 1]} : vector<10x32xf32> to vector<5x8xf32>
    %109 = tpu.transpose %107, [1, 0] : vector<5x8xf32> -> vector<8x5xf32>
    %cst_38 = arith.constant dense<0.000000e+00> : vector<5x5xf32>
    %110 = tpu.matmul %106, %109, %cst_38 {dimension_numbers = #tpu.dot_dimension_numbers<[1], [0], [0], [1], [0, 0, 1, 1], [], []>} : vector<5x8xf32>, vector<8x5xf32>, vector<5x5xf32> -> vector<5x5xf32>
    %cst_39 = arith.constant 0.353553385 : f32
    %111 = vector.broadcast %cst_39 : f32 to vector<5x5xf32>
    %112 = arith.mulf %110, %111 : vector<5x5xf32>
    %cst_40 = arith.constant dense<0xFF800000> : vector<5xf32>
    %113 = vector.multi_reduction <maximumf>, %112, %cst_40 [1] : vector<5x5xf32> to vector<5xf32>
    %114 = vector.shape_cast %113 : vector<5xf32> to vector<5x1xf32>
    %115 = vector.broadcast %114 : vector<5x1xf32> to vector<5x5xf32>
    %116 = arith.subf %112, %115 : vector<5x5xf32>
    %117 = math.exp %116 : vector<5x5xf32>
    %cst_41 = arith.constant dense<0.000000e+00> : vector<5xf32>
    %118 = vector.multi_reduction <add>, %117, %cst_41 [1] : vector<5x5xf32> to vector<5xf32>
    %119 = vector.shape_cast %118 : vector<5xf32> to vector<5x1xf32>
    %120 = vector.broadcast %119 : vector<5x1xf32> to vector<5x5xf32>
    %121 = arith.divf %117, %120 : vector<5x5xf32>
    %cst_42 = arith.constant dense<0.000000e+00> : vector<5x8xf32>
    %122 = tpu.matmul %121, %108, %cst_42 {dimension_numbers = #tpu.dot_dimension_numbers<[1], [0], [0], [1], [0, 0, 1, 1], [], []>} : vector<5x5xf32>, vector<5x8xf32>, vector<5x8xf32> -> vector<5x8xf32>
    %123 = tpu.concatenate %71, %88, %105, %122 in 1 : vector<5x8xf32>, vector<5x8xf32>, vector<5x8xf32>, vector<5x8xf32> -> vector<5x32xf32>
    %124 = vector.extract_strided_slice %52 {offsets = [5, 0], sizes = [5, 8], strides = [1, 1]} : vector<10x32xf32> to vector<5x8xf32>
    %125 = vector.extract_strided_slice %53 {offsets = [5, 0], sizes = [5, 8], strides = [1, 1]} : vector<10x32xf32> to vector<5x8xf32>
    %126 = vector.extract_strided_slice %54 {offsets = [5, 0], sizes = [5, 8], strides = [1, 1]} : vector<10x32xf32> to vector<5x8xf32>
    %127 = tpu.transpose %125, [1, 0] : vector<5x8xf32> -> vector<8x5xf32>
    %cst_43 = arith.constant dense<0.000000e+00> : vector<5x5xf32>
    %128 = tpu.matmul %124, %127, %cst_43 {dimension_numbers = #tpu.dot_dimension_numbers<[1], [0], [0], [1], [0, 0, 1, 1], [], []>} : vector<5x8xf32>, vector<8x5xf32>, vector<5x5xf32> -> vector<5x5xf32>
    %cst_44 = arith.constant 0.353553385 : f32
    %129 = vector.broadcast %cst_44 : f32 to vector<5x5xf32>
    %130 = arith.mulf %128, %129 : vector<5x5xf32>
    %cst_45 = arith.constant dense<0xFF800000> : vector<5xf32>
    %131 = vector.multi_reduction <maximumf>, %130, %cst_45 [1] : vector<5x5xf32> to vector<5xf32>
    %132 = vector.shape_cast %131 : vector<5xf32> to vector<5x1xf32>
    %133 = vector.broadcast %132 : vector<5x1xf32> to vector<5x5xf32>
    %134 = arith.subf %130, %133 : vector<5x5xf32>
    %135 = math.exp %134 : vector<5x5xf32>
    %cst_46 = arith.constant dense<0.000000e+00> : vector<5xf32>
    %136 = vector.multi_reduction <add>, %135, %cst_46 [1] : vector<5x5xf32> to vector<5xf32>
    %137 = vector.shape_cast %136 : vector<5xf32> to vector<5x1xf32>
    %138 = vector.broadcast %137 : vector<5x1xf32> to vector<5x5xf32>
    %139 = arith.divf %135, %138 : vector<5x5xf32>
    %cst_47 = arith.constant dense<0.000000e+00> : vector<5x8xf32>
    %140 = tpu.matmul %139, %126, %cst_47 {dimension_numbers = #tpu.dot_dimension_numbers<[1], [0], [0], [1], [0, 0, 1, 1], [], []>} : vector<5x5xf32>, vector<5x8xf32>, vector<5x8xf32> -> vector<5x8xf32>
    %141 = vector.extract_strided_slice %52 {offsets = [5, 8], sizes = [5, 8], strides = [1, 1]} : vector<10x32xf32> to vector<5x8xf32>
    %142 = vector.extract_strided_slice %53 {offsets = [5, 8], sizes = [5, 8], strides = [1, 1]} : vector<10x32xf32> to vector<5x8xf32>
    %143 = vector.extract_strided_slice %54 {offsets = [5, 8], sizes = [5, 8], strides = [1, 1]} : vector<10x32xf32> to vector<5x8xf32>
    %144 = tpu.transpose %142, [1, 0] : vector<5x8xf32> -> vector<8x5xf32>
    %cst_48 = arith.constant dense<0.000000e+00> : vector<5x5xf32>
    %145 = tpu.matmul %141, %144, %cst_48 {dimension_numbers = #tpu.dot_dimension_numbers<[1], [0], [0], [1], [0, 0, 1, 1], [], []>} : vector<5x8xf32>, vector<8x5xf32>, vector<5x5xf32> -> vector<5x5xf32>
    %cst_49 = arith.constant 0.353553385 : f32
    %146 = vector.broadcast %cst_49 : f32 to vector<5x5xf32>
    %147 = arith.mulf %145, %146 : vector<5x5xf32>
    %cst_50 = arith.constant dense<0xFF800000> : vector<5xf32>
    %148 = vector.multi_reduction <maximumf>, %147, %cst_50 [1] : vector<5x5xf32> to vector<5xf32>
    %149 = vector.shape_cast %148 : vector<5xf32> to vector<5x1xf32>
    %150 = vector.broadcast %149 : vector<5x1xf32> to vector<5x5xf32>
    %151 = arith.subf %147, %150 : vector<5x5xf32>
    %152 = math.exp %151 : vector<5x5xf32>
    %cst_51 = arith.constant dense<0.000000e+00> : vector<5xf32>
    %153 = vector.multi_reduction <add>, %152, %cst_51 [1] : vector<5x5xf32> to vector<5xf32>
    %154 = vector.shape_cast %153 : vector<5xf32> to vector<5x1xf32>
    %155 = vector.broadcast %154 : vector<5x1xf32> to vector<5x5xf32>
    %156 = arith.divf %152, %155 : vector<5x5xf32>
    %cst_52 = arith.constant dense<0.000000e+00> : vector<5x8xf32>
    %157 = tpu.matmul %156, %143, %cst_52 {dimension_numbers = #tpu.dot_dimension_numbers<[1], [0], [0], [1], [0, 0, 1, 1], [], []>} : vector<5x5xf32>, vector<5x8xf32>, vector<5x8xf32> -> vector<5x8xf32>
    %158 = vector.extract_strided_slice %52 {offsets = [5, 16], sizes = [5, 8], strides = [1, 1]} : vector<10x32xf32> to vector<5x8xf32>
    %159 = vector.extract_strided_slice %53 {offsets = [5, 16], sizes = [5, 8], strides = [1, 1]} : vector<10x32xf32> to vector<5x8xf32>
    %160 = vector.extract_strided_slice %54 {offsets = [5, 16], sizes = [5, 8], strides = [1, 1]} : vector<10x32xf32> to vector<5x8xf32>
    %161 = tpu.transpose %159, [1, 0] : vector<5x8xf32> -> vector<8x5xf32>
    %cst_53 = arith.constant dense<0.000000e+00> : vector<5x5xf32>
    %162 = tpu.matmul %158, %161, %cst_53 {dimension_numbers = #tpu.dot_dimension_numbers<[1], [0], [0], [1], [0, 0, 1, 1], [], []>} : vector<5x8xf32>, vector<8x5xf32>, vector<5x5xf32> -> vector<5x5xf32>
    %cst_54 = arith.constant 0.353553385 : f32
    %163 = vector.broadcast %cst_54 : f32 to vector<5x5xf32>
    %164 = arith.mulf %162, %163 : vector<5x5xf32>
    %cst_55 = arith.constant dense<0xFF800000> : vector<5xf32>
    %165 = vector.multi_reduction <maximumf>, %164, %cst_55 [1] : vector<5x5xf32> to vector<5xf32>
    %166 = vector.shape_cast %165 : vector<5xf32> to vector<5x1xf32>
    %167 = vector.broadcast %166 : vector<5x1xf32> to vector<5x5xf32>
    %168 = arith.subf %164, %167 : vector<5x5xf32>
    %169 = math.exp %168 : vector<5x5xf32>
    %cst_56 = arith.constant dense<0.000000e+00> : vector<5xf32>
    %170 = vector.multi_reduction <add>, %169, %cst_56 [1] : vector<5x5xf32> to vector<5xf32>
    %171 = vector.shape_cast %170 : vector<5xf32> to vector<5x1xf32>
    %172 = vector.broadcast %171 : vector<5x1xf32> to vector<5x5xf32>
    %173 = arith.divf %169, %172 : vector<5x5xf32>
    %cst_57 = arith.constant dense<0.000000e+00> : vector<5x8xf32>
    %174 = tpu.matmul %173, %160, %cst_57 {dimension_numbers = #tpu.dot_dimension_numbers<[1], [0], [0], [1], [0, 0, 1, 1], [], []>} : vector<5x5xf32>, vector<5x8xf32>, vector<5x8xf32> -> vector<5x8xf32>
    %175 = vector.extract_strided_slice %52 {offsets = [5, 24], sizes = [5, 8], strides = [1, 1]} : vector<10x32xf32> to vector<5x8xf32>
    %176 = vector.extract_strided_slice %53 {offsets = [5, 24], sizes = [5, 8], strides = [1, 1]} : vector<10x32xf32> to vector<5x8xf32>
    %177 = vector.extract_strided_slice %54 {offsets = [5, 24], sizes = [5, 8], strides = [1, 1]} : vector<10x32xf32> to vector<5x8xf32>
    %178 = tpu.transpose %176, [1, 0] : vector<5x8xf32> -> vector<8x5xf32>
    %cst_58 = arith.constant dense<0.000000e+00> : vector<5x5xf32>
    %179 = tpu.matmul %175, %178, %cst_58 {dimension_numbers = #tpu.dot_dimension_numbers<[1], [0], [0], [1], [0, 0, 1, 1], [], []>} : vector<5x8xf32>, vector<8x5xf32>, vector<5x5xf32> -> vector<5x5xf32>
    %cst_59 = arith.constant 0.353553385 : f32
    %180 = vector.broadcast %cst_59 : f32 to vector<5x5xf32>
    %181 = arith.mulf %179, %180 : vector<5x5xf32>
    %cst_60 = arith.constant dense<0xFF800000> : vector<5xf32>
    %182 = vector.multi_reduction <maximumf>, %181, %cst_60 [1] : vector<5x5xf32> to vector<5xf32>
    %183 = vector.shape_cast %182 : vector<5xf32> to vector<5x1xf32>
    %184 = vector.broadcast %183 : vector<5x1xf32> to vector<5x5xf32>
    %185 = arith.subf %181, %184 : vector<5x5xf32>
    %186 = math.exp %185 : vector<5x5xf32>
    %cst_61 = arith.constant dense<0.000000e+00> : vector<5xf32>
    %187 = vector.multi_reduction <add>, %186, %cst_61 [1] : vector<5x5xf32> to vector<5xf32>
    %188 = vector.shape_cast %187 : vector<5xf32> to vector<5x1xf32>
    %189 = vector.broadcast %188 : vector<5x1xf32> to vector<5x5xf32>
    %190 = arith.divf %186, %189 : vector<5x5xf32>
    %cst_62 = arith.constant dense<0.000000e+00> : vector<5x8xf32>
    %191 = tpu.matmul %190, %177, %cst_62 {dimension_numbers = #tpu.dot_dimension_numbers<[1], [0], [0], [1], [0, 0, 1, 1], [], []>} : vector<5x5xf32>, vector<5x8xf32>, vector<5x8xf32> -> vector<5x8xf32>
    %192 = tpu.concatenate %140, %157, %174, %191 in 1 : vector<5x8xf32>, vector<5x8xf32>, vector<5x8xf32>, vector<5x8xf32> -> vector<5x32xf32>
    %193 = tpu.concatenate %123, %192 in 0 : vector<5x32xf32>, vector<5x32xf32> -> vector<10x32xf32>
    %194 = arith.index_cast %c0_i32 : i32 to index
    %c0_63 = arith.constant 0 : index
    %c0_64 = arith.constant 0 : index
    %195 = vector.load %arg10[%194, %c0_63, %c0_64] : memref<2x32x32xf32, #tpu.memory_space<vmem>>, vector<1x32x32xf32>
    %196 = vector.shape_cast %195 : vector<1x32x32xf32> to vector<32x32xf32>
    %cst_65 = arith.constant dense<0.000000e+00> : vector<10x32xf32>
    %197 = tpu.matmul %193, %196, %cst_65 {dimension_numbers = #tpu.dot_dimension_numbers<[1], [0], [0], [1], [0, 0, 1, 1], [], []>} : vector<10x32xf32>, vector<32x32xf32>, vector<10x32xf32> -> vector<10x32xf32>
    %198 = arith.index_cast %c0_i32 : i32 to index
    %c0_66 = arith.constant 0 : index
    %c0_67 = arith.constant 0 : index
    %199 = vector.load %arg11[%198, %c0_66, %c0_67] : memref<2x1x32xf32, #tpu.memory_space<vmem>>, vector<1x1x32xf32>
    %200 = vector.shape_cast %199 : vector<1x1x32xf32> to vector<1x32xf32>
    %201 = vector.broadcast %200 : vector<1x32xf32> to vector<10x32xf32>
    %202 = arith.addf %197, %201 : vector<10x32xf32>
    %203 = arith.addf %14, %202 : vector<10x32xf32>
    %204 = arith.index_cast %c0_i32 : i32 to index
    %c0_68 = arith.constant 0 : index
    %c0_69 = arith.constant 0 : index
    %205 = vector.load %arg12[%204, %c0_68, %c0_69] : memref<2x1x32xf32, #tpu.memory_space<vmem>>, vector<1x1x32xf32>
    %206 = vector.shape_cast %205 : vector<1x1x32xf32> to vector<1x32xf32>
    %207 = arith.index_cast %c0_i32 : i32 to index
    %c0_70 = arith.constant 0 : index
    %c0_71 = arith.constant 0 : index
    %208 = vector.load %arg13[%207, %c0_70, %c0_71] : memref<2x1x32xf32, #tpu.memory_space<vmem>>, vector<1x1x32xf32>
    %209 = vector.shape_cast %208 : vector<1x1x32xf32> to vector<1x32xf32>
    %cst_72 = arith.constant dense<0.000000e+00> : vector<10xf32>
    %210 = vector.multi_reduction <add>, %203, %cst_72 [1] : vector<10x32xf32> to vector<10xf32>
    %211 = vector.shape_cast %210 : vector<10xf32> to vector<10x1xf32>
    %cst_73 = arith.constant 3.200000e+01 : f32
    %212 = vector.broadcast %cst_73 : f32 to vector<10x1xf32>
    %213 = arith.divf %211, %212 : vector<10x1xf32>
    %214 = vector.broadcast %213 : vector<10x1xf32> to vector<10x32xf32>
    %215 = arith.subf %203, %214 : vector<10x32xf32>
    %216 = arith.mulf %215, %215 : vector<10x32xf32>
    %cst_74 = arith.constant dense<0.000000e+00> : vector<10xf32>
    %217 = vector.multi_reduction <add>, %216, %cst_74 [1] : vector<10x32xf32> to vector<10xf32>
    %218 = vector.shape_cast %217 : vector<10xf32> to vector<10x1xf32>
    %cst_75 = arith.constant 3.200000e+01 : f32
    %219 = vector.broadcast %cst_75 : f32 to vector<10x1xf32>
    %220 = arith.divf %218, %219 : vector<10x1xf32>
    %221 = vector.broadcast %213 : vector<10x1xf32> to vector<10x32xf32>
    %222 = arith.subf %203, %221 : vector<10x32xf32>
    %cst_76 = arith.constant 9.99999997E-7 : f32
    %223 = vector.broadcast %cst_76 : f32 to vector<10x1xf32>
    %224 = arith.addf %220, %223 : vector<10x1xf32>
    %225 = math.rsqrt %224 : vector<10x1xf32>
    %226 = vector.broadcast %225 : vector<10x1xf32> to vector<10x32xf32>
    %227 = arith.mulf %222, %226 : vector<10x32xf32>
    %228 = vector.broadcast %206 : vector<1x32xf32> to vector<10x32xf32>
    %229 = arith.mulf %227, %228 : vector<10x32xf32>
    %230 = vector.broadcast %209 : vector<1x32xf32> to vector<10x32xf32>
    %231 = arith.addf %229, %230 : vector<10x32xf32>
    %232 = arith.index_cast %c0_i32 : i32 to index
    %c0_77 = arith.constant 0 : index
    %c0_78 = arith.constant 0 : index
    %233 = vector.load %arg14[%232, %c0_77, %c0_78] : memref<2x32x64xf32, #tpu.memory_space<vmem>>, vector<1x32x64xf32>
    %234 = vector.shape_cast %233 : vector<1x32x64xf32> to vector<32x64xf32>
    %cst_79 = arith.constant dense<0.000000e+00> : vector<10x64xf32>
    %235 = tpu.matmul %231, %234, %cst_79 {dimension_numbers = #tpu.dot_dimension_numbers<[1], [0], [0], [1], [0, 0, 1, 1], [], []>} : vector<10x32xf32>, vector<32x64xf32>, vector<10x64xf32> -> vector<10x64xf32>
    %236 = arith.index_cast %c0_i32 : i32 to index
    %c0_80 = arith.constant 0 : index
    %c0_81 = arith.constant 0 : index
    %237 = vector.load %arg15[%236, %c0_80, %c0_81] : memref<2x1x64xf32, #tpu.memory_space<vmem>>, vector<1x1x64xf32>
    %238 = vector.shape_cast %237 : vector<1x1x64xf32> to vector<1x64xf32>
    %239 = vector.broadcast %238 : vector<1x64xf32> to vector<10x64xf32>
    %240 = arith.addf %235, %239 : vector<10x64xf32>
    %cst_82 = arith.constant 5.000000e-01 : f32
    %241 = vector.broadcast %cst_82 : f32 to vector<10x64xf32>
    %242 = arith.mulf %241, %240 : vector<10x64xf32>
    %cst_83 = arith.constant 0.707106769 : f32
    %243 = vector.broadcast %cst_83 : f32 to vector<10x64xf32>
    %244 = arith.mulf %240, %243 : vector<10x64xf32>
    %245 = math.absf %244 : vector<10x64xf32>
    %cst_84 = arith.constant 0.327591091 : f32
    %246 = vector.broadcast %cst_84 : f32 to vector<10x64xf32>
    %247 = arith.mulf %246, %245 : vector<10x64xf32>
    %cst_85 = arith.constant 1.000000e+00 : f32
    %248 = vector.broadcast %cst_85 : f32 to vector<10x64xf32>
    %249 = arith.addf %248, %247 : vector<10x64xf32>
    %cst_86 = arith.constant 1.000000e+00 : f32
    %250 = vector.broadcast %cst_86 : f32 to vector<10x64xf32>
    %251 = arith.divf %250, %249 : vector<10x64xf32>
    %cst_87 = arith.constant 1.06140542 : f32
    %252 = vector.broadcast %cst_87 : f32 to vector<10x64xf32>
    %253 = arith.mulf %252, %251 : vector<10x64xf32>
    %cst_88 = arith.constant -1.45315206 : f32
    %254 = vector.broadcast %cst_88 : f32 to vector<10x64xf32>
    %255 = arith.addf %253, %254 : vector<10x64xf32>
    %256 = arith.mulf %255, %251 : vector<10x64xf32>
    %cst_89 = arith.constant 1.42141378 : f32
    %257 = vector.broadcast %cst_89 : f32 to vector<10x64xf32>
    %258 = arith.addf %256, %257 : vector<10x64xf32>
    %259 = arith.mulf %258, %251 : vector<10x64xf32>
    %cst_90 = arith.constant -0.284496725 : f32
    %260 = vector.broadcast %cst_90 : f32 to vector<10x64xf32>
    %261 = arith.addf %259, %260 : vector<10x64xf32>
    %262 = arith.mulf %261, %251 : vector<10x64xf32>
    %cst_91 = arith.constant 0.254829586 : f32
    %263 = vector.broadcast %cst_91 : f32 to vector<10x64xf32>
    %264 = arith.addf %262, %263 : vector<10x64xf32>
    %265 = arith.mulf %264, %251 : vector<10x64xf32>
    %266 = arith.mulf %245, %245 : vector<10x64xf32>
    %cst_92 = arith.constant 0.000000e+00 : f32
    %267 = vector.broadcast %cst_92 : f32 to vector<10x64xf32>
    %268 = arith.subf %267, %266 : vector<10x64xf32>
    %269 = math.exp %268 : vector<10x64xf32>
    %270 = arith.mulf %265, %269 : vector<10x64xf32>
    %cst_93 = arith.constant 1.000000e+00 : f32
    %271 = vector.broadcast %cst_93 : f32 to vector<10x64xf32>
    %272 = arith.subf %271, %270 : vector<10x64xf32>
    %cst_94 = arith.constant 0.000000e+00 : f32
    %273 = vector.broadcast %cst_94 : f32 to vector<10x64xf32>
    %274 = arith.cmpf oge, %244, %273 : vector<10x64xf32>
    %cst_95 = arith.constant 0.000000e+00 : f32
    %275 = vector.broadcast %cst_95 : f32 to vector<10x64xf32>
    %276 = arith.subf %275, %272 : vector<10x64xf32>
    %277 = arith.select %274, %272, %276 : vector<10x64xi1>, vector<10x64xf32>
    %cst_96 = arith.constant 1.000000e+00 : f32
    %278 = vector.broadcast %cst_96 : f32 to vector<10x64xf32>
    %279 = arith.addf %278, %277 : vector<10x64xf32>
    %280 = arith.mulf %242, %279 : vector<10x64xf32>
    %281 = arith.index_cast %c0_i32 : i32 to index
    %c0_97 = arith.constant 0 : index
    %c0_98 = arith.constant 0 : index
    %282 = vector.load %arg16[%281, %c0_97, %c0_98] : memref<2x64x32xf32, #tpu.memory_space<vmem>>, vector<1x64x32xf32>
    %283 = vector.shape_cast %282 : vector<1x64x32xf32> to vector<64x32xf32>
    %cst_99 = arith.constant dense<0.000000e+00> : vector<10x32xf32>
    %284 = tpu.matmul %280, %283, %cst_99 {dimension_numbers = #tpu.dot_dimension_numbers<[1], [0], [0], [1], [0, 0, 1, 1], [], []>} : vector<10x64xf32>, vector<64x32xf32>, vector<10x32xf32> -> vector<10x32xf32>
    %285 = arith.index_cast %c0_i32 : i32 to index
    %c0_100 = arith.constant 0 : index
    %c0_101 = arith.constant 0 : index
    %286 = vector.load %arg17[%285, %c0_100, %c0_101] : memref<2x1x32xf32, #tpu.memory_space<vmem>>, vector<1x1x32xf32>
    %287 = vector.shape_cast %286 : vector<1x1x32xf32> to vector<1x32xf32>
    %288 = vector.broadcast %287 : vector<1x32xf32> to vector<10x32xf32>
    %289 = arith.addf %284, %288 : vector<10x32xf32>
    %290 = arith.addf %203, %289 : vector<10x32xf32>
    %c1_i32 = arith.constant 1 : i32
    %291 = arith.index_cast %c1_i32 : i32 to index
    %c0_102 = arith.constant 0 : index
    %c0_103 = arith.constant 0 : index
    %292 = vector.load %arg6[%291, %c0_102, %c0_103] : memref<2x1x32xf32, #tpu.memory_space<vmem>>, vector<1x1x32xf32>
    %293 = vector.shape_cast %292 : vector<1x1x32xf32> to vector<1x32xf32>
    %294 = arith.index_cast %c1_i32 : i32 to index
    %c0_104 = arith.constant 0 : index
    %c0_105 = arith.constant 0 : index
    %295 = vector.load %arg7[%294, %c0_104, %c0_105] : memref<2x1x32xf32, #tpu.memory_space<vmem>>, vector<1x1x32xf32>
    %296 = vector.shape_cast %295 : vector<1x1x32xf32> to vector<1x32xf32>
    %cst_106 = arith.constant dense<0.000000e+00> : vector<10xf32>
    %297 = vector.multi_reduction <add>, %290, %cst_106 [1] : vector<10x32xf32> to vector<10xf32>
    %298 = vector.shape_cast %297 : vector<10xf32> to vector<10x1xf32>
    %cst_107 = arith.constant 3.200000e+01 : f32
    %299 = vector.broadcast %cst_107 : f32 to vector<10x1xf32>
    %300 = arith.divf %298, %299 : vector<10x1xf32>
    %301 = vector.broadcast %300 : vector<10x1xf32> to vector<10x32xf32>
    %302 = arith.subf %290, %301 : vector<10x32xf32>
    %303 = arith.mulf %302, %302 : vector<10x32xf32>
    %cst_108 = arith.constant dense<0.000000e+00> : vector<10xf32>
    %304 = vector.multi_reduction <add>, %303, %cst_108 [1] : vector<10x32xf32> to vector<10xf32>
    %305 = vector.shape_cast %304 : vector<10xf32> to vector<10x1xf32>
    %cst_109 = arith.constant 3.200000e+01 : f32
    %306 = vector.broadcast %cst_109 : f32 to vector<10x1xf32>
    %307 = arith.divf %305, %306 : vector<10x1xf32>
    %308 = vector.broadcast %300 : vector<10x1xf32> to vector<10x32xf32>
    %309 = arith.subf %290, %308 : vector<10x32xf32>
    %cst_110 = arith.constant 9.99999997E-7 : f32
    %310 = vector.broadcast %cst_110 : f32 to vector<10x1xf32>
    %311 = arith.addf %307, %310 : vector<10x1xf32>
    %312 = math.rsqrt %311 : vector<10x1xf32>
    %313 = vector.broadcast %312 : vector<10x1xf32> to vector<10x32xf32>
    %314 = arith.mulf %309, %313 : vector<10x32xf32>
    %315 = vector.broadcast %293 : vector<1x32xf32> to vector<10x32xf32>
    %316 = arith.mulf %314, %315 : vector<10x32xf32>
    %317 = vector.broadcast %296 : vector<1x32xf32> to vector<10x32xf32>
    %318 = arith.addf %316, %317 : vector<10x32xf32>
    %319 = arith.index_cast %c1_i32 : i32 to index
    %c0_111 = arith.constant 0 : index
    %c0_112 = arith.constant 0 : index
    %320 = vector.load %arg8[%319, %c0_111, %c0_112] : memref<2x32x96xf32, #tpu.memory_space<vmem>>, vector<1x32x96xf32>
    %321 = vector.shape_cast %320 : vector<1x32x96xf32> to vector<32x96xf32>
    %cst_113 = arith.constant dense<0.000000e+00> : vector<10x96xf32>
    %322 = tpu.matmul %318, %321, %cst_113 {dimension_numbers = #tpu.dot_dimension_numbers<[1], [0], [0], [1], [0, 0, 1, 1], [], []>} : vector<10x32xf32>, vector<32x96xf32>, vector<10x96xf32> -> vector<10x96xf32>
    %323 = arith.index_cast %c1_i32 : i32 to index
    %c0_114 = arith.constant 0 : index
    %c0_115 = arith.constant 0 : index
    %324 = vector.load %arg9[%323, %c0_114, %c0_115] : memref<2x1x96xf32, #tpu.memory_space<vmem>>, vector<1x1x96xf32>
    %325 = vector.shape_cast %324 : vector<1x1x96xf32> to vector<1x96xf32>
    %326 = vector.broadcast %325 : vector<1x96xf32> to vector<10x96xf32>
    %327 = arith.addf %322, %326 : vector<10x96xf32>
    %328 = vector.extract_strided_slice %327 {offsets = [0, 0], sizes = [10, 32], strides = [1, 1]} : vector<10x96xf32> to vector<10x32xf32>
    %329 = vector.extract_strided_slice %327 {offsets = [0, 32], sizes = [10, 32], strides = [1, 1]} : vector<10x96xf32> to vector<10x32xf32>
    %330 = vector.extract_strided_slice %327 {offsets = [0, 64], sizes = [10, 32], strides = [1, 1]} : vector<10x96xf32> to vector<10x32xf32>
    %331 = vector.extract_strided_slice %328 {offsets = [0, 0], sizes = [5, 8], strides = [1, 1]} : vector<10x32xf32> to vector<5x8xf32>
    %332 = vector.extract_strided_slice %329 {offsets = [0, 0], sizes = [5, 8], strides = [1, 1]} : vector<10x32xf32> to vector<5x8xf32>
    %333 = vector.extract_strided_slice %330 {offsets = [0, 0], sizes = [5, 8], strides = [1, 1]} : vector<10x32xf32> to vector<5x8xf32>
    %334 = tpu.transpose %332, [1, 0] : vector<5x8xf32> -> vector<8x5xf32>
    %cst_116 = arith.constant dense<0.000000e+00> : vector<5x5xf32>
    %335 = tpu.matmul %331, %334, %cst_116 {dimension_numbers = #tpu.dot_dimension_numbers<[1], [0], [0], [1], [0, 0, 1, 1], [], []>} : vector<5x8xf32>, vector<8x5xf32>, vector<5x5xf32> -> vector<5x5xf32>
    %cst_117 = arith.constant 0.353553385 : f32
    %336 = vector.broadcast %cst_117 : f32 to vector<5x5xf32>
    %337 = arith.mulf %335, %336 : vector<5x5xf32>
    %cst_118 = arith.constant dense<0xFF800000> : vector<5xf32>
    %338 = vector.multi_reduction <maximumf>, %337, %cst_118 [1] : vector<5x5xf32> to vector<5xf32>
    %339 = vector.shape_cast %338 : vector<5xf32> to vector<5x1xf32>
    %340 = vector.broadcast %339 : vector<5x1xf32> to vector<5x5xf32>
    %341 = arith.subf %337, %340 : vector<5x5xf32>
    %342 = math.exp %341 : vector<5x5xf32>
    %cst_119 = arith.constant dense<0.000000e+00> : vector<5xf32>
    %343 = vector.multi_reduction <add>, %342, %cst_119 [1] : vector<5x5xf32> to vector<5xf32>
    %344 = vector.shape_cast %343 : vector<5xf32> to vector<5x1xf32>
    %345 = vector.broadcast %344 : vector<5x1xf32> to vector<5x5xf32>
    %346 = arith.divf %342, %345 : vector<5x5xf32>
    %cst_120 = arith.constant dense<0.000000e+00> : vector<5x8xf32>
    %347 = tpu.matmul %346, %333, %cst_120 {dimension_numbers = #tpu.dot_dimension_numbers<[1], [0], [0], [1], [0, 0, 1, 1], [], []>} : vector<5x5xf32>, vector<5x8xf32>, vector<5x8xf32> -> vector<5x8xf32>
    %348 = vector.extract_strided_slice %328 {offsets = [0, 8], sizes = [5, 8], strides = [1, 1]} : vector<10x32xf32> to vector<5x8xf32>
    %349 = vector.extract_strided_slice %329 {offsets = [0, 8], sizes = [5, 8], strides = [1, 1]} : vector<10x32xf32> to vector<5x8xf32>
    %350 = vector.extract_strided_slice %330 {offsets = [0, 8], sizes = [5, 8], strides = [1, 1]} : vector<10x32xf32> to vector<5x8xf32>
    %351 = tpu.transpose %349, [1, 0] : vector<5x8xf32> -> vector<8x5xf32>
    %cst_121 = arith.constant dense<0.000000e+00> : vector<5x5xf32>
    %352 = tpu.matmul %348, %351, %cst_121 {dimension_numbers = #tpu.dot_dimension_numbers<[1], [0], [0], [1], [0, 0, 1, 1], [], []>} : vector<5x8xf32>, vector<8x5xf32>, vector<5x5xf32> -> vector<5x5xf32>
    %cst_122 = arith.constant 0.353553385 : f32
    %353 = vector.broadcast %cst_122 : f32 to vector<5x5xf32>
    %354 = arith.mulf %352, %353 : vector<5x5xf32>
    %cst_123 = arith.constant dense<0xFF800000> : vector<5xf32>
    %355 = vector.multi_reduction <maximumf>, %354, %cst_123 [1] : vector<5x5xf32> to vector<5xf32>
    %356 = vector.shape_cast %355 : vector<5xf32> to vector<5x1xf32>
    %357 = vector.broadcast %356 : vector<5x1xf32> to vector<5x5xf32>
    %358 = arith.subf %354, %357 : vector<5x5xf32>
    %359 = math.exp %358 : vector<5x5xf32>
    %cst_124 = arith.constant dense<0.000000e+00> : vector<5xf32>
    %360 = vector.multi_reduction <add>, %359, %cst_124 [1] : vector<5x5xf32> to vector<5xf32>
    %361 = vector.shape_cast %360 : vector<5xf32> to vector<5x1xf32>
    %362 = vector.broadcast %361 : vector<5x1xf32> to vector<5x5xf32>
    %363 = arith.divf %359, %362 : vector<5x5xf32>
    %cst_125 = arith.constant dense<0.000000e+00> : vector<5x8xf32>
    %364 = tpu.matmul %363, %350, %cst_125 {dimension_numbers = #tpu.dot_dimension_numbers<[1], [0], [0], [1], [0, 0, 1, 1], [], []>} : vector<5x5xf32>, vector<5x8xf32>, vector<5x8xf32> -> vector<5x8xf32>
    %365 = vector.extract_strided_slice %328 {offsets = [0, 16], sizes = [5, 8], strides = [1, 1]} : vector<10x32xf32> to vector<5x8xf32>
    %366 = vector.extract_strided_slice %329 {offsets = [0, 16], sizes = [5, 8], strides = [1, 1]} : vector<10x32xf32> to vector<5x8xf32>
    %367 = vector.extract_strided_slice %330 {offsets = [0, 16], sizes = [5, 8], strides = [1, 1]} : vector<10x32xf32> to vector<5x8xf32>
    %368 = tpu.transpose %366, [1, 0] : vector<5x8xf32> -> vector<8x5xf32>
    %cst_126 = arith.constant dense<0.000000e+00> : vector<5x5xf32>
    %369 = tpu.matmul %365, %368, %cst_126 {dimension_numbers = #tpu.dot_dimension_numbers<[1], [0], [0], [1], [0, 0, 1, 1], [], []>} : vector<5x8xf32>, vector<8x5xf32>, vector<5x5xf32> -> vector<5x5xf32>
    %cst_127 = arith.constant 0.353553385 : f32
    %370 = vector.broadcast %cst_127 : f32 to vector<5x5xf32>
    %371 = arith.mulf %369, %370 : vector<5x5xf32>
    %cst_128 = arith.constant dense<0xFF800000> : vector<5xf32>
    %372 = vector.multi_reduction <maximumf>, %371, %cst_128 [1] : vector<5x5xf32> to vector<5xf32>
    %373 = vector.shape_cast %372 : vector<5xf32> to vector<5x1xf32>
    %374 = vector.broadcast %373 : vector<5x1xf32> to vector<5x5xf32>
    %375 = arith.subf %371, %374 : vector<5x5xf32>
    %376 = math.exp %375 : vector<5x5xf32>
    %cst_129 = arith.constant dense<0.000000e+00> : vector<5xf32>
    %377 = vector.multi_reduction <add>, %376, %cst_129 [1] : vector<5x5xf32> to vector<5xf32>
    %378 = vector.shape_cast %377 : vector<5xf32> to vector<5x1xf32>
    %379 = vector.broadcast %378 : vector<5x1xf32> to vector<5x5xf32>
    %380 = arith.divf %376, %379 : vector<5x5xf32>
    %cst_130 = arith.constant dense<0.000000e+00> : vector<5x8xf32>
    %381 = tpu.matmul %380, %367, %cst_130 {dimension_numbers = #tpu.dot_dimension_numbers<[1], [0], [0], [1], [0, 0, 1, 1], [], []>} : vector<5x5xf32>, vector<5x8xf32>, vector<5x8xf32> -> vector<5x8xf32>
    %382 = vector.extract_strided_slice %328 {offsets = [0, 24], sizes = [5, 8], strides = [1, 1]} : vector<10x32xf32> to vector<5x8xf32>
    %383 = vector.extract_strided_slice %329 {offsets = [0, 24], sizes = [5, 8], strides = [1, 1]} : vector<10x32xf32> to vector<5x8xf32>
    %384 = vector.extract_strided_slice %330 {offsets = [0, 24], sizes = [5, 8], strides = [1, 1]} : vector<10x32xf32> to vector<5x8xf32>
    %385 = tpu.transpose %383, [1, 0] : vector<5x8xf32> -> vector<8x5xf32>
    %cst_131 = arith.constant dense<0.000000e+00> : vector<5x5xf32>
    %386 = tpu.matmul %382, %385, %cst_131 {dimension_numbers = #tpu.dot_dimension_numbers<[1], [0], [0], [1], [0, 0, 1, 1], [], []>} : vector<5x8xf32>, vector<8x5xf32>, vector<5x5xf32> -> vector<5x5xf32>
    %cst_132 = arith.constant 0.353553385 : f32
    %387 = vector.broadcast %cst_132 : f32 to vector<5x5xf32>
    %388 = arith.mulf %386, %387 : vector<5x5xf32>
    %cst_133 = arith.constant dense<0xFF800000> : vector<5xf32>
    %389 = vector.multi_reduction <maximumf>, %388, %cst_133 [1] : vector<5x5xf32> to vector<5xf32>
    %390 = vector.shape_cast %389 : vector<5xf32> to vector<5x1xf32>
    %391 = vector.broadcast %390 : vector<5x1xf32> to vector<5x5xf32>
    %392 = arith.subf %388, %391 : vector<5x5xf32>
    %393 = math.exp %392 : vector<5x5xf32>
    %cst_134 = arith.constant dense<0.000000e+00> : vector<5xf32>
    %394 = vector.multi_reduction <add>, %393, %cst_134 [1] : vector<5x5xf32> to vector<5xf32>
    %395 = vector.shape_cast %394 : vector<5xf32> to vector<5x1xf32>
    %396 = vector.broadcast %395 : vector<5x1xf32> to vector<5x5xf32>
    %397 = arith.divf %393, %396 : vector<5x5xf32>
    %cst_135 = arith.constant dense<0.000000e+00> : vector<5x8xf32>
    %398 = tpu.matmul %397, %384, %cst_135 {dimension_numbers = #tpu.dot_dimension_numbers<[1], [0], [0], [1], [0, 0, 1, 1], [], []>} : vector<5x5xf32>, vector<5x8xf32>, vector<5x8xf32> -> vector<5x8xf32>
    %399 = tpu.concatenate %347, %364, %381, %398 in 1 : vector<5x8xf32>, vector<5x8xf32>, vector<5x8xf32>, vector<5x8xf32> -> vector<5x32xf32>
    %400 = vector.extract_strided_slice %328 {offsets = [5, 0], sizes = [5, 8], strides = [1, 1]} : vector<10x32xf32> to vector<5x8xf32>
    %401 = vector.extract_strided_slice %329 {offsets = [5, 0], sizes = [5, 8], strides = [1, 1]} : vector<10x32xf32> to vector<5x8xf32>
    %402 = vector.extract_strided_slice %330 {offsets = [5, 0], sizes = [5, 8], strides = [1, 1]} : vector<10x32xf32> to vector<5x8xf32>
    %403 = tpu.transpose %401, [1, 0] : vector<5x8xf32> -> vector<8x5xf32>
    %cst_136 = arith.constant dense<0.000000e+00> : vector<5x5xf32>
    %404 = tpu.matmul %400, %403, %cst_136 {dimension_numbers = #tpu.dot_dimension_numbers<[1], [0], [0], [1], [0, 0, 1, 1], [], []>} : vector<5x8xf32>, vector<8x5xf32>, vector<5x5xf32> -> vector<5x5xf32>
    %cst_137 = arith.constant 0.353553385 : f32
    %405 = vector.broadcast %cst_137 : f32 to vector<5x5xf32>
    %406 = arith.mulf %404, %405 : vector<5x5xf32>
    %cst_138 = arith.constant dense<0xFF800000> : vector<5xf32>
    %407 = vector.multi_reduction <maximumf>, %406, %cst_138 [1] : vector<5x5xf32> to vector<5xf32>
    %408 = vector.shape_cast %407 : vector<5xf32> to vector<5x1xf32>
    %409 = vector.broadcast %408 : vector<5x1xf32> to vector<5x5xf32>
    %410 = arith.subf %406, %409 : vector<5x5xf32>
    %411 = math.exp %410 : vector<5x5xf32>
    %cst_139 = arith.constant dense<0.000000e+00> : vector<5xf32>
    %412 = vector.multi_reduction <add>, %411, %cst_139 [1] : vector<5x5xf32> to vector<5xf32>
    %413 = vector.shape_cast %412 : vector<5xf32> to vector<5x1xf32>
    %414 = vector.broadcast %413 : vector<5x1xf32> to vector<5x5xf32>
    %415 = arith.divf %411, %414 : vector<5x5xf32>
    %cst_140 = arith.constant dense<0.000000e+00> : vector<5x8xf32>
    %416 = tpu.matmul %415, %402, %cst_140 {dimension_numbers = #tpu.dot_dimension_numbers<[1], [0], [0], [1], [0, 0, 1, 1], [], []>} : vector<5x5xf32>, vector<5x8xf32>, vector<5x8xf32> -> vector<5x8xf32>
    %417 = vector.extract_strided_slice %328 {offsets = [5, 8], sizes = [5, 8], strides = [1, 1]} : vector<10x32xf32> to vector<5x8xf32>
    %418 = vector.extract_strided_slice %329 {offsets = [5, 8], sizes = [5, 8], strides = [1, 1]} : vector<10x32xf32> to vector<5x8xf32>
    %419 = vector.extract_strided_slice %330 {offsets = [5, 8], sizes = [5, 8], strides = [1, 1]} : vector<10x32xf32> to vector<5x8xf32>
    %420 = tpu.transpose %418, [1, 0] : vector<5x8xf32> -> vector<8x5xf32>
    %cst_141 = arith.constant dense<0.000000e+00> : vector<5x5xf32>
    %421 = tpu.matmul %417, %420, %cst_141 {dimension_numbers = #tpu.dot_dimension_numbers<[1], [0], [0], [1], [0, 0, 1, 1], [], []>} : vector<5x8xf32>, vector<8x5xf32>, vector<5x5xf32> -> vector<5x5xf32>
    %cst_142 = arith.constant 0.353553385 : f32
    %422 = vector.broadcast %cst_142 : f32 to vector<5x5xf32>
    %423 = arith.mulf %421, %422 : vector<5x5xf32>
    %cst_143 = arith.constant dense<0xFF800000> : vector<5xf32>
    %424 = vector.multi_reduction <maximumf>, %423, %cst_143 [1] : vector<5x5xf32> to vector<5xf32>
    %425 = vector.shape_cast %424 : vector<5xf32> to vector<5x1xf32>
    %426 = vector.broadcast %425 : vector<5x1xf32> to vector<5x5xf32>
    %427 = arith.subf %423, %426 : vector<5x5xf32>
    %428 = math.exp %427 : vector<5x5xf32>
    %cst_144 = arith.constant dense<0.000000e+00> : vector<5xf32>
    %429 = vector.multi_reduction <add>, %428, %cst_144 [1] : vector<5x5xf32> to vector<5xf32>
    %430 = vector.shape_cast %429 : vector<5xf32> to vector<5x1xf32>
    %431 = vector.broadcast %430 : vector<5x1xf32> to vector<5x5xf32>
    %432 = arith.divf %428, %431 : vector<5x5xf32>
    %cst_145 = arith.constant dense<0.000000e+00> : vector<5x8xf32>
    %433 = tpu.matmul %432, %419, %cst_145 {dimension_numbers = #tpu.dot_dimension_numbers<[1], [0], [0], [1], [0, 0, 1, 1], [], []>} : vector<5x5xf32>, vector<5x8xf32>, vector<5x8xf32> -> vector<5x8xf32>
    %434 = vector.extract_strided_slice %328 {offsets = [5, 16], sizes = [5, 8], strides = [1, 1]} : vector<10x32xf32> to vector<5x8xf32>
    %435 = vector.extract_strided_slice %329 {offsets = [5, 16], sizes = [5, 8], strides = [1, 1]} : vector<10x32xf32> to vector<5x8xf32>
    %436 = vector.extract_strided_slice %330 {offsets = [5, 16], sizes = [5, 8], strides = [1, 1]} : vector<10x32xf32> to vector<5x8xf32>
    %437 = tpu.transpose %435, [1, 0] : vector<5x8xf32> -> vector<8x5xf32>
    %cst_146 = arith.constant dense<0.000000e+00> : vector<5x5xf32>
    %438 = tpu.matmul %434, %437, %cst_146 {dimension_numbers = #tpu.dot_dimension_numbers<[1], [0], [0], [1], [0, 0, 1, 1], [], []>} : vector<5x8xf32>, vector<8x5xf32>, vector<5x5xf32> -> vector<5x5xf32>
    %cst_147 = arith.constant 0.353553385 : f32
    %439 = vector.broadcast %cst_147 : f32 to vector<5x5xf32>
    %440 = arith.mulf %438, %439 : vector<5x5xf32>
    %cst_148 = arith.constant dense<0xFF800000> : vector<5xf32>
    %441 = vector.multi_reduction <maximumf>, %440, %cst_148 [1] : vector<5x5xf32> to vector<5xf32>
    %442 = vector.shape_cast %441 : vector<5xf32> to vector<5x1xf32>
    %443 = vector.broadcast %442 : vector<5x1xf32> to vector<5x5xf32>
    %444 = arith.subf %440, %443 : vector<5x5xf32>
    %445 = math.exp %444 : vector<5x5xf32>
    %cst_149 = arith.constant dense<0.000000e+00> : vector<5xf32>
    %446 = vector.multi_reduction <add>, %445, %cst_149 [1] : vector<5x5xf32> to vector<5xf32>
    %447 = vector.shape_cast %446 : vector<5xf32> to vector<5x1xf32>
    %448 = vector.broadcast %447 : vector<5x1xf32> to vector<5x5xf32>
    %449 = arith.divf %445, %448 : vector<5x5xf32>
    %cst_150 = arith.constant dense<0.000000e+00> : vector<5x8xf32>
    %450 = tpu.matmul %449, %436, %cst_150 {dimension_numbers = #tpu.dot_dimension_numbers<[1], [0], [0], [1], [0, 0, 1, 1], [], []>} : vector<5x5xf32>, vector<5x8xf32>, vector<5x8xf32> -> vector<5x8xf32>
    %451 = vector.extract_strided_slice %328 {offsets = [5, 24], sizes = [5, 8], strides = [1, 1]} : vector<10x32xf32> to vector<5x8xf32>
    %452 = vector.extract_strided_slice %329 {offsets = [5, 24], sizes = [5, 8], strides = [1, 1]} : vector<10x32xf32> to vector<5x8xf32>
    %453 = vector.extract_strided_slice %330 {offsets = [5, 24], sizes = [5, 8], strides = [1, 1]} : vector<10x32xf32> to vector<5x8xf32>
    %454 = tpu.transpose %452, [1, 0] : vector<5x8xf32> -> vector<8x5xf32>
    %cst_151 = arith.constant dense<0.000000e+00> : vector<5x5xf32>
    %455 = tpu.matmul %451, %454, %cst_151 {dimension_numbers = #tpu.dot_dimension_numbers<[1], [0], [0], [1], [0, 0, 1, 1], [], []>} : vector<5x8xf32>, vector<8x5xf32>, vector<5x5xf32> -> vector<5x5xf32>
    %cst_152 = arith.constant 0.353553385 : f32
    %456 = vector.broadcast %cst_152 : f32 to vector<5x5xf32>
    %457 = arith.mulf %455, %456 : vector<5x5xf32>
    %cst_153 = arith.constant dense<0xFF800000> : vector<5xf32>
    %458 = vector.multi_reduction <maximumf>, %457, %cst_153 [1] : vector<5x5xf32> to vector<5xf32>
    %459 = vector.shape_cast %458 : vector<5xf32> to vector<5x1xf32>
    %460 = vector.broadcast %459 : vector<5x1xf32> to vector<5x5xf32>
    %461 = arith.subf %457, %460 : vector<5x5xf32>
    %462 = math.exp %461 : vector<5x5xf32>
    %cst_154 = arith.constant dense<0.000000e+00> : vector<5xf32>
    %463 = vector.multi_reduction <add>, %462, %cst_154 [1] : vector<5x5xf32> to vector<5xf32>
    %464 = vector.shape_cast %463 : vector<5xf32> to vector<5x1xf32>
    %465 = vector.broadcast %464 : vector<5x1xf32> to vector<5x5xf32>
    %466 = arith.divf %462, %465 : vector<5x5xf32>
    %cst_155 = arith.constant dense<0.000000e+00> : vector<5x8xf32>
    %467 = tpu.matmul %466, %453, %cst_155 {dimension_numbers = #tpu.dot_dimension_numbers<[1], [0], [0], [1], [0, 0, 1, 1], [], []>} : vector<5x5xf32>, vector<5x8xf32>, vector<5x8xf32> -> vector<5x8xf32>
    %468 = tpu.concatenate %416, %433, %450, %467 in 1 : vector<5x8xf32>, vector<5x8xf32>, vector<5x8xf32>, vector<5x8xf32> -> vector<5x32xf32>
    %469 = tpu.concatenate %399, %468 in 0 : vector<5x32xf32>, vector<5x32xf32> -> vector<10x32xf32>
    %470 = arith.index_cast %c1_i32 : i32 to index
    %c0_156 = arith.constant 0 : index
    %c0_157 = arith.constant 0 : index
    %471 = vector.load %arg10[%470, %c0_156, %c0_157] : memref<2x32x32xf32, #tpu.memory_space<vmem>>, vector<1x32x32xf32>
    %472 = vector.shape_cast %471 : vector<1x32x32xf32> to vector<32x32xf32>
    %cst_158 = arith.constant dense<0.000000e+00> : vector<10x32xf32>
    %473 = tpu.matmul %469, %472, %cst_158 {dimension_numbers = #tpu.dot_dimension_numbers<[1], [0], [0], [1], [0, 0, 1, 1], [], []>} : vector<10x32xf32>, vector<32x32xf32>, vector<10x32xf32> -> vector<10x32xf32>
    %474 = arith.index_cast %c1_i32 : i32 to index
    %c0_159 = arith.constant 0 : index
    %c0_160 = arith.constant 0 : index
    %475 = vector.load %arg11[%474, %c0_159, %c0_160] : memref<2x1x32xf32, #tpu.memory_space<vmem>>, vector<1x1x32xf32>
    %476 = vector.shape_cast %475 : vector<1x1x32xf32> to vector<1x32xf32>
    %477 = vector.broadcast %476 : vector<1x32xf32> to vector<10x32xf32>
    %478 = arith.addf %473, %477 : vector<10x32xf32>
    %479 = arith.addf %290, %478 : vector<10x32xf32>
    %480 = arith.index_cast %c1_i32 : i32 to index
    %c0_161 = arith.constant 0 : index
    %c0_162 = arith.constant 0 : index
    %481 = vector.load %arg12[%480, %c0_161, %c0_162] : memref<2x1x32xf32, #tpu.memory_space<vmem>>, vector<1x1x32xf32>
    %482 = vector.shape_cast %481 : vector<1x1x32xf32> to vector<1x32xf32>
    %483 = arith.index_cast %c1_i32 : i32 to index
    %c0_163 = arith.constant 0 : index
    %c0_164 = arith.constant 0 : index
    %484 = vector.load %arg13[%483, %c0_163, %c0_164] : memref<2x1x32xf32, #tpu.memory_space<vmem>>, vector<1x1x32xf32>
    %485 = vector.shape_cast %484 : vector<1x1x32xf32> to vector<1x32xf32>
    %cst_165 = arith.constant dense<0.000000e+00> : vector<10xf32>
    %486 = vector.multi_reduction <add>, %479, %cst_165 [1] : vector<10x32xf32> to vector<10xf32>
    %487 = vector.shape_cast %486 : vector<10xf32> to vector<10x1xf32>
    %cst_166 = arith.constant 3.200000e+01 : f32
    %488 = vector.broadcast %cst_166 : f32 to vector<10x1xf32>
    %489 = arith.divf %487, %488 : vector<10x1xf32>
    %490 = vector.broadcast %489 : vector<10x1xf32> to vector<10x32xf32>
    %491 = arith.subf %479, %490 : vector<10x32xf32>
    %492 = arith.mulf %491, %491 : vector<10x32xf32>
    %cst_167 = arith.constant dense<0.000000e+00> : vector<10xf32>
    %493 = vector.multi_reduction <add>, %492, %cst_167 [1] : vector<10x32xf32> to vector<10xf32>
    %494 = vector.shape_cast %493 : vector<10xf32> to vector<10x1xf32>
    %cst_168 = arith.constant 3.200000e+01 : f32
    %495 = vector.broadcast %cst_168 : f32 to vector<10x1xf32>
    %496 = arith.divf %494, %495 : vector<10x1xf32>
    %497 = vector.broadcast %489 : vector<10x1xf32> to vector<10x32xf32>
    %498 = arith.subf %479, %497 : vector<10x32xf32>
    %cst_169 = arith.constant 9.99999997E-7 : f32
    %499 = vector.broadcast %cst_169 : f32 to vector<10x1xf32>
    %500 = arith.addf %496, %499 : vector<10x1xf32>
    %501 = math.rsqrt %500 : vector<10x1xf32>
    %502 = vector.broadcast %501 : vector<10x1xf32> to vector<10x32xf32>
    %503 = arith.mulf %498, %502 : vector<10x32xf32>
    %504 = vector.broadcast %482 : vector<1x32xf32> to vector<10x32xf32>
    %505 = arith.mulf %503, %504 : vector<10x32xf32>
    %506 = vector.broadcast %485 : vector<1x32xf32> to vector<10x32xf32>
    %507 = arith.addf %505, %506 : vector<10x32xf32>
    %508 = arith.index_cast %c1_i32 : i32 to index
    %c0_170 = arith.constant 0 : index
    %c0_171 = arith.constant 0 : index
    %509 = vector.load %arg14[%508, %c0_170, %c0_171] : memref<2x32x64xf32, #tpu.memory_space<vmem>>, vector<1x32x64xf32>
    %510 = vector.shape_cast %509 : vector<1x32x64xf32> to vector<32x64xf32>
    %cst_172 = arith.constant dense<0.000000e+00> : vector<10x64xf32>
    %511 = tpu.matmul %507, %510, %cst_172 {dimension_numbers = #tpu.dot_dimension_numbers<[1], [0], [0], [1], [0, 0, 1, 1], [], []>} : vector<10x32xf32>, vector<32x64xf32>, vector<10x64xf32> -> vector<10x64xf32>
    %512 = arith.index_cast %c1_i32 : i32 to index
    %c0_173 = arith.constant 0 : index
    %c0_174 = arith.constant 0 : index
    %513 = vector.load %arg15[%512, %c0_173, %c0_174] : memref<2x1x64xf32, #tpu.memory_space<vmem>>, vector<1x1x64xf32>
    %514 = vector.shape_cast %513 : vector<1x1x64xf32> to vector<1x64xf32>
    %515 = vector.broadcast %514 : vector<1x64xf32> to vector<10x64xf32>
    %516 = arith.addf %511, %515 : vector<10x64xf32>
    %cst_175 = arith.constant 5.000000e-01 : f32
    %517 = vector.broadcast %cst_175 : f32 to vector<10x64xf32>
    %518 = arith.mulf %517, %516 : vector<10x64xf32>
    %cst_176 = arith.constant 0.707106769 : f32
    %519 = vector.broadcast %cst_176 : f32 to vector<10x64xf32>
    %520 = arith.mulf %516, %519 : vector<10x64xf32>
    %521 = math.absf %520 : vector<10x64xf32>
    %cst_177 = arith.constant 0.327591091 : f32
    %522 = vector.broadcast %cst_177 : f32 to vector<10x64xf32>
    %523 = arith.mulf %522, %521 : vector<10x64xf32>
    %cst_178 = arith.constant 1.000000e+00 : f32
    %524 = vector.broadcast %cst_178 : f32 to vector<10x64xf32>
    %525 = arith.addf %524, %523 : vector<10x64xf32>
    %cst_179 = arith.constant 1.000000e+00 : f32
    %526 = vector.broadcast %cst_179 : f32 to vector<10x64xf32>
    %527 = arith.divf %526, %525 : vector<10x64xf32>
    %cst_180 = arith.constant 1.06140542 : f32
    %528 = vector.broadcast %cst_180 : f32 to vector<10x64xf32>
    %529 = arith.mulf %528, %527 : vector<10x64xf32>
    %cst_181 = arith.constant -1.45315206 : f32
    %530 = vector.broadcast %cst_181 : f32 to vector<10x64xf32>
    %531 = arith.addf %529, %530 : vector<10x64xf32>
    %532 = arith.mulf %531, %527 : vector<10x64xf32>
    %cst_182 = arith.constant 1.42141378 : f32
    %533 = vector.broadcast %cst_182 : f32 to vector<10x64xf32>
    %534 = arith.addf %532, %533 : vector<10x64xf32>
    %535 = arith.mulf %534, %527 : vector<10x64xf32>
    %cst_183 = arith.constant -0.284496725 : f32
    %536 = vector.broadcast %cst_183 : f32 to vector<10x64xf32>
    %537 = arith.addf %535, %536 : vector<10x64xf32>
    %538 = arith.mulf %537, %527 : vector<10x64xf32>
    %cst_184 = arith.constant 0.254829586 : f32
    %539 = vector.broadcast %cst_184 : f32 to vector<10x64xf32>
    %540 = arith.addf %538, %539 : vector<10x64xf32>
    %541 = arith.mulf %540, %527 : vector<10x64xf32>
    %542 = arith.mulf %521, %521 : vector<10x64xf32>
    %cst_185 = arith.constant 0.000000e+00 : f32
    %543 = vector.broadcast %cst_185 : f32 to vector<10x64xf32>
    %544 = arith.subf %543, %542 : vector<10x64xf32>
    %545 = math.exp %544 : vector<10x64xf32>
    %546 = arith.mulf %541, %545 : vector<10x64xf32>
    %cst_186 = arith.constant 1.000000e+00 : f32
    %547 = vector.broadcast %cst_186 : f32 to vector<10x64xf32>
    %548 = arith.subf %547, %546 : vector<10x64xf32>
    %cst_187 = arith.constant 0.000000e+00 : f32
    %549 = vector.broadcast %cst_187 : f32 to vector<10x64xf32>
    %550 = arith.cmpf oge, %520, %549 : vector<10x64xf32>
    %cst_188 = arith.constant 0.000000e+00 : f32
    %551 = vector.broadcast %cst_188 : f32 to vector<10x64xf32>
    %552 = arith.subf %551, %548 : vector<10x64xf32>
    %553 = arith.select %550, %548, %552 : vector<10x64xi1>, vector<10x64xf32>
    %cst_189 = arith.constant 1.000000e+00 : f32
    %554 = vector.broadcast %cst_189 : f32 to vector<10x64xf32>
    %555 = arith.addf %554, %553 : vector<10x64xf32>
    %556 = arith.mulf %518, %555 : vector<10x64xf32>
    %557 = arith.index_cast %c1_i32 : i32 to index
    %c0_190 = arith.constant 0 : index
    %c0_191 = arith.constant 0 : index
    %558 = vector.load %arg16[%557, %c0_190, %c0_191] : memref<2x64x32xf32, #tpu.memory_space<vmem>>, vector<1x64x32xf32>
    %559 = vector.shape_cast %558 : vector<1x64x32xf32> to vector<64x32xf32>
    %cst_192 = arith.constant dense<0.000000e+00> : vector<10x32xf32>
    %560 = tpu.matmul %556, %559, %cst_192 {dimension_numbers = #tpu.dot_dimension_numbers<[1], [0], [0], [1], [0, 0, 1, 1], [], []>} : vector<10x64xf32>, vector<64x32xf32>, vector<10x32xf32> -> vector<10x32xf32>
    %561 = arith.index_cast %c1_i32 : i32 to index
    %c0_193 = arith.constant 0 : index
    %c0_194 = arith.constant 0 : index
    %562 = vector.load %arg17[%561, %c0_193, %c0_194] : memref<2x1x32xf32, #tpu.memory_space<vmem>>, vector<1x1x32xf32>
    %563 = vector.shape_cast %562 : vector<1x1x32xf32> to vector<1x32xf32>
    %564 = vector.broadcast %563 : vector<1x32xf32> to vector<10x32xf32>
    %565 = arith.addf %560, %564 : vector<10x32xf32>
    %566 = arith.addf %479, %565 : vector<10x32xf32>
    %c2_i32 = arith.constant 2 : i32
    %c0_195 = arith.constant 0 : index
    %c0_196 = arith.constant 0 : index
    %567 = vector.load %arg18[%c0_195, %c0_196] : memref<1x32xf32, #tpu.memory_space<vmem>>, vector<1x32xf32>
    %c0_197 = arith.constant 0 : index
    %c0_198 = arith.constant 0 : index
    %568 = vector.load %arg19[%c0_197, %c0_198] : memref<1x32xf32, #tpu.memory_space<vmem>>, vector<1x32xf32>
    %cst_199 = arith.constant dense<0.000000e+00> : vector<10xf32>
    %569 = vector.multi_reduction <add>, %566, %cst_199 [1] : vector<10x32xf32> to vector<10xf32>
    %570 = vector.shape_cast %569 : vector<10xf32> to vector<10x1xf32>
    %cst_200 = arith.constant 3.200000e+01 : f32
    %571 = vector.broadcast %cst_200 : f32 to vector<10x1xf32>
    %572 = arith.divf %570, %571 : vector<10x1xf32>
    %573 = vector.broadcast %572 : vector<10x1xf32> to vector<10x32xf32>
    %574 = arith.subf %566, %573 : vector<10x32xf32>
    %575 = arith.mulf %574, %574 : vector<10x32xf32>
    %cst_201 = arith.constant dense<0.000000e+00> : vector<10xf32>
    %576 = vector.multi_reduction <add>, %575, %cst_201 [1] : vector<10x32xf32> to vector<10xf32>
    %577 = vector.shape_cast %576 : vector<10xf32> to vector<10x1xf32>
    %cst_202 = arith.constant 3.200000e+01 : f32
    %578 = vector.broadcast %cst_202 : f32 to vector<10x1xf32>
    %579 = arith.divf %577, %578 : vector<10x1xf32>
    %580 = vector.broadcast %572 : vector<10x1xf32> to vector<10x32xf32>
    %581 = arith.subf %566, %580 : vector<10x32xf32>
    %cst_203 = arith.constant 9.99999997E-7 : f32
    %582 = vector.broadcast %cst_203 : f32 to vector<10x1xf32>
    %583 = arith.addf %579, %582 : vector<10x1xf32>
    %584 = math.rsqrt %583 : vector<10x1xf32>
    %585 = vector.broadcast %584 : vector<10x1xf32> to vector<10x32xf32>
    %586 = arith.mulf %581, %585 : vector<10x32xf32>
    %587 = vector.broadcast %567 : vector<1x32xf32> to vector<10x32xf32>
    %588 = arith.mulf %586, %587 : vector<10x32xf32>
    %589 = vector.broadcast %568 : vector<1x32xf32> to vector<10x32xf32>
    %590 = arith.addf %588, %589 : vector<10x32xf32>
    %591 = vector.extract_strided_slice %590 {offsets = [0, 0], sizes = [1, 32], strides = [1, 1]} : vector<10x32xf32> to vector<1x32xf32>
    %592 = vector.extract_strided_slice %590 {offsets = [5, 0], sizes = [1, 32], strides = [1, 1]} : vector<10x32xf32> to vector<1x32xf32>
    %593 = tpu.concatenate %591, %592 in 0 : vector<1x32xf32>, vector<1x32xf32> -> vector<2x32xf32>
    %c0_204 = arith.constant 0 : index
    %c0_205 = arith.constant 0 : index
    %594 = vector.load %arg20[%c0_204, %c0_205] : memref<32x128xf32, #tpu.memory_space<vmem>>, vector<32x128xf32>
    %cst_206 = arith.constant dense<0.000000e+00> : vector<2x128xf32>
    %595 = tpu.matmul %593, %594, %cst_206 {dimension_numbers = #tpu.dot_dimension_numbers<[1], [0], [0], [1], [0, 0, 1, 1], [], []>} : vector<2x32xf32>, vector<32x128xf32>, vector<2x128xf32> -> vector<2x128xf32>
    %c0_207 = arith.constant 0 : index
    %c0_208 = arith.constant 0 : index
    %596 = vector.load %arg21[%c0_207, %c0_208] : memref<1x128xf32, #tpu.memory_space<vmem>>, vector<1x128xf32>
    %597 = vector.broadcast %596 : vector<1x128xf32> to vector<2x128xf32>
    %598 = arith.addf %595, %597 : vector<2x128xf32>
    %c0_209 = arith.constant 0 : index
    %c0_210 = arith.constant 0 : index
    %599 = vector.load %arg22[%c0_209, %c0_210] : memref<2x128xf32, #tpu.memory_space<vmem>>, vector<2x128xf32>
    tpu.vector_store %arg22[%c0_209, %c0_210], %598 {strides = array<i32>} : memref<2x128xf32, #tpu.memory_space<vmem>>, vector<2x128xf32>,
    return
  }
  func.func @transform_0(%arg0: i32) -> (i32, i32) {
    %c0_i32 = arith.constant 0 : i32
    %c0_i32_0 = arith.constant 0 : i32
    %c0_i32_1 = arith.constant 0 : i32
    return %c0_i32, %c0_i32_0 : i32, i32
  }
  func.func @transform_1(%arg0: i32) -> (i32, i32) {
    %c0_i32 = arith.constant 0 : i32
    %c0_i32_0 = arith.constant 0 : i32
    %c0_i32_1 = arith.constant 0 : i32
    return %c0_i32, %c0_i32_0 : i32, i32
  }
  func.func @transform_2(%arg0: i32) -> (i32, i32) {
    %c0_i32 = arith.constant 0 : i32
    %c0_i32_0 = arith.constant 0 : i32
    %c0_i32_1 = arith.constant 0 : i32
    return %c0_i32, %c0_i32_0 : i32, i32
  }
  func.func @transform_3(%arg0: i32) -> (i32, i32) {
    %c0_i32 = arith.constant 0 : i32
    %c0_i32_0 = arith.constant 0 : i32
    %c0_i32_1 = arith.constant 0 : i32
    return %c0_i32, %c0_i32_0 : i32, i32
  }
  func.func @transform_4(%arg0: i32) -> (i32, i32) {
    %c0_i32 = arith.constant 0 : i32
    %c0_i32_0 = arith.constant 0 : i32
    %c0_i32_1 = arith.constant 0 : i32
    return %c0_i32, %c0_i32_0 : i32, i32
  }
  func.func @transform_5(%arg0: i32) -> (i32, i32, i32) {
    %c0_i32 = arith.constant 0 : i32
    %c0_i32_0 = arith.constant 0 : i32
    %c0_i32_1 = arith.constant 0 : i32
    %c0_i32_2 = arith.constant 0 : i32
    return %c0_i32, %c0_i32_0, %c0_i32_1 : i32, i32, i32
  }
  func.func @transform_6(%arg0: i32) -> (i32, i32, i32) {
    %c0_i32 = arith.constant 0 : i32
    %c0_i32_0 = arith.constant 0 : i32
    %c0_i32_1 = arith.constant 0 : i32
    %c0_i32_2 = arith.constant 0 : i32
    return %c0_i32, %c0_i32_0, %c0_i32_1 : i32, i32, i32
  }
  func.func @transform_7(%arg0: i32) -> (i32, i32, i32) {
    %c0_i32 = arith.constant 0 : i32
    %c0_i32_0 = arith.constant 0 : i32
    %c0_i32_1 = arith.constant 0 : i32
    %c0_i32_2 = arith.constant 0 : i32
    return %c0_i32, %c0_i32_0, %c0_i32_1 : i32, i32, i32
  }
  func.func @transform_8(%arg0: i32) -> (i32, i32, i32) {
    %c0_i32 = arith.constant 0 : i32
    %c0_i32_0 = arith.constant 0 : i32
    %c0_i32_1 = arith.constant 0 : i32
    %c0_i32_2 = arith.constant 0 : i32
    return %c0_i32, %c0_i32_0, %c0_i32_1 : i32, i32, i32
  }
  func.func @transform_9(%arg0: i32) -> (i32, i32, i32) {
    %c0_i32 = arith.constant 0 : i32
    %c0_i32_0 = arith.constant 0 : i32
    %c0_i32_1 = arith.constant 0 : i32
    %c0_i32_2 = arith.constant 0 : i32
    return %c0_i32, %c0_i32_0, %c0_i32_1 : i32, i32, i32
  }
  func.func @transform_10(%arg0: i32) -> (i32, i32, i32) {
    %c0_i32 = arith.constant 0 : i32
    %c0_i32_0 = arith.constant 0 : i32
    %c0_i32_1 = arith.constant 0 : i32
    %c0_i32_2 = arith.constant 0 : i32
    return %c0_i32, %c0_i32_0, %c0_i32_1 : i32, i32, i32
  }
  func.func @transform_11(%arg0: i32) -> (i32, i32, i32) {
    %c0_i32 = arith.constant 0 : i32
    %c0_i32_0 = arith.constant 0 : i32
    %c0_i32_1 = arith.constant 0 : i32
    %c0_i32_2 = arith.constant 0 : i32
    return %c0_i32, %c0_i32_0, %c0_i32_1 : i32, i32, i32
  }
  func.func @transform_12(%arg0: i32) -> (i32, i32, i32) {
    %c0_i32 = arith.constant 0 : i32
    %c0_i32_0 = arith.constant 0 : i32
    %c0_i32_1 = arith.constant 0 : i32
    %c0_i32_2 = arith.constant 0 : i32
    return %c0_i32, %c0_i32_0, %c0_i32_1 : i32, i32, i32
  }
  func.func @transform_13(%arg0: i32) -> (i32, i32, i32) {
    %c0_i32 = arith.constant 0 : i32
    %c0_i32_0 = arith.constant 0 : i32
    %c0_i32_1 = arith.constant 0 : i32
    %c0_i32_2 = arith.constant 0 : i32
    return %c0_i32, %c0_i32_0, %c0_i32_1 : i32, i32, i32
  }
  func.func @transform_14(%arg0: i32) -> (i32, i32, i32) {
    %c0_i32 = arith.constant 0 : i32
    %c0_i32_0 = arith.constant 0 : i32
    %c0_i32_1 = arith.constant 0 : i32
    %c0_i32_2 = arith.constant 0 : i32
    return %c0_i32, %c0_i32_0, %c0_i32_1 : i32, i32, i32
  }
  func.func @transform_15(%arg0: i32) -> (i32, i32, i32) {
    %c0_i32 = arith.constant 0 : i32
    %c0_i32_0 = arith.constant 0 : i32
    %c0_i32_1 = arith.constant 0 : i32
    %c0_i32_2 = arith.constant 0 : i32
    return %c0_i32, %c0_i32_0, %c0_i32_1 : i32, i32, i32
  }
  func.func @transform_16(%arg0: i32) -> (i32, i32, i32) {
    %c0_i32 = arith.constant 0 : i32
    %c0_i32_0 = arith.constant 0 : i32
    %c0_i32_1 = arith.constant 0 : i32
    %c0_i32_2 = arith.constant 0 : i32
    return %c0_i32, %c0_i32_0, %c0_i32_1 : i32, i32, i32
  }
  func.func @transform_17(%arg0: i32) -> (i32, i32) {
    %c0_i32 = arith.constant 0 : i32
    %c0_i32_0 = arith.constant 0 : i32
    %c0_i32_1 = arith.constant 0 : i32
    return %c0_i32, %c0_i32_0 : i32, i32
  }
  func.func @transform_18(%arg0: i32) -> (i32, i32) {
    %c0_i32 = arith.constant 0 : i32
    %c0_i32_0 = arith.constant 0 : i32
    %c0_i32_1 = arith.constant 0 : i32
    return %c0_i32, %c0_i32_0 : i32, i32
  }
  func.func @transform_19(%arg0: i32) -> (i32, i32) {
    %c0_i32 = arith.constant 0 : i32
    %c0_i32_0 = arith.constant 0 : i32
    %c0_i32_1 = arith.constant 0 : i32
    return %c0_i32, %c0_i32_0 : i32, i32
  }
  func.func @transform_20(%arg0: i32) -> (i32, i32) {
    %c0_i32 = arith.constant 0 : i32
    %c0_i32_0 = arith.constant 0 : i32
    %c0_i32_1 = arith.constant 0 : i32
    return %c0_i32, %c0_i32_0 : i32, i32
  }
  func.func @transform_21(%arg0: i32) -> (i32, i32) {
    %c0_i32 = arith.constant 0 : i32
    %c0_i32_0 = arith.constant 0 : i32
    %c0_i32_1 = arith.constant 0 : i32
    return %c0_i32, %c0_i32_0 : i32, i32
  }
}

</mosaic_0001>

<llo_original>
// kernel: vit_forward.1
$region0: #{vit_forward.1}
  #allocation0 [shape = 'u32[]', space=smem, size = 0x4, offset = 0x4, fixed_abs, tag = 'smem constant byte address 0x4 - core index']
  #allocation1 [shape = 'u32[144,128]{1,0:T(1,128)}', space=vmem, size = 0x12000, scoped, tag = 'internal scratch']
  %s0 = inlined_call_operand.vmem [shape: f32[8,192], index: 0, kind: input, shape index: {}]
  %s1 = inlined_call_operand.vmem [shape: f32[192,32], index: 1, kind: input, shape index: {}]
  %s2 = inlined_call_operand.vmem [shape: f32[1,32], index: 2, kind: input, shape index: {}]
  %s3 = inlined_call_operand.vmem [shape: f32[1,32], index: 3, kind: input, shape index: {}]
  %s4 = inlined_call_operand.vmem [shape: f32[5,32], index: 4, kind: input, shape index: {}]
  %s5 = inlined_call_operand.vmem [shape: f32[2,1,32], index: 5, kind: input, shape index: {}]
  %s6 = inlined_call_operand.vmem [shape: f32[2,1,32], index: 6, kind: input, shape index: {}]
  %s7 = inlined_call_operand.vmem [shape: f32[2,32,96], index: 7, kind: input, shape index: {}]
  %s8 = inlined_call_operand.vmem [shape: f32[2,1,96], index: 8, kind: input, shape index: {}]
  %s9 = inlined_call_operand.vmem [shape: f32[2,32,32], index: 9, kind: input, shape index: {}]
  %s10 = inlined_call_operand.vmem [shape: f32[2,1,32], index: 10, kind: input, shape index: {}]
  %s11 = inlined_call_operand.vmem [shape: f32[2,1,32], index: 11, kind: input, shape index: {}]
  %s12 = inlined_call_operand.vmem [shape: f32[2,1,32], index: 12, kind: input, shape index: {}]
  %s13 = inlined_call_operand.vmem [shape: f32[2,32,64], index: 13, kind: input, shape index: {}]
  %s14 = inlined_call_operand.vmem [shape: f32[2,1,64], index: 14, kind: input, shape index: {}]
  %s15 = inlined_call_operand.vmem [shape: f32[2,64,32], index: 15, kind: input, shape index: {}]
  %s16 = inlined_call_operand.vmem [shape: f32[2,1,32], index: 16, kind: input, shape index: {}]
  %s17 = inlined_call_operand.vmem [shape: f32[1,32], index: 17, kind: input, shape index: {}]
  %s18 = inlined_call_operand.vmem [shape: f32[1,32], index: 18, kind: input, shape index: {}]
  %s19 = inlined_call_operand.vmem [shape: f32[32,128], index: 19, kind: input, shape index: {}]
  %s20 = inlined_call_operand.vmem [shape: f32[1,128], index: 20, kind: input, shape index: {}]
  %s21 = inlined_call_operand.hbm [shape: f32[2,128], index: 21, kind: output, shape index: {}]
  %s22 = sld [smem:[#allocation0]]
  $region94: #{vit_forward.1} parent=0
    _
  %s24 = ssub.s32 1, %s22
  %s25 = scalar_select 0, %s24, %s22
  $region1: #{vit_forward.1} parent=0
    #allocation2 [shape = 'u8[1024]{0}', space=vmem, size = 0x400, scoped, tag = 'output window, operand 0, single buffered']
    #allocation3 [shape = 's32[1]{0}', space=sflag, size = 0x4, scoped, tag = 'scoped memory for vit_forward.1']
    %26 = vsyncpa [#allocation3], 0
    // Predicated region
    $region2: #{vit_forward.1} parent=1 // pred_check
      _
    $region3: #{vit_forward.1} parent=1 // pred_check_branch
      %28 = sbr.rel (0) target = $region5
    $region4: #{vit_forward.1} parent=1 // pred_region
      _
    $region5: #{vit_forward.1} parent=1 // pred_fallthru
      _
    // Predicated region
    $region6: #{vit_forward.1} parent=1 // pred_check
      _
    $region7: #{vit_forward.1} parent=1 // pred_check_branch
      %30 = sbr.rel (0) target = $region9
    $region8: #{vit_forward.1} parent=1 // pred_region
      _
    $region9: #{vit_forward.1} parent=1 // pred_fallthru
      _
    // Predicated region
    $region10: #{vit_forward.1} parent=1 // pred_check
      _
    $region11: #{vit_forward.1} parent=1 // pred_check_branch
      %32 = sbr.rel (0) target = $region13
    $region12: #{vit_forward.1} parent=1 // pred_region
      _
    $region13: #{vit_forward.1} parent=1 // pred_fallthru
      _
    // Predicated region
    $region14: #{vit_forward.1} parent=1 // pred_check
      _
    $region15: #{vit_forward.1} parent=1 // pred_check_branch
      %34 = sbr.rel (0) target = $region17
    $region16: #{vit_forward.1} parent=1 // pred_region
      _
    $region17: #{vit_forward.1} parent=1 // pred_fallthru
      _
    // Predicated region
    $region18: #{vit_forward.1} parent=1 // pred_check
      _
    $region19: #{vit_forward.1} parent=1 // pred_check_branch
      %36 = sbr.rel (0) target = $region21
    $region20: #{vit_forward.1} parent=1 // pred_region
      _
    $region21: #{vit_forward.1} parent=1 // pred_fallthru
      _
    // Predicated region
    $region22: #{vit_forward.1} parent=1 // pred_check
      _
    $region23: #{vit_forward.1} parent=1 // pred_check_branch
      %38 = sbr.rel (0) target = $region25
    $region24: #{vit_forward.1} parent=1 // pred_region
      _
    $region25: #{vit_forward.1} parent=1 // pred_fallthru
      _
    // Predicated region
    $region26: #{vit_forward.1} parent=1 // pred_check
      _
    $region27: #{vit_forward.1} parent=1 // pred_check_branch
      %40 = sbr.rel (0) target = $region29
    $region28: #{vit_forward.1} parent=1 // pred_region
      _
    $region29: #{vit_forward.1} parent=1 // pred_fallthru
      _
    // Predicated region
    $region30: #{vit_forward.1} parent=1 // pred_check
      _
    $region31: #{vit_forward.1} parent=1 // pred_check_branch
      %42 = sbr.rel (0) target = $region33
    $region32: #{vit_forward.1} parent=1 // pred_region
      _
    $region33: #{vit_forward.1} parent=1 // pred_fallthru
      _
    // Predicated region
    $region34: #{vit_forward.1} parent=1 // pred_check
      _
    $region35: #{vit_forward.1} parent=1 // pred_check_branch
      %44 = sbr.rel (0) target = $region37
    $region36: #{vit_forward.1} parent=1 // pred_region
      _
    $region37: #{vit_forward.1} parent=1 // pred_fallthru
      _
    // Predicated region
    $region38: #{vit_forward.1} parent=1 // pred_check
      _
    $region39: #{vit_forward.1} parent=1 // pred_check_branch
      %46 = sbr.rel (0) target = $region41
    $region40: #{vit_forward.1} parent=1 // pred_region
      _
    $region41: #{vit_forward.1} parent=1 // pred_fallthru
      _
    // Predicated region
    $region42: #{vit_forward.1} parent=1 // pred_check
      _
    $region43: #{vit_forward.1} parent=1 // pred_check_branch
      %48 = sbr.rel (0) target = $region45
    $region44: #{vit_forward.1} parent=1 // pred_region
      _
    $region45: #{vit_forward.1} parent=1 // pred_fallthru
      _
    // Predicated region
    $region46: #{vit_forward.1} parent=1 // pred_check
      _
    $region47: #{vit_forward.1} parent=1 // pred_check_branch
      %50 = sbr.rel (0) target = $region49
    $region48: #{vit_forward.1} parent=1 // pred_region
      _
    $region49: #{vit_forward.1} parent=1 // pred_fallthru
      _
    // Predicated region
    $region50: #{vit_forward.1} parent=1 // pred_check
      _
    $region51: #{vit_forward.1} parent=1 // pred_check_branch
      %52 = sbr.rel (0) target = $region53
    $region52: #{vit_forward.1} parent=1 // pred_region
      _
    $region53: #{vit_forward.1} parent=1 // pred_fallthru
      _
    // Predicated region
    $region54: #{vit_forward.1} parent=1 // pred_check
      _
    $region55: #{vit_forward.1} parent=1 // pred_check_branch
      %54 = sbr.rel (0) target = $region57
    $region56: #{vit_forward.1} parent=1 // pred_region
      _
    $region57: #{vit_forward.1} parent=1 // pred_fallthru
      _
    // Predicated region
    $region58: #{vit_forward.1} parent=1 // pred_check
      _
    $region59: #{vit_forward.1} parent=1 // pred_check_branch
      %56 = sbr.rel (0) target = $region61
    $region60: #{vit_forward.1} parent=1 // pred_region
      _
    $region61: #{vit_forward.1} parent=1 // pred_fallthru
      _
    // Predicated region
    $region62: #{vit_forward.1} parent=1 // pred_check
      _
    $region63: #{vit_forward.1} parent=1 // pred_check_branch
      %58 = sbr.rel (0) target = $region65
    $region64: #{vit_forward.1} parent=1 // pred_region
      _
    $region65: #{vit_forward.1} parent=1 // pred_fallthru
      _
    // Predicated region
    $region66: #{vit_forward.1} parent=1 // pred_check
      _
    $region67: #{vit_forward.1} parent=1 // pred_check_branch
      %60 = sbr.rel (0) target = $region69
    $region68: #{vit_forward.1} parent=1 // pred_region
      _
    $region69: #{vit_forward.1} parent=1 // pred_fallthru
      _
    // Predicated region
    $region70: #{vit_forward.1} parent=1 // pred_check
      _
    $region71: #{vit_forward.1} parent=1 // pred_check_branch
      %62 = sbr.rel (0) target = $region73
    $region72: #{vit_forward.1} parent=1 // pred_region
      _
    $region73: #{vit_forward.1} parent=1 // pred_fallthru
      _
    // Predicated region
    $region74: #{vit_forward.1} parent=1 // pred_check
      _
    $region75: #{vit_forward.1} parent=1 // pred_check_branch
      %64 = sbr.rel (0) target = $region77
    $region76: #{vit_forward.1} parent=1 // pred_region
      _
    $region77: #{vit_forward.1} parent=1 // pred_fallthru
      _
    // Predicated region
    $region78: #{vit_forward.1} parent=1 // pred_check
      _
    $region79: #{vit_forward.1} parent=1 // pred_check_branch
      %66 = sbr.rel (0) target = $region81
    $region80: #{vit_forward.1} parent=1 // pred_region
      _
    $region81: #{vit_forward.1} parent=1 // pred_fallthru
      _
    // Predicated region
    $region82: #{vit_forward.1} parent=1 // pred_check
      _
    $region83: #{vit_forward.1} parent=1 // pred_check_branch
      %68 = sbr.rel (0) target = $region85
    $region84: #{vit_forward.1} parent=1 // pred_region
      _
    $region85: #{vit_forward.1} parent=1 // pred_fallthru
      _
    %v69 = vld [vmem:[%s0] sm:$0xff]
    %v70 = vld [vmem:[%s0 + $0x8] sm:$0xff]
    %v71 = vld [vmem:[%s1] sm:$0xff]
    %v72 = vld [vmem:[%s1 + $0x8] sm:$0xff]
    %v73 = vld [vmem:[%s1 + $0x10] sm:$0xff]
    %v74 = vld [vmem:[%s1 + $0x18] sm:$0xff]
    %v75 = vld [vmem:[%s1 + $0x20] sm:$0xff]
    %v76 = vld [vmem:[%s1 + $0x28] sm:$0xff]
    %v77 = vld [vmem:[%s1 + $0x30] sm:$0xff]
    %v78 = vld [vmem:[%s1 + $0x38] sm:$0xff]
    %v79 = vld [vmem:[%s1 + $0x40] sm:$0xff]
    %v80 = vld [vmem:[%s1 + $0x48] sm:$0xff]
    %v81 = vld [vmem:[%s1 + $0x50] sm:$0xff]
    %v82 = vld [vmem:[%s1 + $0x58] sm:$0xff]
    %v83 = vld [vmem:[%s1 + $0x60] sm:$0xff]
    %v84 = vld [vmem:[%s1 + $0x68] sm:$0xff]
    %v85 = vld [vmem:[%s1 + $0x70] sm:$0xff]
    %v86 = vld [vmem:[%s1 + $0x78] sm:$0xff]
    %v87 = vld [vmem:[%s1 + $0x80] sm:$0xff]
    %v88 = vld [vmem:[%s1 + $0x88] sm:$0xff]
    %v89 = vld [vmem:[%s1 + $0x90] sm:$0xff]
    %v90 = vld [vmem:[%s1 + $0x98] sm:$0xff]
    %v91 = vld [vmem:[%s1 + $0xa0] sm:$0xff]
    %v92 = vld [vmem:[%s1 + $0xa8] sm:$0xff]
    %v93 = vld [vmem:[%s1 + $0xb0] sm:$0xff]
    %v94 = vld [vmem:[%s1 + $0xb8] sm:$0xff]
    %v95 = vld [vmem:[%s2] sm:$0x1]
    %v97 = vlaneseq
    %v98 = vshrl.u32 %v97, 7
    %v99 = vsub.s32 0, %v98
    %v100 = vrot.slane %v95, %v99
    %vm102 = vcmask 523264
    %v104 = vsel %vm102, %v70, 0
    %106 = vmatprep.subr.mxu0 0.0
    %107 = vmatpush1.msra.mxu0 %v71
    %108 = vmatprep.subr.mxu0 0.0
    %109 = vmatpush1.msra.mxu0 %v72
    %110 = vmatprep.subr.mxu0 0.0
    %111 = vmatpush1.msra.mxu0 %v73
    %112 = vmatprep.subr.mxu0 0.0
    %113 = vmatpush1.msra.mxu0 %v74
    %114 = vmatprep.subr.mxu0 0.0
    %115 = vmatpush1.msra.mxu0 %v75
    %116 = vmatprep.subr.mxu0 0.0
    %117 = vmatpush1.msra.mxu0 %v76
    %118 = vmatprep.subr.mxu0 0.0
    %119 = vmatpush1.msra.mxu0 %v77
    %120 = vmatprep.subr.mxu0 0.0
    %121 = vmatpush1.msra.mxu0 %v78
    %122 = vmatprep.subr.mxu0 0.0
    %123 = vmatpush1.msra.mxu0 %v79
    %124 = vmatprep.subr.mxu0 0.0
    %125 = vmatpush1.msra.mxu0 %v80
    %126 = vmatprep.subr.mxu0 0.0
    %127 = vmatpush1.msra.mxu0 %v81
    %128 = vmatprep.subr.mxu0 0.0
    %129 = vmatpush1.msra.mxu0 %v82
    %130 = vmatprep.subr.mxu0 0.0
    %131 = vmatpush1.msra.mxu0 %v83
    %132 = vmatprep.subr.mxu0 0.0
    %133 = vmatpush1.msra.mxu0 %v84
    %134 = vmatprep.subr.mxu0 0.0
    %135 = vmatpush1.msra.mxu0 %v85
    %136 = vmatprep.subr.mxu0 0.0
    %137 = vmatpush1.msra.mxu0 %v86
    %138 = vmatprep.subr.mxu0 0.0
    %139 = vmatpush1.msra.mxu0 %v87
    %140 = vmatprep.subr.mxu0 0.0
    %141 = vmatpush1.msra.mxu0 %v88
    %142 = vmatprep.subr.mxu0 0.0
    %143 = vmatpush1.msra.mxu0 %v89
    %144 = vmatprep.subr.mxu0 0.0
    %145 = vmatpush1.msra.mxu0 %v90
    %146 = vmatprep.subr.mxu0 0.0
    %147 = vmatpush1.msra.mxu0 %v91
    %148 = vmatprep.subr.mxu0 0.0
    %149 = vmatpush1.msra.mxu0 %v92
    %150 = vmatprep.subr.mxu0 0.0
    %151 = vmatpush1.msra.mxu0 %v93
    %152 = vmatprep.subr.mxu0 0.0
    %153 = vmatpush1.msra.mxu0 %v94
    %154 = vmatprep.subr.mxu0 0.0
    %155 = vmatpush1.msra.mxu0 0.0
    %156 = vmatprep.subr.mxu0 0.0
    %157 = vmatpush1.msra.mxu0 0.0
    %158 = vmatprep.subr.mxu0 0.0
    %159 = vmatpush1.msra.mxu0 0.0
    %160 = vmatprep.subr.mxu0 0.0
    %161 = vmatpush1.msra.mxu0 0.0
    %162 = vmatprep.subr.mxu0 0.0
    %163 = vmatpush1.msra.mxu0 0.0
    %164 = vmatprep.subr.mxu0 0.0
    %165 = vmatpush1.msra.mxu0 0.0
    %166 = vmatprep.subr.mxu0 0.0
    %167 = vmatpush1.msra.mxu0 0.0
    %168 = vmatprep.subr.mxu0 0.0
    %169 = vmatpush1.msra.mxu0 0.0
    %170 = vmatprep.mubr.f32.mxu0 %v104
    %171 = vmatmul.mubr.f32.gmra.mrb[0].mxu0 %v69
    %v172 = vpop.f32.mrb[0].mxu0
    %v173 = vadd.f32 %v100, %v172
    %v174 = vpop.f32.mrb[0].mxu0
    %175 = vdwg.mxu0
    %v176 = vld [vmem:[%s3] sm:$0x1]
    %v177 = vld [vmem:[%s4] sm:$0x1f]
    %v179 = vrot.slane %v173, 7
    %vm181 = vcmask 1040384
    %v182 = vsel %vm181, %v176, %v179
    %v183 = vadd.f32 %v182, %v177
    %v184 = vrot.slane %v173, 3
    %v186 = vsel %vm181, %v176, %v184
    %v187 = vadd.f32 %v186, %v177
    %v189 = vrot.slane %v187, 3
    %vm191 = vcmask 1044480
    %v192 = vsel %vm191, %v183, %v189
    %v193 = vld [vmem:[%s5] sm:$0x1]
    %v194 = vld [vmem:[%s6] sm:$0x1]
    %vm195 = vcmask 261120
    %v196 = vsel %vm195, %v192, 0.0
    %197 = vadd.xlane.f32.xlu0 %v196
    %v198 = vpop.xlane.xlu0 %197
    %vm199 = vcmask 254976
    %v200 = vsel %vm199, %v189, 0.0
    %201 = vadd.xlane.f32.xlu0 %v200
    %v202 = vpop.xlane.xlu0 %201
    %v203 = vrcp.pop 32.0
    %v204 = vmul.f32 %v198, %v203
    %v205 = vmul.f32 %v202, %v203
    %v206 = vsub.f32 %v192, %v204
    %v207 = vsub.f32 %v189, %v205
    %v208 = vmul.f32 %v206, %v206
    %v209 = vmul.f32 %v207, %v207
    %v210 = vsel %vm195, %v208, 0.0
    %211 = vadd.xlane.f32.xlu0 %v210
    %v212 = vpop.xlane.xlu0 %211
    %v213 = vsel %vm199, %v209, 0.0
    %214 = vadd.xlane.f32.xlu0 %v213
    %v215 = vpop.xlane.xlu0 %214
    %v216 = vmul.f32 %v212, %v203
    %v217 = vmul.f32 %v215, %v203
    %v218 = vadd.f32 %v216, 1e-06
    %v219 = vadd.f32 %v217, 1e-06
    %v220 = vrsqrt.pop %v218
    %v221 = vrsqrt.pop %v219
    %v222 = vmul.f32 %v206, %v220
    %v223 = vmul.f32 %v207, %v221
    %v225 = vlaneseq
    %v226 = vshrl.u32 %v225, 7
    %v227 = vsub.s32 0, %v226
    %v228 = vrot.slane %v193, %v227
    %v230 = vmul.f32 %v222, %v228
    %v231 = vmul.f32 %v223, %v228
    %v233 = vlaneseq
    %v234 = vshrl.u32 %v233, 7
    %v235 = vsub.s32 0, %v234
    %v236 = vrot.slane %v194, %v235
    %v238 = vadd.f32 %v230, %v236
    %v239 = vadd.f32 %v231, %v236
    %v240 = vld [vmem:[%s7] sm:$0xff]
    %v241 = vld [vmem:[%s7 + $0x8] sm:$0xff]
    %v242 = vld [vmem:[%s7 + $0x10] sm:$0xff]
    %v243 = vld [vmem:[%s7 + $0x18] sm:$0xff]
    %v244 = vld [vmem:[%s8] sm:$0x1]
    %v246 = vlaneseq
    %v247 = vshrl.u32 %v246, 7
    %v248 = vsub.s32 0, %v247
    %v249 = vrot.slane %v244, %v248
    %v252 = vsel %vm195, %v238, 0
    %v255 = vsel %vm195, %v239, 0
    %257 = vmatprep.subr.mxu0 0.0
    %258 = vmatpush1.msra.mxu0 %v240
    %259 = vmatprep.subr.mxu0 0.0
    %260 = vmatpush1.msra.mxu0 %v241
    %261 = vmatprep.subr.mxu0 0.0
    %262 = vmatpush1.msra.mxu0 %v242
    %263 = vmatprep.subr.mxu0 0.0
    %264 = vmatpush1.msra.mxu0 %v243
    %265 = vmatprep.subr.mxu0 0.0
    %266 = vmatpush1.msra.mxu0 0.0
    %267 = vmatprep.subr.mxu0 0.0
    %268 = vmatpush1.msra.mxu0 0.0
    %269 = vmatprep.subr.mxu0 0.0
    %270 = vmatpush1.msra.mxu0 0.0
    %271 = vmatprep.subr.mxu0 0.0
    %272 = vmatpush1.msra.mxu0 0.0
    %273 = vmatprep.subr.mxu0 0.0
    %274 = vmatpush1.msra.mxu0 0.0
    %275 = vmatprep.subr.mxu0 0.0
    %276 = vmatpush1.msra.mxu0 0.0
    %277 = vmatprep.subr.mxu0 0.0
    %278 = vmatpush1.msra.mxu0 0.0
    %279 = vmatprep.subr.mxu0 0.0
    %280 = vmatpush1.msra.mxu0 0.0
    %281 = vmatprep.subr.mxu0 0.0
    %282 = vmatpush1.msra.mxu0 0.0
    %283 = vmatprep.subr.mxu0 0.0
    %284 = vmatpush1.msra.mxu0 0.0
    %285 = vmatprep.subr.mxu0 0.0
    %286 = vmatpush1.msra.mxu0 0.0
    %287 = vmatprep.subr.mxu0 0.0
    %288 = vmatpush1.msra.mxu0 0.0
    %289 = vmatprep.subr.mxu0 0.0
    %290 = vmatpush1.msra.mxu0 0.0
    %291 = vmatprep.subr.mxu0 0.0
    %292 = vmatpush1.msra.mxu0 0.0
    %293 = vmatprep.subr.mxu0 0.0
    %294 = vmatpush1.msra.mxu0 0.0
    %295 = vmatprep.subr.mxu0 0.0
    %296 = vmatpush1.msra.mxu0 0.0
    %297 = vmatprep.subr.mxu0 0.0
    %298 = vmatpush1.msra.mxu0 0.0
    %299 = vmatprep.subr.mxu0 0.0
    %300 = vmatpush1.msra.mxu0 0.0
    %301 = vmatprep.subr.mxu0 0.0
    %302 = vmatpush1.msra.mxu0 0.0
    %303 = vmatprep.subr.mxu0 0.0
    %304 = vmatpush1.msra.mxu0 0.0
    %305 = vmatprep.subr.mxu0 0.0
    %306 = vmatpush1.msra.mxu0 0.0
    %307 = vmatprep.subr.mxu0 0.0
    %308 = vmatpush1.msra.mxu0 0.0
    %309 = vmatprep.subr.mxu0 0.0
    %310 = vmatpush1.msra.mxu0 0.0
    %311 = vmatprep.subr.mxu0 0.0
    %312 = vmatpush1.msra.mxu0 0.0
    %313 = vmatprep.subr.mxu0 0.0
    %314 = vmatpush1.msra.mxu0 0.0
    %315 = vmatprep.subr.mxu0 0.0
    %316 = vmatpush1.msra.mxu0 0.0
    %317 = vmatprep.subr.mxu0 0.0
    %318 = vmatpush1.msra.mxu0 0.0
    %319 = vmatprep.subr.mxu0 0.0
    %320 = vmatpush1.msra.mxu0 0.0
    %321 = vmatprep.mubr.f32.mxu0 0.0
    %322 = vmatmul.mubr.f32.gmra.mrb[0].mxu0 %v252
    %v323 = vpop.f32.mrb[0].mxu0
    %v324 = vadd.f32 %v249, %v323
    %v325 = vpop.f32.mrb[0].mxu0
    %326 = vmatprep.mubr.f32.mxu0 0.0
    %327 = vmatmul.mubr.f32.gmra.mrb[0].mxu0 %v255
    %v328 = vpop.f32.mrb[0].mxu0
    %v329 = vadd.f32 %v249, %v328
    %v330 = vpop.f32.mrb[0].mxu0
    %331 = vdwg.mxu0
    %333 = vrot.lane.b32.xlu0 %v324, 96
    %v334 = vpop.permute.xlu0 %333
    %vm335 = vcmask 64512
    %v336 = vsel %vm335, %v324, 0
    %v338 = vsel %vm335, %v334, 0
    %340 = vmatprep.subr.mxu0 0.0
    %341 = vmatpush1.xpose.msra.mxu0 %v338
    %342 = vmatprep.subr.mxu0 0.0
    %343 = vmatpush1.xpose.msra.mxu0 0.0
    %344 = vmatprep.subr.mxu0 0.0
    %345 = vmatpush1.xpose.msra.mxu0 0.0
    %346 = vmatprep.subr.mxu0 0.0
    %347 = vmatpush1.xpose.msra.mxu0 0.0
    %348 = vmatprep.subr.mxu0 0.0
    %349 = vmatpush1.xpose.msra.mxu0 0.0
    %350 = vmatprep.subr.mxu0 0.0
    %351 = vmatpush1.xpose.msra.mxu0 0.0
    %352 = vmatprep.subr.mxu0 0.0
    %353 = vmatpush1.xpose.msra.mxu0 0.0
    %354 = vmatprep.subr.mxu0 0.0
    %355 = vmatpush1.xpose.msra.mxu0 0.0
    %356 = vmatprep.subr.mxu0 0.0
    %357 = vmatpush1.xpose.msra.mxu0 0.0
    %358 = vmatprep.subr.mxu0 0.0
    %359 = vmatpush1.xpose.msra.mxu0 0.0
    %360 = vmatprep.subr.mxu0 0.0
    %361 = vmatpush1.xpose.msra.mxu0 0.0
    %362 = vmatprep.subr.mxu0 0.0
    %363 = vmatpush1.xpose.msra.mxu0 0.0
    %364 = vmatprep.subr.mxu0 0.0
    %365 = vmatpush1.xpose.msra.mxu0 0.0
    %366 = vmatprep.subr.mxu0 0.0
    %367 = vmatpush1.xpose.msra.mxu0 0.0
    %368 = vmatprep.subr.mxu0 0.0
    %369 = vmatpush1.xpose.msra.mxu0 0.0
    %370 = vmatprep.subr.mxu0 0.0
    %371 = vmatpush1.xpose.msra.mxu0 0.0
    %372 = vmatprep.subr.mxu0 0.0
    %373 = vmatpush1.xpose.msra.mxu0 0.0
    %374 = vmatprep.subr.mxu0 0.0
    %375 = vmatpush1.xpose.msra.mxu0 0.0
    %376 = vmatprep.subr.mxu0 0.0
    %377 = vmatpush1.xpose.msra.mxu0 0.0
    %378 = vmatprep.subr.mxu0 0.0
    %379 = vmatpush1.xpose.msra.mxu0 0.0
    %380 = vmatprep.subr.mxu0 0.0
    %381 = vmatpush1.xpose.msra.mxu0 0.0
    %382 = vmatprep.subr.mxu0 0.0
    %383 = vmatpush1.xpose.msra.mxu0 0.0
    %384 = vmatprep.subr.mxu0 0.0
    %385 = vmatpush1.xpose.msra.mxu0 0.0
    %386 = vmatprep.subr.mxu0 0.0
    %387 = vmatpush1.xpose.msra.mxu0 0.0
    %388 = vmatprep.subr.mxu0 0.0
    %389 = vmatpush1.xpose.msra.mxu0 0.0
    %390 = vmatprep.subr.mxu0 0.0
    %391 = vmatpush1.xpose.msra.mxu0 0.0
    %392 = vmatprep.subr.mxu0 0.0
    %393 = vmatpush1.xpose.msra.mxu0 0.0
    %394 = vmatprep.subr.mxu0 0.0
    %395 = vmatpush1.xpose.msra.mxu0 0.0
    %396 = vmatprep.subr.mxu0 0.0
    %397 = vmatpush1.xpose.msra.mxu0 0.0
    %398 = vmatprep.subr.mxu0 0.0
    %399 = vmatpush1.xpose.msra.mxu0 0.0
    %400 = vmatprep.subr.mxu0 0.0
    %401 = vmatpush1.xpose.msra.mxu0 0.0
    %402 = vmatprep.subr.mxu0 0.0
    %403 = vmatpush1.xpose.msra.mxu0 0.0
    %404 = vmatprep.mubr.f32.mxu0 0.0
    %405 = vmatmul.mubr.f32.gmra.mrb[0].mxu0 %v336
    %v406 = vpop.f32.mrb[0].mxu0
    %v407 = vadd.f32 0.0, %v406
    %v408 = vpop.f32.mrb[0].mxu0
    %409 = vdwg.mxu0
    %v410 = vmul.f32 %v407, 0.35355338
    %vm411 = vcmask 36864
    %v412 = vsel %vm411, %v410, -inf
    %413 = vmax.xlane.f32.xlu0 %v412
    %v414 = vpop.xlane.xlu0 %413
    %v415 = vsub.f32 %v410, %v414
    %v416 = vmul.f32 %v415, 1.442695
    %v417 = vpow.pop %v416
    %v418 = vsel %vm411, %v417, 0.0
    %419 = vadd.xlane.f32.xlu0 %v418
    %v420 = vpop.xlane.xlu0 %419
    %v421 = vrcp.pop %v420
    %v422 = vmul.f32 %v417, %v421
    %423 = vrot.lane.b32.xlu0 %v324, 64
    %v424 = vpop.permute.xlu0 %423
    %vm425 = vcmask 39936
    %v427 = vsel %vm425, %v422, 0
    %v429 = vsel %vm191, %v424, 0
    %431 = vmatprep.subr.mxu0 0.0
    %432 = vmatpush1.msra.mxu0 %v429
    %433 = vmatprep.subr.mxu0 0.0
    %434 = vmatpush1.msra.mxu0 0.0
    %435 = vmatprep.subr.mxu0 0.0
    %436 = vmatpush1.msra.mxu0 0.0
    %437 = vmatprep.subr.mxu0 0.0
    %438 = vmatpush1.msra.mxu0 0.0
    %439 = vmatprep.subr.mxu0 0.0
    %440 = vmatpush1.msra.mxu0 0.0
    %441 = vmatprep.subr.mxu0 0.0
    %442 = vmatpush1.msra.mxu0 0.0
    %443 = vmatprep.subr.mxu0 0.0
    %444 = vmatpush1.msra.mxu0 0.0
    %445 = vmatprep.subr.mxu0 0.0
    %446 = vmatpush1.msra.mxu0 0.0
    %447 = vmatprep.subr.mxu0 0.0
    %448 = vmatpush1.msra.mxu0 0.0
    %449 = vmatprep.subr.mxu0 0.0
    %450 = vmatpush1.msra.mxu0 0.0
    %451 = vmatprep.subr.mxu0 0.0
    %452 = vmatpush1.msra.mxu0 0.0
    %453 = vmatprep.subr.mxu0 0.0
    %454 = vmatpush1.msra.mxu0 0.0
    %455 = vmatprep.subr.mxu0 0.0
    %456 = vmatpush1.msra.mxu0 0.0
    %457 = vmatprep.subr.mxu0 0.0
    %458 = vmatpush1.msra.mxu0 0.0
    %459 = vmatprep.subr.mxu0 0.0
    %460 = vmatpush1.msra.mxu0 0.0
    %461 = vmatprep.subr.mxu0 0.0
    %462 = vmatpush1.msra.mxu0 0.0
    %463 = vmatprep.subr.mxu0 0.0
    %464 = vmatpush1.msra.mxu0 0.0
    %465 = vmatprep.subr.mxu0 0.0
    %466 = vmatpush1.msra.mxu0 0.0
    %467 = vmatprep.subr.mxu0 0.0
    %468 = vmatpush1.msra.mxu0 0.0
    %469 = vmatprep.subr.mxu0 0.0
    %470 = vmatpush1.msra.mxu0 0.0
    %471 = vmatprep.subr.mxu0 0.0
    %472 = vmatpush1.msra.mxu0 0.0
    %473 = vmatprep.subr.mxu0 0.0
    %474 = vmatpush1.msra.mxu0 0.0
    %475 = vmatprep.subr.mxu0 0.0
    %476 = vmatpush1.msra.mxu0 0.0
    %477 = vmatprep.subr.mxu0 0.0
    %478 = vmatpush1.msra.mxu0 0.0
    %479 = vmatprep.subr.mxu0 0.0
    %480 = vmatpush1.msra.mxu0 0.0
    %481 = vmatprep.subr.mxu0 0.0
    %482 = vmatpush1.msra.mxu0 0.0
    %483 = vmatprep.subr.mxu0 0.0
    %484 = vmatpush1.msra.mxu0 0.0
    %485 = vmatprep.subr.mxu0 0.0
    %486 = vmatpush1.msra.mxu0 0.0
    %487 = vmatprep.subr.mxu0 0.0
    %488 = vmatpush1.msra.mxu0 0.0
    %489 = vmatprep.subr.mxu0 0.0
    %490 = vmatpush1.msra.mxu0 0.0
    %491 = vmatprep.subr.mxu0 0.0
    %492 = vmatpush1.msra.mxu0 0.0
    %493 = vmatprep.subr.mxu0 0.0
    %494 = vmatpush1.msra.mxu0 0.0
    %495 = vmatprep.mubr.f32.mxu0 0.0
    %496 = vmatmul.mubr.f32.gmra.mrb[0].mxu0 %v427
    %v497 = vpop.f32.mrb[0].mxu0
    %v498 = vadd.f32 0.0, %v497
    %v499 = vpop.f32.mrb[0].mxu0
    %500 = vdwg.mxu0
    %501 = vrot.lane.b32.xlu0 %v324, 120
    %v502 = vpop.permute.xlu0 %501
    %503 = vrot.lane.b32.xlu0 %v324, 88
    %v504 = vpop.permute.xlu0 %503
    %v505 = vsel %vm335, %v502, 0
    %v507 = vsel %vm335, %v504, 0
    %509 = vmatprep.subr.mxu0 0.0
    %510 = vmatpush1.xpose.msra.mxu0 %v507
    %511 = vmatprep.subr.mxu0 0.0
    %512 = vmatpush1.xpose.msra.mxu0 0.0
    %513 = vmatprep.subr.mxu0 0.0
    %514 = vmatpush1.xpose.msra.mxu0 0.0
    %515 = vmatprep.subr.mxu0 0.0
    %516 = vmatpush1.xpose.msra.mxu0 0.0
    %517 = vmatprep.subr.mxu0 0.0
    %518 = vmatpush1.xpose.msra.mxu0 0.0
    %519 = vmatprep.subr.mxu0 0.0
    %520 = vmatpush1.xpose.msra.mxu0 0.0
    %521 = vmatprep.subr.mxu0 0.0
    %522 = vmatpush1.xpose.msra.mxu0 0.0
    %523 = vmatprep.subr.mxu0 0.0
    %524 = vmatpush1.xpose.msra.mxu0 0.0
    %525 = vmatprep.subr.mxu0 0.0
    %526 = vmatpush1.xpose.msra.mxu0 0.0
    %527 = vmatprep.subr.mxu0 0.0
    %528 = vmatpush1.xpose.msra.mxu0 0.0
    %529 = vmatprep.subr.mxu0 0.0
    %530 = vmatpush1.xpose.msra.mxu0 0.0
    %531 = vmatprep.subr.mxu0 0.0
    %532 = vmatpush1.xpose.msra.mxu0 0.0
    %533 = vmatprep.subr.mxu0 0.0
    %534 = vmatpush1.xpose.msra.mxu0 0.0
    %535 = vmatprep.subr.mxu0 0.0
    %536 = vmatpush1.xpose.msra.mxu0 0.0
    %537 = vmatprep.subr.mxu0 0.0
    %538 = vmatpush1.xpose.msra.mxu0 0.0
    %539 = vmatprep.subr.mxu0 0.0
    %540 = vmatpush1.xpose.msra.mxu0 0.0
    %541 = vmatprep.subr.mxu0 0.0
    %542 = vmatpush1.xpose.msra.mxu0 0.0
    %543 = vmatprep.subr.mxu0 0.0
    %544 = vmatpush1.xpose.msra.mxu0 0.0
    %545 = vmatprep.subr.mxu0 0.0
    %546 = vmatpush1.xpose.msra.mxu0 0.0
    %547 = vmatprep.subr.mxu0 0.0
    %548 = vmatpush1.xpose.msra.mxu0 0.0
    %549 = vmatprep.subr.mxu0 0.0
    %550 = vmatpush1.xpose.msra.mxu0 0.0
    %551 = vmatprep.subr.mxu0 0.0
    %552 = vmatpush1.xpose.msra.mxu0 0.0
    %553 = vmatprep.subr.mxu0 0.0
    %554 = vmatpush1.xpose.msra.mxu0 0.0
    %555 = vmatprep.subr.mxu0 0.0
    %556 = vmatpush1.xpose.msra.mxu0 0.0
    %557 = vmatprep.subr.mxu0 0.0
    %558 = vmatpush1.xpose.msra.mxu0 0.0
    %559 = vmatprep.subr.mxu0 0.0
    %560 = vmatpush1.xpose.msra.mxu0 0.0
    %561 = vmatprep.subr.mxu0 0.0
    %562 = vmatpush1.xpose.msra.mxu0 0.0
    %563 = vmatprep.subr.mxu0 0.0
    %564 = vmatpush1.xpose.msra.mxu0 0.0
    %565 = vmatprep.subr.mxu0 0.0
    %566 = vmatpush1.xpose.msra.mxu0 0.0
    %567 = vmatprep.subr.mxu0 0.0
    %568 = vmatpush1.xpose.msra.mxu0 0.0
    %569 = vmatprep.subr.mxu0 0.0
    %570 = vmatpush1.xpose.msra.mxu0 0.0
    %571 = vmatprep.subr.mxu0 0.0
    %572 = vmatpush1.xpose.msra.mxu0 0.0
    %573 = vmatprep.mubr.f32.mxu0 0.0
    %574 = vmatmul.mubr.f32.gmra.mrb[0].mxu0 %v505
    %v575 = vpop.f32.mrb[0].mxu0
    %v576 = vadd.f32 0.0, %v575
    %v577 = vpop.f32.mrb[0].mxu0
    %578 = vdwg.mxu0
    %v579 = vmul.f32 %v576, 0.35355338
    %v580 = vsel %vm411, %v579, -inf
    %581 = vmax.xlane.f32.xlu0 %v580
    %v582 = vpop.xlane.xlu0 %581
    %v583 = vsub.f32 %v579, %v582
    %v584 = vmul.f32 %v583, 1.442695
    %v585 = vpow.pop %v584
    %v586 = vsel %vm411, %v585, 0.0
    %587 = vadd.xlane.f32.xlu0 %v586
    %v588 = vpop.xlane.xlu0 %587
    %v589 = vrcp.pop %v588
    %v590 = vmul.f32 %v585, %v589
    %591 = vrot.lane.b32.xlu0 %v324, 56
    %v592 = vpop.permute.xlu0 %591
    %v594 = vsel %vm425, %v590, 0
    %v596 = vsel %vm191, %v592, 0
    %598 = vmatprep.subr.mxu0 0.0
    %599 = vmatpush1.msra.mxu0 %v596
    %600 = vmatprep.subr.mxu0 0.0
    %601 = vmatpush1.msra.mxu0 0.0
    %602 = vmatprep.subr.mxu0 0.0
    %603 = vmatpush1.msra.mxu0 0.0
    %604 = vmatprep.subr.mxu0 0.0
    %605 = vmatpush1.msra.mxu0 0.0
    %606 = vmatprep.subr.mxu0 0.0
    %607 = vmatpush1.msra.mxu0 0.0
    %608 = vmatprep.subr.mxu0 0.0
    %609 = vmatpush1.msra.mxu0 0.0
    %610 = vmatprep.subr.mxu0 0.0
    %611 = vmatpush1.msra.mxu0 0.0
    %612 = vmatprep.subr.mxu0 0.0
    %613 = vmatpush1.msra.mxu0 0.0
    %614 = vmatprep.subr.mxu0 0.0
    %615 = vmatpush1.msra.mxu0 0.0
    %616 = vmatprep.subr.mxu0 0.0
    %617 = vmatpush1.msra.mxu0 0.0
    %618 = vmatprep.subr.mxu0 0.0
    %619 = vmatpush1.msra.mxu0 0.0
    %620 = vmatprep.subr.mxu0 0.0
    %621 = vmatpush1.msra.mxu0 0.0
    %622 = vmatprep.subr.mxu0 0.0
    %623 = vmatpush1.msra.mxu0 0.0
    %624 = vmatprep.subr.mxu0 0.0
    %625 = vmatpush1.msra.mxu0 0.0
    %626 = vmatprep.subr.mxu0 0.0
    %627 = vmatpush1.msra.mxu0 0.0
    %628 = vmatprep.subr.mxu0 0.0
    %629 = vmatpush1.msra.mxu0 0.0
    %630 = vmatprep.subr.mxu0 0.0
    %631 = vmatpush1.msra.mxu0 0.0
    %632 = vmatprep.subr.mxu0 0.0
    %633 = vmatpush1.msra.mxu0 0.0
    %634 = vmatprep.subr.mxu0 0.0
    %635 = vmatpush1.msra.mxu0 0.0
    %636 = vmatprep.subr.mxu0 0.0
    %637 = vmatpush1.msra.mxu0 0.0
    %638 = vmatprep.subr.mxu0 0.0
    %639 = vmatpush1.msra.mxu0 0.0
    %640 = vmatprep.subr.mxu0 0.0
    %641 = vmatpush1.msra.mxu0 0.0
    %642 = vmatprep.subr.mxu0 0.0
    %643 = vmatpush1.msra.mxu0 0.0
    %644 = vmatprep.subr.mxu0 0.0
    %645 = vmatpush1.msra.mxu0 0.0
    %646 = vmatprep.subr.mxu0 0.0
    %647 = vmatpush1.msra.mxu0 0.0
    %648 = vmatprep.subr.mxu0 0.0
    %649 = vmatpush1.msra.mxu0 0.0
    %650 = vmatprep.subr.mxu0 0.0
    %651 = vmatpush1.msra.mxu0 0.0
    %652 = vmatprep.subr.mxu0 0.0
    %653 = vmatpush1.msra.mxu0 0.0
    %654 = vmatprep.subr.mxu0 0.0
    %655 = vmatpush1.msra.mxu0 0.0
    %656 = vmatprep.subr.mxu0 0.0
    %657 = vmatpush1.msra.mxu0 0.0
    %658 = vmatprep.subr.mxu0 0.0
    %659 = vmatpush1.msra.mxu0 0.0
    %660 = vmatprep.subr.mxu0 0.0
    %661 = vmatpush1.msra.mxu0 0.0
    %662 = vmatprep.mubr.f32.mxu0 0.0
    %663 = vmatmul.mubr.f32.gmra.mrb[0].mxu0 %v594
    %v664 = vpop.f32.mrb[0].mxu0
    %v665 = vadd.f32 0.0, %v664
    %v666 = vpop.f32.mrb[0].mxu0
    %667 = vdwg.mxu0
    %668 = vrot.lane.b32.xlu0 %v324, 112
    %v669 = vpop.permute.xlu0 %668
    %670 = vrot.lane.b32.xlu0 %v324, 80
    %v671 = vpop.permute.xlu0 %670
    %v672 = vsel %vm335, %v669, 0
    %v674 = vsel %vm335, %v671, 0
    %676 = vmatprep.subr.mxu0 0.0
    %677 = vmatpush1.xpose.msra.mxu0 %v674
    %678 = vmatprep.subr.mxu0 0.0
    %679 = vmatpush1.xpose.msra.mxu0 0.0
    %680 = vmatprep.subr.mxu0 0.0
    %681 = vmatpush1.xpose.msra.mxu0 0.0
    %682 = vmatprep.subr.mxu0 0.0
    %683 = vmatpush1.xpose.msra.mxu0 0.0
    %684 = vmatprep.subr.mxu0 0.0
    %685 = vmatpush1.xpose.msra.mxu0 0.0
    %686 = vmatprep.subr.mxu0 0.0
    %687 = vmatpush1.xpose.msra.mxu0 0.0
    %688 = vmatprep.subr.mxu0 0.0
    %689 = vmatpush1.xpose.msra.mxu0 0.0
    %690 = vmatprep.subr.mxu0 0.0
    %691 = vmatpush1.xpose.msra.mxu0 0.0
    %692 = vmatprep.subr.mxu0 0.0
    %693 = vmatpush1.xpose.msra.mxu0 0.0
    %694 = vmatprep.subr.mxu0 0.0
    %695 = vmatpush1.xpose.msra.mxu0 0.0
    %696 = vmatprep.subr.mxu0 0.0
    %697 = vmatpush1.xpose.msra.mxu0 0.0
    %698 = vmatprep.subr.mxu0 0.0
    %699 = vmatpush1.xpose.msra.mxu0 0.0
    %700 = vmatprep.subr.mxu0 0.0
    %701 = vmatpush1.xpose.msra.mxu0 0.0
    %702 = vmatprep.subr.mxu0 0.0
    %703 = vmatpush1.xpose.msra.mxu0 0.0
    %704 = vmatprep.subr.mxu0 0.0
    %705 = vmatpush1.xpose.msra.mxu0 0.0
    %706 = vmatprep.subr.mxu0 0.0
    %707 = vmatpush1.xpose.msra.mxu0 0.0
    %708 = vmatprep.subr.mxu0 0.0
    %709 = vmatpush1.xpose.msra.mxu0 0.0
    %710 = vmatprep.subr.mxu0 0.0
    %711 = vmatpush1.xpose.msra.mxu0 0.0
    %712 = vmatprep.subr.mxu0 0.0
    %713 = vmatpush1.xpose.msra.mxu0 0.0
    %714 = vmatprep.subr.mxu0 0.0
    %715 = vmatpush1.xpose.msra.mxu0 0.0
    %716 = vmatprep.subr.mxu0 0.0
    %717 = vmatpush1.xpose.msra.mxu0 0.0
    %718 = vmatprep.subr.mxu0 0.0
    %719 = vmatpush1.xpose.msra.mxu0 0.0
    %720 = vmatprep.subr.mxu0 0.0
    %721 = vmatpush1.xpose.msra.mxu0 0.0
    %722 = vmatprep.subr.mxu0 0.0
    %723 = vmatpush1.xpose.msra.mxu0 0.0
    %724 = vmatprep.subr.mxu0 0.0
    %725 = vmatpush1.xpose.msra.mxu0 0.0
    %726 = vmatprep.subr.mxu0 0.0
    %727 = vmatpush1.xpose.msra.mxu0 0.0
    %728 = vmatprep.subr.mxu0 0.0
    %729 = vmatpush1.xpose.msra.mxu0 0.0
    %730 = vmatprep.subr.mxu0 0.0
    %731 = vmatpush1.xpose.msra.mxu0 0.0
    %732 = vmatprep.subr.mxu0 0.0
    %733 = vmatpush1.xpose.msra.mxu0 0.0
    %734 = vmatprep.subr.mxu0 0.0
    %735 = vmatpush1.xpose.msra.mxu0 0.0
    %736 = vmatprep.subr.mxu0 0.0
    %737 = vmatpush1.xpose.msra.mxu0 0.0
    %738 = vmatprep.subr.mxu0 0.0
    %739 = vmatpush1.xpose.msra.mxu0 0.0
    %740 = vmatprep.mubr.f32.mxu0 0.0
    %741 = vmatmul.mubr.f32.gmra.mrb[0].mxu0 %v672
    %v742 = vpop.f32.mrb[0].mxu0
    %v743 = vadd.f32 0.0, %v742
    %v744 = vpop.f32.mrb[0].mxu0
    %745 = vdwg.mxu0
    %v746 = vmul.f32 %v743, 0.35355338
    %v747 = vsel %vm411, %v746, -inf
    %748 = vmax.xlane.f32.xlu0 %v747
    %v749 = vpop.xlane.xlu0 %748
    %v750 = vsub.f32 %v746, %v749
    %v751 = vmul.f32 %v750, 1.442695
    %v752 = vpow.pop %v751
    %v753 = vsel %vm411, %v752, 0.0
    %754 = vadd.xlane.f32.xlu0 %v753
    %v755 = vpop.xlane.xlu0 %754
    %v756 = vrcp.pop %v755
    %v757 = vmul.f32 %v752, %v756
    %758 = vrot.lane.b32.xlu0 %v324, 48
    %v759 = vpop.permute.xlu0 %758
    %v761 = vsel %vm425, %v757, 0
    %v763 = vsel %vm191, %v759, 0
    %765 = vmatprep.subr.mxu0 0.0
    %766 = vmatpush1.msra.mxu0 %v763
    %767 = vmatprep.subr.mxu0 0.0
    %768 = vmatpush1.msra.mxu0 0.0
    %769 = vmatprep.subr.mxu0 0.0
    %770 = vmatpush1.msra.mxu0 0.0
    %771 = vmatprep.subr.mxu0 0.0
    %772 = vmatpush1.msra.mxu0 0.0
    %773 = vmatprep.subr.mxu0 0.0
    %774 = vmatpush1.msra.mxu0 0.0
    %775 = vmatprep.subr.mxu0 0.0
    %776 = vmatpush1.msra.mxu0 0.0
    %777 = vmatprep.subr.mxu0 0.0
    %778 = vmatpush1.msra.mxu0 0.0
    %779 = vmatprep.subr.mxu0 0.0
    %780 = vmatpush1.msra.mxu0 0.0
    %781 = vmatprep.subr.mxu0 0.0
    %782 = vmatpush1.msra.mxu0 0.0
    %783 = vmatprep.subr.mxu0 0.0
    %784 = vmatpush1.msra.mxu0 0.0
    %785 = vmatprep.subr.mxu0 0.0
    %786 = vmatpush1.msra.mxu0 0.0
    %787 = vmatprep.subr.mxu0 0.0
    %788 = vmatpush1.msra.mxu0 0.0
    %789 = vmatprep.subr.mxu0 0.0
    %790 = vmatpush1.msra.mxu0 0.0
    %791 = vmatprep.subr.mxu0 0.0
    %792 = vmatpush1.msra.mxu0 0.0
    %793 = vmatprep.subr.mxu0 0.0
    %794 = vmatpush1.msra.mxu0 0.0
    %795 = vmatprep.subr.mxu0 0.0
    %796 = vmatpush1.msra.mxu0 0.0
    %797 = vmatprep.subr.mxu0 0.0
    %798 = vmatpush1.msra.mxu0 0.0
    %799 = vmatprep.subr.mxu0 0.0
    %800 = vmatpush1.msra.mxu0 0.0
    %801 = vmatprep.subr.mxu0 0.0
    %802 = vmatpush1.msra.mxu0 0.0
    %803 = vmatprep.subr.mxu0 0.0
    %804 = vmatpush1.msra.mxu0 0.0
    %805 = vmatprep.subr.mxu0 0.0
    %806 = vmatpush1.msra.mxu0 0.0
    %807 = vmatprep.subr.mxu0 0.0
    %808 = vmatpush1.msra.mxu0 0.0
    %809 = vmatprep.subr.mxu0 0.0
    %810 = vmatpush1.msra.mxu0 0.0
    %811 = vmatprep.subr.mxu0 0.0
    %812 = vmatpush1.msra.mxu0 0.0
    %813 = vmatprep.subr.mxu0 0.0
    %814 = vmatpush1.msra.mxu0 0.0
    %815 = vmatprep.subr.mxu0 0.0
    %816 = vmatpush1.msra.mxu0 0.0
    %817 = vmatprep.subr.mxu0 0.0
    %818 = vmatpush1.msra.mxu0 0.0
    %819 = vmatprep.subr.mxu0 0.0
    %820 = vmatpush1.msra.mxu0 0.0
    %821 = vmatprep.subr.mxu0 0.0
    %822 = vmatpush1.msra.mxu0 0.0
    %823 = vmatprep.subr.mxu0 0.0
    %824 = vmatpush1.msra.mxu0 0.0
    %825 = vmatprep.subr.mxu0 0.0
    %826 = vmatpush1.msra.mxu0 0.0
    %827 = vmatprep.subr.mxu0 0.0
    %828 = vmatpush1.msra.mxu0 0.0
    %829 = vmatprep.mubr.f32.mxu0 0.0
    %830 = vmatmul.mubr.f32.gmra.mrb[0].mxu0 %v761
    %v831 = vpop.f32.mrb[0].mxu0
    %v832 = vadd.f32 0.0, %v831
    %v833 = vpop.f32.mrb[0].mxu0
    %834 = vdwg.mxu0
    %835 = vrot.lane.b32.xlu0 %v324, 104
    %v836 = vpop.permute.xlu0 %835
    %837 = vrot.lane.b32.xlu0 %v324, 72
    %v838 = vpop.permute.xlu0 %837
    %v839 = vsel %vm335, %v836, 0
    %v841 = vsel %vm335, %v838, 0
    %843 = vmatprep.subr.mxu0 0.0
    %844 = vmatpush1.xpose.msra.mxu0 %v841
    %845 = vmatprep.subr.mxu0 0.0
    %846 = vmatpush1.xpose.msra.mxu0 0.0
    %847 = vmatprep.subr.mxu0 0.0
    %848 = vmatpush1.xpose.msra.mxu0 0.0
    %849 = vmatprep.subr.mxu0 0.0
    %850 = vmatpush1.xpose.msra.mxu0 0.0
    %851 = vmatprep.subr.mxu0 0.0
    %852 = vmatpush1.xpose.msra.mxu0 0.0
    %853 = vmatprep.subr.mxu0 0.0
    %854 = vmatpush1.xpose.msra.mxu0 0.0
    %855 = vmatprep.subr.mxu0 0.0
    %856 = vmatpush1.xpose.msra.mxu0 0.0
    %857 = vmatprep.subr.mxu0 0.0
    %858 = vmatpush1.xpose.msra.mxu0 0.0
    %859 = vmatprep.subr.mxu0 0.0
    %860 = vmatpush1.xpose.msra.mxu0 0.0
    %861 = vmatprep.subr.mxu0 0.0
    %862 = vmatpush1.xpose.msra.mxu0 0.0
    %863 = vmatprep.subr.mxu0 0.0
    %864 = vmatpush1.xpose.msra.mxu0 0.0
    %865 = vmatprep.subr.mxu0 0.0
    %866 = vmatpush1.xpose.msra.mxu0 0.0
    %867 = vmatprep.subr.mxu0 0.0
    %868 = vmatpush1.xpose.msra.mxu0 0.0
    %869 = vmatprep.subr.mxu0 0.0
    %870 = vmatpush1.xpose.msra.mxu0 0.0
    %871 = vmatprep.subr.mxu0 0.0
    %872 = vmatpush1.xpose.msra.mxu0 0.0
    %873 = vmatprep.subr.mxu0 0.0
    %874 = vmatpush1.xpose.msra.mxu0 0.0
    %875 = vmatprep.subr.mxu0 0.0
    %876 = vmatpush1.xpose.msra.mxu0 0.0
    %877 = vmatprep.subr.mxu0 0.0
    %878 = vmatpush1.xpose.msra.mxu0 0.0
    %879 = vmatprep.subr.mxu0 0.0
    %880 = vmatpush1.xpose.msra.mxu0 0.0
    %881 = vmatprep.subr.mxu0 0.0
    %882 = vmatpush1.xpose.msra.mxu0 0.0
    %883 = vmatprep.subr.mxu0 0.0
    %884 = vmatpush1.xpose.msra.mxu0 0.0
    %885 = vmatprep.subr.mxu0 0.0
    %886 = vmatpush1.xpose.msra.mxu0 0.0
    %887 = vmatprep.subr.mxu0 0.0
    %888 = vmatpush1.xpose.msra.mxu0 0.0
    %889 = vmatprep.subr.mxu0 0.0
    %890 = vmatpush1.xpose.msra.mxu0 0.0
    %891 = vmatprep.subr.mxu0 0.0
    %892 = vmatpush1.xpose.msra.mxu0 0.0
    %893 = vmatprep.subr.mxu0 0.0
    %894 = vmatpush1.xpose.msra.mxu0 0.0
    %895 = vmatprep.subr.mxu0 0.0
    %896 = vmatpush1.xpose.msra.mxu0 0.0
    %897 = vmatprep.subr.mxu0 0.0
    %898 = vmatpush1.xpose.msra.mxu0 0.0
    %899 = vmatprep.subr.mxu0 0.0
    %900 = vmatpush1.xpose.msra.mxu0 0.0
    %901 = vmatprep.subr.mxu0 0.0
    %902 = vmatpush1.xpose.msra.mxu0 0.0
    %903 = vmatprep.subr.mxu0 0.0
    %904 = vmatpush1.xpose.msra.mxu0 0.0
    %905 = vmatprep.subr.mxu0 0.0
    %906 = vmatpush1.xpose.msra.mxu0 0.0
    %907 = vmatprep.mubr.f32.mxu0 0.0
    %908 = vmatmul.mubr.f32.gmra.mrb[0].mxu0 %v839
    %v909 = vpop.f32.mrb[0].mxu0
    %v910 = vadd.f32 0.0, %v909
    %v911 = vpop.f32.mrb[0].mxu0
    %912 = vdwg.mxu0
    %v913 = vmul.f32 %v910, 0.35355338
    %v914 = vsel %vm411, %v913, -inf
    %915 = vmax.xlane.f32.xlu0 %v914
    %v916 = vpop.xlane.xlu0 %915
    %v917 = vsub.f32 %v913, %v916
    %v918 = vmul.f32 %v917, 1.442695
    %v919 = vpow.pop %v918
    %v920 = vsel %vm411, %v919, 0.0
    %921 = vadd.xlane.f32.xlu0 %v920
    %v922 = vpop.xlane.xlu0 %921
    %v923 = vrcp.pop %v922
    %v924 = vmul.f32 %v919, %v923
    %925 = vrot.lane.b32.xlu0 %v324, 40
    %v926 = vpop.permute.xlu0 %925
    %v928 = vsel %vm425, %v924, 0
    %v930 = vsel %vm191, %v926, 0
    %932 = vmatprep.subr.mxu0 0.0
    %933 = vmatpush1.msra.mxu0 %v930
    %934 = vmatprep.subr.mxu0 0.0
    %935 = vmatpush1.msra.mxu0 0.0
    %936 = vmatprep.subr.mxu0 0.0
    %937 = vmatpush1.msra.mxu0 0.0
    %938 = vmatprep.subr.mxu0 0.0
    %939 = vmatpush1.msra.mxu0 0.0
    %940 = vmatprep.subr.mxu0 0.0
    %941 = vmatpush1.msra.mxu0 0.0
    %942 = vmatprep.subr.mxu0 0.0
    %943 = vmatpush1.msra.mxu0 0.0
    %944 = vmatprep.subr.mxu0 0.0
    %945 = vmatpush1.msra.mxu0 0.0
    %946 = vmatprep.subr.mxu0 0.0
    %947 = vmatpush1.msra.mxu0 0.0
    %948 = vmatprep.subr.mxu0 0.0
    %949 = vmatpush1.msra.mxu0 0.0
    %950 = vmatprep.subr.mxu0 0.0
    %951 = vmatpush1.msra.mxu0 0.0
    %952 = vmatprep.subr.mxu0 0.0
    %953 = vmatpush1.msra.mxu0 0.0
    %954 = vmatprep.subr.mxu0 0.0
    %955 = vmatpush1.msra.mxu0 0.0
    %956 = vmatprep.subr.mxu0 0.0
    %957 = vmatpush1.msra.mxu0 0.0
    %958 = vmatprep.subr.mxu0 0.0
    %959 = vmatpush1.msra.mxu0 0.0
    %960 = vmatprep.subr.mxu0 0.0
    %961 = vmatpush1.msra.mxu0 0.0
    %962 = vmatprep.subr.mxu0 0.0
    %963 = vmatpush1.msra.mxu0 0.0
    %964 = vmatprep.subr.mxu0 0.0
    %965 = vmatpush1.msra.mxu0 0.0
    %966 = vmatprep.subr.mxu0 0.0
    %967 = vmatpush1.msra.mxu0 0.0
    %968 = vmatprep.subr.mxu0 0.0
    %969 = vmatpush1.msra.mxu0 0.0
    %970 = vmatprep.subr.mxu0 0.0
    %971 = vmatpush1.msra.mxu0 0.0
    %972 = vmatprep.subr.mxu0 0.0
    %973 = vmatpush1.msra.mxu0 0.0
    %974 = vmatprep.subr.mxu0 0.0
    %975 = vmatpush1.msra.mxu0 0.0
    %976 = vmatprep.subr.mxu0 0.0
    %977 = vmatpush1.msra.mxu0 0.0
    %978 = vmatprep.subr.mxu0 0.0
    %979 = vmatpush1.msra.mxu0 0.0
    %980 = vmatprep.subr.mxu0 0.0
    %981 = vmatpush1.msra.mxu0 0.0
    %982 = vmatprep.subr.mxu0 0.0
    %983 = vmatpush1.msra.mxu0 0.0
    %984 = vmatprep.subr.mxu0 0.0
    %985 = vmatpush1.msra.mxu0 0.0
    %986 = vmatprep.subr.mxu0 0.0
    %987 = vmatpush1.msra.mxu0 0.0
    %988 = vmatprep.subr.mxu0 0.0
    %989 = vmatpush1.msra.mxu0 0.0
    %990 = vmatprep.subr.mxu0 0.0
    %991 = vmatpush1.msra.mxu0 0.0
    %992 = vmatprep.subr.mxu0 0.0
    %993 = vmatpush1.msra.mxu0 0.0
    %994 = vmatprep.subr.mxu0 0.0
    %995 = vmatpush1.msra.mxu0 0.0
    %996 = vmatprep.mubr.f32.mxu0 0.0
    %997 = vmatmul.mubr.f32.gmra.mrb[0].mxu0 %v928
    %v998 = vpop.f32.mrb[0].mxu0
    %v999 = vadd.f32 0.0, %v998
    %v1000 = vpop.f32.mrb[0].mxu0
    %1001 = vdwg.mxu0
    %1003 = vrot.lane.b32.xlu0 %v665, 8
    %v1004 = vpop.permute.xlu0 %1003
    %1007 = vrot.lane.b32.xlu0 %v832, 16
    %v1008 = vpop.permute.xlu0 %1007
    %1011 = vrot.lane.b32.xlu0 %v999, 24
    %v1012 = vpop.permute.xlu0 %1011
    %v1014 = vsel %vm335, %v498, %v1004
    %vm1015 = vcmask 130048
    %v1016 = vsel %vm1015, %v1014, %v1008
    %vm1017 = vcmask 195584
    %v1018 = vsel %vm1017, %v1016, %v1012
    %vm1020 = vcmask 1042432
    %v1021 = vrot.slane %v324, 5
    %v1022 = vrot.slane %v329, 5
    %v1023 = vsel %vm1020, %v1021, %v1022
    %1024 = vrot.lane.b32.xlu0 %v1023, 96
    %v1025 = vpop.permute.xlu0 %1024
    %v1026 = vsel %vm335, %v1023, 0
    %v1028 = vsel %vm335, %v1025, 0
    %1030 = vmatprep.subr.mxu0 0.0
    %1031 = vmatpush1.xpose.msra.mxu0 %v1028
    %1032 = vmatprep.subr.mxu0 0.0
    %1033 = vmatpush1.xpose.msra.mxu0 0.0
    %1034 = vmatprep.subr.mxu0 0.0
    %1035 = vmatpush1.xpose.msra.mxu0 0.0
    %1036 = vmatprep.subr.mxu0 0.0
    %1037 = vmatpush1.xpose.msra.mxu0 0.0
    %1038 = vmatprep.subr.mxu0 0.0
    %1039 = vmatpush1.xpose.msra.mxu0 0.0
    %1040 = vmatprep.subr.mxu0 0.0
    %1041 = vmatpush1.xpose.msra.mxu0 0.0
    %1042 = vmatprep.subr.mxu0 0.0
    %1043 = vmatpush1.xpose.msra.mxu0 0.0
    %1044 = vmatprep.subr.mxu0 0.0
    %1045 = vmatpush1.xpose.msra.mxu0 0.0
    %1046 = vmatprep.subr.mxu0 0.0
    %1047 = vmatpush1.xpose.msra.mxu0 0.0
    %1048 = vmatprep.subr.mxu0 0.0
    %1049 = vmatpush1.xpose.msra.mxu0 0.0
    %1050 = vmatprep.subr.mxu0 0.0
    %1051 = vmatpush1.xpose.msra.mxu0 0.0
    %1052 = vmatprep.subr.mxu0 0.0
    %1053 = vmatpush1.xpose.msra.mxu0 0.0
    %1054 = vmatprep.subr.mxu0 0.0
    %1055 = vmatpush1.xpose.msra.mxu0 0.0
    %1056 = vmatprep.subr.mxu0 0.0
    %1057 = vmatpush1.xpose.msra.mxu0 0.0
    %1058 = vmatprep.subr.mxu0 0.0
    %1059 = vmatpush1.xpose.msra.mxu0 0.0
    %1060 = vmatprep.subr.mxu0 0.0
    %1061 = vmatpush1.xpose.msra.mxu0 0.0
    %1062 = vmatprep.subr.mxu0 0.0
    %1063 = vmatpush1.xpose.msra.mxu0 0.0
    %1064 = vmatprep.subr.mxu0 0.0
    %1065 = vmatpush1.xpose.msra.mxu0 0.0
    %1066 = vmatprep.subr.mxu0 0.0
    %1067 = vmatpush1.xpose.msra.mxu0 0.0
    %1068 = vmatprep.subr.mxu0 0.0
    %1069 = vmatpush1.xpose.msra.mxu0 0.0
    %1070 = vmatprep.subr.mxu0 0.0
    %1071 = vmatpush1.xpose.msra.mxu0 0.0
    %1072 = vmatprep.subr.mxu0 0.0
    %1073 = vmatpush1.xpose.msra.mxu0 0.0
    %1074 = vmatprep.subr.mxu0 0.0
    %1075 = vmatpush1.xpose.msra.mxu0 0.0
    %1076 = vmatprep.subr.mxu0 0.0
    %1077 = vmatpush1.xpose.msra.mxu0 0.0
    %1078 = vmatprep.subr.mxu0 0.0
    %1079 = vmatpush1.xpose.msra.mxu0 0.0
    %1080 = vmatprep.subr.mxu0 0.0
    %1081 = vmatpush1.xpose.msra.mxu0 0.0
    %1082 = vmatprep.subr.mxu0 0.0
    %1083 = vmatpush1.xpose.msra.mxu0 0.0
    %1084 = vmatprep.subr.mxu0 0.0
    %1085 = vmatpush1.xpose.msra.mxu0 0.0
    %1086 = vmatprep.subr.mxu0 0.0
    %1087 = vmatpush1.xpose.msra.mxu0 0.0
    %1088 = vmatprep.subr.mxu0 0.0
    %1089 = vmatpush1.xpose.msra.mxu0 0.0
    %1090 = vmatprep.subr.mxu0 0.0
    %1091 = vmatpush1.xpose.msra.mxu0 0.0
    %1092 = vmatprep.subr.mxu0 0.0
    %1093 = vmatpush1.xpose.msra.mxu0 0.0
    %1094 = vmatprep.mubr.f32.mxu0 0.0
    %1095 = vmatmul.mubr.f32.gmra.mrb[0].mxu0 %v1026
    %v1096 = vpop.f32.mrb[0].mxu0
    %v1097 = vadd.f32 0.0, %v1096
    %v1098 = vpop.f32.mrb[0].mxu0
    %1099 = vdwg.mxu0
    %v1100 = vmul.f32 %v1097, 0.35355338
    %v1101 = vsel %vm411, %v1100, -inf
    %1102 = vmax.xlane.f32.xlu0 %v1101
    %v1103 = vpop.xlane.xlu0 %1102
    %v1104 = vsub.f32 %v1100, %v1103
    %v1105 = vmul.f32 %v1104, 1.442695
    %v1106 = vpow.pop %v1105
    %v1107 = vsel %vm411, %v1106, 0.0
    %1108 = vadd.xlane.f32.xlu0 %v1107
    %v1109 = vpop.xlane.xlu0 %1108
    %v1110 = vrcp.pop %v1109
    %v1111 = vmul.f32 %v1106, %v1110
    %1112 = vrot.lane.b32.xlu0 %v1023, 64
    %v1113 = vpop.permute.xlu0 %1112
    %v1115 = vsel %vm425, %v1111, 0
    %v1117 = vsel %vm191, %v1113, 0
    %1119 = vmatprep.subr.mxu0 0.0
    %1120 = vmatpush1.msra.mxu0 %v1117
    %1121 = vmatprep.subr.mxu0 0.0
    %1122 = vmatpush1.msra.mxu0 0.0
    %1123 = vmatprep.subr.mxu0 0.0
    %1124 = vmatpush1.msra.mxu0 0.0
    %1125 = vmatprep.subr.mxu0 0.0
    %1126 = vmatpush1.msra.mxu0 0.0
    %1127 = vmatprep.subr.mxu0 0.0
    %1128 = vmatpush1.msra.mxu0 0.0
    %1129 = vmatprep.subr.mxu0 0.0
    %1130 = vmatpush1.msra.mxu0 0.0
    %1131 = vmatprep.subr.mxu0 0.0
    %1132 = vmatpush1.msra.mxu0 0.0
    %1133 = vmatprep.subr.mxu0 0.0
    %1134 = vmatpush1.msra.mxu0 0.0
    %1135 = vmatprep.subr.mxu0 0.0
    %1136 = vmatpush1.msra.mxu0 0.0
    %1137 = vmatprep.subr.mxu0 0.0
    %1138 = vmatpush1.msra.mxu0 0.0
    %1139 = vmatprep.subr.mxu0 0.0
    %1140 = vmatpush1.msra.mxu0 0.0
    %1141 = vmatprep.subr.mxu0 0.0
    %1142 = vmatpush1.msra.mxu0 0.0
    %1143 = vmatprep.subr.mxu0 0.0
    %1144 = vmatpush1.msra.mxu0 0.0
    %1145 = vmatprep.subr.mxu0 0.0
    %1146 = vmatpush1.msra.mxu0 0.0
    %1147 = vmatprep.subr.mxu0 0.0
    %1148 = vmatpush1.msra.mxu0 0.0
    %1149 = vmatprep.subr.mxu0 0.0
    %1150 = vmatpush1.msra.mxu0 0.0
    %1151 = vmatprep.subr.mxu0 0.0
    %1152 = vmatpush1.msra.mxu0 0.0
    %1153 = vmatprep.subr.mxu0 0.0
    %1154 = vmatpush1.msra.mxu0 0.0
    %1155 = vmatprep.subr.mxu0 0.0
    %1156 = vmatpush1.msra.mxu0 0.0
    %1157 = vmatprep.subr.mxu0 0.0
    %1158 = vmatpush1.msra.mxu0 0.0
    %1159 = vmatprep.subr.mxu0 0.0
    %1160 = vmatpush1.msra.mxu0 0.0
    %1161 = vmatprep.subr.mxu0 0.0
    %1162 = vmatpush1.msra.mxu0 0.0
    %1163 = vmatprep.subr.mxu0 0.0
    %1164 = vmatpush1.msra.mxu0 0.0
    %1165 = vmatprep.subr.mxu0 0.0
    %1166 = vmatpush1.msra.mxu0 0.0
    %1167 = vmatprep.subr.mxu0 0.0
    %1168 = vmatpush1.msra.mxu0 0.0
    %1169 = vmatprep.subr.mxu0 0.0
    %1170 = vmatpush1.msra.mxu0 0.0
    %1171 = vmatprep.subr.mxu0 0.0
    %1172 = vmatpush1.msra.mxu0 0.0
    %1173 = vmatprep.subr.mxu0 0.0
    %1174 = vmatpush1.msra.mxu0 0.0
    %1175 = vmatprep.subr.mxu0 0.0
    %1176 = vmatpush1.msra.mxu0 0.0
    %1177 = vmatprep.subr.mxu0 0.0
    %1178 = vmatpush1.msra.mxu0 0.0
    %1179 = vmatprep.subr.mxu0 0.0
    %1180 = vmatpush1.msra.mxu0 0.0
    %1181 = vmatprep.subr.mxu0 0.0
    %1182 = vmatpush1.msra.mxu0 0.0
    %1183 = vmatprep.mubr.f32.mxu0 0.0
    %1184 = vmatmul.mubr.f32.gmra.mrb[0].mxu0 %v1115
    %v1185 = vpop.f32.mrb[0].mxu0
    %v1186 = vadd.f32 0.0, %v1185
    %v1187 = vpop.f32.mrb[0].mxu0
    %1188 = vdwg.mxu0
    %1189 = vrot.lane.b32.xlu0 %v1023, 120
    %v1190 = vpop.permute.xlu0 %1189
    %1191 = vrot.lane.b32.xlu0 %v1023, 88
    %v1192 = vpop.permute.xlu0 %1191
    %v1193 = vsel %vm335, %v1190, 0
    %v1195 = vsel %vm335, %v1192, 0
    %1197 = vmatprep.subr.mxu0 0.0
    %1198 = vmatpush1.xpose.msra.mxu0 %v1195
    %1199 = vmatprep.subr.mxu0 0.0
    %1200 = vmatpush1.xpose.msra.mxu0 0.0
    %1201 = vmatprep.subr.mxu0 0.0
    %1202 = vmatpush1.xpose.msra.mxu0 0.0
    %1203 = vmatprep.subr.mxu0 0.0
    %1204 = vmatpush1.xpose.msra.mxu0 0.0
    %1205 = vmatprep.subr.mxu0 0.0
    %1206 = vmatpush1.xpose.msra.mxu0 0.0
    %1207 = vmatprep.subr.mxu0 0.0
    %1208 = vmatpush1.xpose.msra.mxu0 0.0
    %1209 = vmatprep.subr.mxu0 0.0
    %1210 = vmatpush1.xpose.msra.mxu0 0.0
    %1211 = vmatprep.subr.mxu0 0.0
    %1212 = vmatpush1.xpose.msra.mxu0 0.0
    %1213 = vmatprep.subr.mxu0 0.0
    %1214 = vmatpush1.xpose.msra.mxu0 0.0
    %1215 = vmatprep.subr.mxu0 0.0
    %1216 = vmatpush1.xpose.msra.mxu0 0.0
    %1217 = vmatprep.subr.mxu0 0.0
    %1218 = vmatpush1.xpose.msra.mxu0 0.0
    %1219 = vmatprep.subr.mxu0 0.0
    %1220 = vmatpush1.xpose.msra.mxu0 0.0
    %1221 = vmatprep.subr.mxu0 0.0
    %1222 = vmatpush1.xpose.msra.mxu0 0.0
    %1223 = vmatprep.subr.mxu0 0.0
    %1224 = vmatpush1.xpose.msra.mxu0 0.0
    %1225 = vmatprep.subr.mxu0 0.0
    %1226 = vmatpush1.xpose.msra.mxu0 0.0
    %1227 = vmatprep.subr.mxu0 0.0
    %1228 = vmatpush1.xpose.msra.mxu0 0.0
    %1229 = vmatprep.subr.mxu0 0.0
    %1230 = vmatpush1.xpose.msra.mxu0 0.0
    %1231 = vmatprep.subr.mxu0 0.0
    %1232 = vmatpush1.xpose.msra.mxu0 0.0
    %1233 = vmatprep.subr.mxu0 0.0
    %1234 = vmatpush1.xpose.msra.mxu0 0.0
    %1235 = vmatprep.subr.mxu0 0.0
    %1236 = vmatpush1.xpose.msra.mxu0 0.0
    %1237 = vmatprep.subr.mxu0 0.0
    %1238 = vmatpush1.xpose.msra.mxu0 0.0
    %1239 = vmatprep.subr.mxu0 0.0
    %1240 = vmatpush1.xpose.msra.mxu0 0.0
    %1241 = vmatprep.subr.mxu0 0.0
    %1242 = vmatpush1.xpose.msra.mxu0 0.0
    %1243 = vmatprep.subr.mxu0 0.0
    %1244 = vmatpush1.xpose.msra.mxu0 0.0
    %1245 = vmatprep.subr.mxu0 0.0
    %1246 = vmatpush1.xpose.msra.mxu0 0.0
    %1247 = vmatprep.subr.mxu0 0.0
    %1248 = vmatpush1.xpose.msra.mxu0 0.0
    %1249 = vmatprep.subr.mxu0 0.0
    %1250 = vmatpush1.xpose.msra.mxu0 0.0
    %1251 = vmatprep.subr.mxu0 0.0
    %1252 = vmatpush1.xpose.msra.mxu0 0.0
    %1253 = vmatprep.subr.mxu0 0.0
    %1254 = vmatpush1.xpose.msra.mxu0 0.0
    %1255 = vmatprep.subr.mxu0 0.0
    %1256 = vmatpush1.xpose.msra.mxu0 0.0
    %1257 = vmatprep.subr.mxu0 0.0
    %1258 = vmatpush1.xpose.msra.mxu0 0.0
    %1259 = vmatprep.subr.mxu0 0.0
    %1260 = vmatpush1.xpose.msra.mxu0 0.0
    %1261 = vmatprep.mubr.f32.mxu0 0.0
    %1262 = vmatmul.mubr.f32.gmra.mrb[0].mxu0 %v1193
    %v1263 = vpop.f32.mrb[0].mxu0
    %v1264 = vadd.f32 0.0, %v1263
    %v1265 = vpop.f32.mrb[0].mxu0
    %1266 = vdwg.mxu0
    %v1267 = vmul.f32 %v1264, 0.35355338
    %v1268 = vsel %vm411, %v1267, -inf
    %1269 = vmax.xlane.f32.xlu0 %v1268
    %v1270 = vpop.xlane.xlu0 %1269
    %v1271 = vsub.f32 %v1267, %v1270
    %v1272 = vmul.f32 %v1271, 1.442695
    %v1273 = vpow.pop %v1272
    %v1274 = vsel %vm411, %v1273, 0.0
    %1275 = vadd.xlane.f32.xlu0 %v1274
    %v1276 = vpop.xlane.xlu0 %1275
    %v1277 = vrcp.pop %v1276
    %v1278 = vmul.f32 %v1273, %v1277
    %1279 = vrot.lane.b32.xlu0 %v1023, 56
    %v1280 = vpop.permute.xlu0 %1279
    %v1282 = vsel %vm425, %v1278, 0
    %v1284 = vsel %vm191, %v1280, 0
    %1286 = vmatprep.subr.mxu0 0.0
    %1287 = vmatpush1.msra.mxu0 %v1284
    %1288 = vmatprep.subr.mxu0 0.0
    %1289 = vmatpush1.msra.mxu0 0.0
    %1290 = vmatprep.subr.mxu0 0.0
    %1291 = vmatpush1.msra.mxu0 0.0
    %1292 = vmatprep.subr.mxu0 0.0
    %1293 = vmatpush1.msra.mxu0 0.0
    %1294 = vmatprep.subr.mxu0 0.0
    %1295 = vmatpush1.msra.mxu0 0.0
    %1296 = vmatprep.subr.mxu0 0.0
    %1297 = vmatpush1.msra.mxu0 0.0
    %1298 = vmatprep.subr.mxu0 0.0
    %1299 = vmatpush1.msra.mxu0 0.0
    %1300 = vmatprep.subr.mxu0 0.0
    %1301 = vmatpush1.msra.mxu0 0.0
    %1302 = vmatprep.subr.mxu0 0.0
    %1303 = vmatpush1.msra.mxu0 0.0
    %1304 = vmatprep.subr.mxu0 0.0
    %1305 = vmatpush1.msra.mxu0 0.0
    %1306 = vmatprep.subr.mxu0 0.0
    %1307 = vmatpush1.msra.mxu0 0.0
    %1308 = vmatprep.subr.mxu0 0.0
    %1309 = vmatpush1.msra.mxu0 0.0
    %1310 = vmatprep.subr.mxu0 0.0
    %1311 = vmatpush1.msra.mxu0 0.0
    %1312 = vmatprep.subr.mxu0 0.0
    %1313 = vmatpush1.msra.mxu0 0.0
    %1314 = vmatprep.subr.mxu0 0.0
    %1315 = vmatpush1.msra.mxu0 0.0
    %1316 = vmatprep.subr.mxu0 0.0
    %1317 = vmatpush1.msra.mxu0 0.0
    %1318 = vmatprep.subr.mxu0 0.0
    %1319 = vmatpush1.msra.mxu0 0.0
    %1320 = vmatprep.subr.mxu0 0.0
    %1321 = vmatpush1.msra.mxu0 0.0
    %1322 = vmatprep.subr.mxu0 0.0
    %1323 = vmatpush1.msra.mxu0 0.0
    %1324 = vmatprep.subr.mxu0 0.0
    %1325 = vmatpush1.msra.mxu0 0.0
    %1326 = vmatprep.subr.mxu0 0.0
    %1327 = vmatpush1.msra.mxu0 0.0
    %1328 = vmatprep.subr.mxu0 0.0
    %1329 = vmatpush1.msra.mxu0 0.0
    %1330 = vmatprep.subr.mxu0 0.0
    %1331 = vmatpush1.msra.mxu0 0.0
    %1332 = vmatprep.subr.mxu0 0.0
    %1333 = vmatpush1.msra.mxu0 0.0
    %1334 = vmatprep.subr.mxu0 0.0
    %1335 = vmatpush1.msra.mxu0 0.0
    %1336 = vmatprep.subr.mxu0 0.0
    %1337 = vmatpush1.msra.mxu0 0.0
    %1338 = vmatprep.subr.mxu0 0.0
    %1339 = vmatpush1.msra.mxu0 0.0
    %1340 = vmatprep.subr.mxu0 0.0
    %1341 = vmatpush1.msra.mxu0 0.0
    %1342 = vmatprep.subr.mxu0 0.0
    %1343 = vmatpush1.msra.mxu0 0.0
    %1344 = vmatprep.subr.mxu0 0.0
    %1345 = vmatpush1.msra.mxu0 0.0
    %1346 = vmatprep.subr.mxu0 0.0
    %1347 = vmatpush1.msra.mxu0 0.0
    %1348 = vmatprep.subr.mxu0 0.0
    %1349 = vmatpush1.msra.mxu0 0.0
    %1350 = vmatprep.mubr.f32.mxu0 0.0
    %1351 = vmatmul.mubr.f32.gmra.mrb[0].mxu0 %v1282
    %v1352 = vpop.f32.mrb[0].mxu0
    %v1353 = vadd.f32 0.0, %v1352
    %v1354 = vpop.f32.mrb[0].mxu0
    %1355 = vdwg.mxu0
    %1356 = vrot.lane.b32.xlu0 %v1023, 112
    %v1357 = vpop.permute.xlu0 %1356
    %1358 = vrot.lane.b32.xlu0 %v1023, 80
    %v1359 = vpop.permute.xlu0 %1358
    %v1360 = vsel %vm335, %v1357, 0
    %v1362 = vsel %vm335, %v1359, 0
    %1364 = vmatprep.subr.mxu0 0.0
    %1365 = vmatpush1.xpose.msra.mxu0 %v1362
    %1366 = vmatprep.subr.mxu0 0.0
    %1367 = vmatpush1.xpose.msra.mxu0 0.0
    %1368 = vmatprep.subr.mxu0 0.0
    %1369 = vmatpush1.xpose.msra.mxu0 0.0
    %1370 = vmatprep.subr.mxu0 0.0
    %1371 = vmatpush1.xpose.msra.mxu0 0.0
    %1372 = vmatprep.subr.mxu0 0.0
    %1373 = vmatpush1.xpose.msra.mxu0 0.0
    %1374 = vmatprep.subr.mxu0 0.0
    %1375 = vmatpush1.xpose.msra.mxu0 0.0
    %1376 = vmatprep.subr.mxu0 0.0
    %1377 = vmatpush1.xpose.msra.mxu0 0.0
    %1378 = vmatprep.subr.mxu0 0.0
    %1379 = vmatpush1.xpose.msra.mxu0 0.0
    %1380 = vmatprep.subr.mxu0 0.0
    %1381 = vmatpush1.xpose.msra.mxu0 0.0
    %1382 = vmatprep.subr.mxu0 0.0
    %1383 = vmatpush1.xpose.msra.mxu0 0.0
    %1384 = vmatprep.subr.mxu0 0.0
    %1385 = vmatpush1.xpose.msra.mxu0 0.0
    %1386 = vmatprep.subr.mxu0 0.0
    %1387 = vmatpush1.xpose.msra.mxu0 0.0
    %1388 = vmatprep.subr.mxu0 0.0
    %1389 = vmatpush1.xpose.msra.mxu0 0.0
    %1390 = vmatprep.subr.mxu0 0.0
    %1391 = vmatpush1.xpose.msra.mxu0 0.0
    %1392 = vmatprep.subr.mxu0 0.0
    %1393 = vmatpush1.xpose.msra.mxu0 0.0
    %1394 = vmatprep.subr.mxu0 0.0
    %1395 = vmatpush1.xpose.msra.mxu0 0.0
    %1396 = vmatprep.subr.mxu0 0.0
    %1397 = vmatpush1.xpose.msra.mxu0 0.0
    %1398 = vmatprep.subr.mxu0 0.0
    %1399 = vmatpush1.xpose.msra.mxu0 0.0
    %1400 = vmatprep.subr.mxu0 0.0
    %1401 = vmatpush1.xpose.msra.mxu0 0.0
    %1402 = vmatprep.subr.mxu0 0.0
    %1403 = vmatpush1.xpose.msra.mxu0 0.0
    %1404 = vmatprep.subr.mxu0 0.0
    %1405 = vmatpush1.xpose.msra.mxu0 0.0
    %1406 = vmatprep.subr.mxu0 0.0
    %1407 = vmatpush1.xpose.msra.mxu0 0.0
    %1408 = vmatprep.subr.mxu0 0.0
    %1409 = vmatpush1.xpose.msra.mxu0 0.0
    %1410 = vmatprep.subr.mxu0 0.0
    %1411 = vmatpush1.xpose.msra.mxu0 0.0
    %1412 = vmatprep.subr.mxu0 0.0
    %1413 = vmatpush1.xpose.msra.mxu0 0.0
    %1414 = vmatprep.subr.mxu0 0.0
    %1415 = vmatpush1.xpose.msra.mxu0 0.0
    %1416 = vmatprep.subr.mxu0 0.0
    %1417 = vmatpush1.xpose.msra.mxu0 0.0
    %1418 = vmatprep.subr.mxu0 0.0
    %1419 = vmatpush1.xpose.msra.mxu0 0.0
    %1420 = vmatprep.subr.mxu0 0.0
    %1421 = vmatpush1.xpose.msra.mxu0 0.0
    %1422 = vmatprep.subr.mxu0 0.0
    %1423 = vmatpush1.xpose.msra.mxu0 0.0
    %1424 = vmatprep.subr.mxu0 0.0
    %1425 = vmatpush1.xpose.msra.mxu0 0.0
    %1426 = vmatprep.subr.mxu0 0.0
    %1427 = vmatpush1.xpose.msra.mxu0 0.0
    %1428 = vmatprep.mubr.f32.mxu0 0.0
    %1429 = vmatmul.mubr.f32.gmra.mrb[0].mxu0 %v1360
    %v1430 = vpop.f32.mrb[0].mxu0
    %v1431 = vadd.f32 0.0, %v1430
    %v1432 = vpop.f32.mrb[0].mxu0
    %1433 = vdwg.mxu0
    %v1434 = vmul.f32 %v1431, 0.35355338
    %v1435 = vsel %vm411, %v1434, -inf
    %1436 = vmax.xlane.f32.xlu0 %v1435
    %v1437 = vpop.xlane.xlu0 %1436
    %v1438 = vsub.f32 %v1434, %v1437
    %v1439 = vmul.f32 %v1438, 1.442695
    %v1440 = vpow.pop %v1439
    %v1441 = vsel %vm411, %v1440, 0.0
    %1442 = vadd.xlane.f32.xlu0 %v1441
    %v1443 = vpop.xlane.xlu0 %1442
    %v1444 = vrcp.pop %v1443
    %v1445 = vmul.f32 %v1440, %v1444
    %1446 = vrot.lane.b32.xlu0 %v1023, 48
    %v1447 = vpop.permute.xlu0 %1446
    %v1449 = vsel %vm425, %v1445, 0
    %v1451 = vsel %vm191, %v1447, 0
    %1453 = vmatprep.subr.mxu0 0.0
    %1454 = vmatpush1.msra.mxu0 %v1451
    %1455 = vmatprep.subr.mxu0 0.0
    %1456 = vmatpush1.msra.mxu0 0.0
    %1457 = vmatprep.subr.mxu0 0.0
    %1458 = vmatpush1.msra.mxu0 0.0
    %1459 = vmatprep.subr.mxu0 0.0
    %1460 = vmatpush1.msra.mxu0 0.0
    %1461 = vmatprep.subr.mxu0 0.0
    %1462 = vmatpush1.msra.mxu0 0.0
    %1463 = vmatprep.subr.mxu0 0.0
    %1464 = vmatpush1.msra.mxu0 0.0
    %1465 = vmatprep.subr.mxu0 0.0
    %1466 = vmatpush1.msra.mxu0 0.0
    %1467 = vmatprep.subr.mxu0 0.0
    %1468 = vmatpush1.msra.mxu0 0.0
    %1469 = vmatprep.subr.mxu0 0.0
    %1470 = vmatpush1.msra.mxu0 0.0
    %1471 = vmatprep.subr.mxu0 0.0
    %1472 = vmatpush1.msra.mxu0 0.0
    %1473 = vmatprep.subr.mxu0 0.0
    %1474 = vmatpush1.msra.mxu0 0.0
    %1475 = vmatprep.subr.mxu0 0.0
    %1476 = vmatpush1.msra.mxu0 0.0
    %1477 = vmatprep.subr.mxu0 0.0
    %1478 = vmatpush1.msra.mxu0 0.0
    %1479 = vmatprep.subr.mxu0 0.0
    %1480 = vmatpush1.msra.mxu0 0.0
    %1481 = vmatprep.subr.mxu0 0.0
    %1482 = vmatpush1.msra.mxu0 0.0
    %1483 = vmatprep.subr.mxu0 0.0
    %1484 = vmatpush1.msra.mxu0 0.0
    %1485 = vmatprep.subr.mxu0 0.0
    %1486 = vmatpush1.msra.mxu0 0.0
    %1487 = vmatprep.subr.mxu0 0.0
    %1488 = vmatpush1.msra.mxu0 0.0
    %1489 = vmatprep.subr.mxu0 0.0
    %1490 = vmatpush1.msra.mxu0 0.0
    %1491 = vmatprep.subr.mxu0 0.0
    %1492 = vmatpush1.msra.mxu0 0.0
    %1493 = vmatprep.subr.mxu0 0.0
    %1494 = vmatpush1.msra.mxu0 0.0
    %1495 = vmatprep.subr.mxu0 0.0
    %1496 = vmatpush1.msra.mxu0 0.0
    %1497 = vmatprep.subr.mxu0 0.0
    %1498 = vmatpush1.msra.mxu0 0.0
    %1499 = vmatprep.subr.mxu0 0.0
    %1500 = vmatpush1.msra.mxu0 0.0
    %1501 = vmatprep.subr.mxu0 0.0
    %1502 = vmatpush1.msra.mxu0 0.0
    %1503 = vmatprep.subr.mxu0 0.0
    %1504 = vmatpush1.msra.mxu0 0.0
    %1505 = vmatprep.subr.mxu0 0.0
    %1506 = vmatpush1.msra.mxu0 0.0
    %1507 = vmatprep.subr.mxu0 0.0
    %1508 = vmatpush1.msra.mxu0 0.0
    %1509 = vmatprep.subr.mxu0 0.0
    %1510 = vmatpush1.msra.mxu0 0.0
    %1511 = vmatprep.subr.mxu0 0.0
    %1512 = vmatpush1.msra.mxu0 0.0
    %1513 = vmatprep.subr.mxu0 0.0
    %1514 = vmatpush1.msra.mxu0 0.0
    %1515 = vmatprep.subr.mxu0 0.0
    %1516 = vmatpush1.msra.mxu0 0.0
    %1517 = vmatprep.mubr.f32.mxu0 0.0
    %1518 = vmatmul.mubr.f32.gmra.mrb[0].mxu0 %v1449
    %v1519 = vpop.f32.mrb[0].mxu0
    %v1520 = vadd.f32 0.0, %v1519
    %v1521 = vpop.f32.mrb[0].mxu0
    %1522 = vdwg.mxu0
    %1523 = vrot.lane.b32.xlu0 %v1023, 104
    %v1524 = vpop.permute.xlu0 %1523
    %1525 = vrot.lane.b32.xlu0 %v1023, 72
    %v1526 = vpop.permute.xlu0 %1525
    %v1527 = vsel %vm335, %v1524, 0
    %v1529 = vsel %vm335, %v1526, 0
    %1531 = vmatprep.subr.mxu0 0.0
    %1532 = vmatpush1.xpose.msra.mxu0 %v1529
    %1533 = vmatprep.subr.mxu0 0.0
    %1534 = vmatpush1.xpose.msra.mxu0 0.0
    %1535 = vmatprep.subr.mxu0 0.0
    %1536 = vmatpush1.xpose.msra.mxu0 0.0
    %1537 = vmatprep.subr.mxu0 0.0
    %1538 = vmatpush1.xpose.msra.mxu0 0.0
    %1539 = vmatprep.subr.mxu0 0.0
    %1540 = vmatpush1.xpose.msra.mxu0 0.0
    %1541 = vmatprep.subr.mxu0 0.0
    %1542 = vmatpush1.xpose.msra.mxu0 0.0
    %1543 = vmatprep.subr.mxu0 0.0
    %1544 = vmatpush1.xpose.msra.mxu0 0.0
    %1545 = vmatprep.subr.mxu0 0.0
    %1546 = vmatpush1.xpose.msra.mxu0 0.0
    %1547 = vmatprep.subr.mxu0 0.0
    %1548 = vmatpush1.xpose.msra.mxu0 0.0
    %1549 = vmatprep.subr.mxu0 0.0
    %1550 = vmatpush1.xpose.msra.mxu0 0.0
    %1551 = vmatprep.subr.mxu0 0.0
    %1552 = vmatpush1.xpose.msra.mxu0 0.0
    %1553 = vmatprep.subr.mxu0 0.0
    %1554 = vmatpush1.xpose.msra.mxu0 0.0
    %1555 = vmatprep.subr.mxu0 0.0
    %1556 = vmatpush1.xpose.msra.mxu0 0.0
    %1557 = vmatprep.subr.mxu0 0.0
    %1558 = vmatpush1.xpose.msra.mxu0 0.0
    %1559 = vmatprep.subr.mxu0 0.0
    %1560 = vmatpush1.xpose.msra.mxu0 0.0
    %1561 = vmatprep.subr.mxu0 0.0
    %1562 = vmatpush1.xpose.msra.mxu0 0.0
    %1563 = vmatprep.subr.mxu0 0.0
    %1564 = vmatpush1.xpose.msra.mxu0 0.0
    %1565 = vmatprep.subr.mxu0 0.0
    %1566 = vmatpush1.xpose.msra.mxu0 0.0
    %1567 = vmatprep.subr.mxu0 0.0
    %1568 = vmatpush1.xpose.msra.mxu0 0.0
    %1569 = vmatprep.subr.mxu0 0.0
    %1570 = vmatpush1.xpose.msra.mxu0 0.0
    %1571 = vmatprep.subr.mxu0 0.0
    %1572 = vmatpush1.xpose.msra.mxu0 0.0
    %1573 = vmatprep.subr.mxu0 0.0
    %1574 = vmatpush1.xpose.msra.mxu0 0.0
    %1575 = vmatprep.subr.mxu0 0.0
    %1576 = vmatpush1.xpose.msra.mxu0 0.0
    %1577 = vmatprep.subr.mxu0 0.0
    %1578 = vmatpush1.xpose.msra.mxu0 0.0
    %1579 = vmatprep.subr.mxu0 0.0
    %1580 = vmatpush1.xpose.msra.mxu0 0.0
    %1581 = vmatprep.subr.mxu0 0.0
    %1582 = vmatpush1.xpose.msra.mxu0 0.0
    %1583 = vmatprep.subr.mxu0 0.0
    %1584 = vmatpush1.xpose.msra.mxu0 0.0
    %1585 = vmatprep.subr.mxu0 0.0
    %1586 = vmatpush1.xpose.msra.mxu0 0.0
    %1587 = vmatprep.subr.mxu0 0.0
    %1588 = vmatpush1.xpose.msra.mxu0 0.0
    %1589 = vmatprep.subr.mxu0 0.0
    %1590 = vmatpush1.xpose.msra.mxu0 0.0
    %1591 = vmatprep.subr.mxu0 0.0
    %1592 = vmatpush1.xpose.msra.mxu0 0.0
    %1593 = vmatprep.subr.mxu0 0.0
    %1594 = vmatpush1.xpose.msra.mxu0 0.0
    %1595 = vmatprep.mubr.f32.mxu0 0.0
    %1596 = vmatmul.mubr.f32.gmra.mrb[0].mxu0 %v1527
    %v1597 = vpop.f32.mrb[0].mxu0
    %v1598 = vadd.f32 0.0, %v1597
    %v1599 = vpop.f32.mrb[0].mxu0
    %1600 = vdwg.mxu0
    %v1601 = vmul.f32 %v1598, 0.35355338
    %v1602 = vsel %vm411, %v1601, -inf
    %1603 = vmax.xlane.f32.xlu0 %v1602
    %v1604 = vpop.xlane.xlu0 %1603
    %v1605 = vsub.f32 %v1601, %v1604
    %v1606 = vmul.f32 %v1605, 1.442695
    %v1607 = vpow.pop %v1606
    %v1608 = vsel %vm411, %v1607, 0.0
    %1609 = vadd.xlane.f32.xlu0 %v1608
    %v1610 = vpop.xlane.xlu0 %1609
    %v1611 = vrcp.pop %v1610
    %v1612 = vmul.f32 %v1607, %v1611
    %1613 = vrot.lane.b32.xlu0 %v1023, 40
    %v1614 = vpop.permute.xlu0 %1613
    %v1616 = vsel %vm425, %v1612, 0
    %v1618 = vsel %vm191, %v1614, 0
    %1620 = vmatprep.subr.mxu0 0.0
    %1621 = vmatpush1.msra.mxu0 %v1618
    %1622 = vmatprep.subr.mxu0 0.0
    %1623 = vmatpush1.msra.mxu0 0.0
    %1624 = vmatprep.subr.mxu0 0.0
    %1625 = vmatpush1.msra.mxu0 0.0
    %1626 = vmatprep.subr.mxu0 0.0
    %1627 = vmatpush1.msra.mxu0 0.0
    %1628 = vmatprep.subr.mxu0 0.0
    %1629 = vmatpush1.msra.mxu0 0.0
    %1630 = vmatprep.subr.mxu0 0.0
    %1631 = vmatpush1.msra.mxu0 0.0
    %1632 = vmatprep.subr.mxu0 0.0
    %1633 = vmatpush1.msra.mxu0 0.0
    %1634 = vmatprep.subr.mxu0 0.0
    %1635 = vmatpush1.msra.mxu0 0.0
    %1636 = vmatprep.subr.mxu0 0.0
    %1637 = vmatpush1.msra.mxu0 0.0
    %1638 = vmatprep.subr.mxu0 0.0
    %1639 = vmatpush1.msra.mxu0 0.0
    %1640 = vmatprep.subr.mxu0 0.0
    %1641 = vmatpush1.msra.mxu0 0.0
    %1642 = vmatprep.subr.mxu0 0.0
    %1643 = vmatpush1.msra.mxu0 0.0
    %1644 = vmatprep.subr.mxu0 0.0
    %1645 = vmatpush1.msra.mxu0 0.0
    %1646 = vmatprep.subr.mxu0 0.0
    %1647 = vmatpush1.msra.mxu0 0.0
    %1648 = vmatprep.subr.mxu0 0.0
    %1649 = vmatpush1.msra.mxu0 0.0
    %1650 = vmatprep.subr.mxu0 0.0
    %1651 = vmatpush1.msra.mxu0 0.0
    %1652 = vmatprep.subr.mxu0 0.0
    %1653 = vmatpush1.msra.mxu0 0.0
    %1654 = vmatprep.subr.mxu0 0.0
    %1655 = vmatpush1.msra.mxu0 0.0
    %1656 = vmatprep.subr.mxu0 0.0
    %1657 = vmatpush1.msra.mxu0 0.0
    %1658 = vmatprep.subr.mxu0 0.0
    %1659 = vmatpush1.msra.mxu0 0.0
    %1660 = vmatprep.subr.mxu0 0.0
    %1661 = vmatpush1.msra.mxu0 0.0
    %1662 = vmatprep.subr.mxu0 0.0
    %1663 = vmatpush1.msra.mxu0 0.0
    %1664 = vmatprep.subr.mxu0 0.0
    %1665 = vmatpush1.msra.mxu0 0.0
    %1666 = vmatprep.subr.mxu0 0.0
    %1667 = vmatpush1.msra.mxu0 0.0
    %1668 = vmatprep.subr.mxu0 0.0
    %1669 = vmatpush1.msra.mxu0 0.0
    %1670 = vmatprep.subr.mxu0 0.0
    %1671 = vmatpush1.msra.mxu0 0.0
    %1672 = vmatprep.subr.mxu0 0.0
    %1673 = vmatpush1.msra.mxu0 0.0
    %1674 = vmatprep.subr.mxu0 0.0
    %1675 = vmatpush1.msra.mxu0 0.0
    %1676 = vmatprep.subr.mxu0 0.0
    %1677 = vmatpush1.msra.mxu0 0.0
    %1678 = vmatprep.subr.mxu0 0.0
    %1679 = vmatpush1.msra.mxu0 0.0
    %1680 = vmatprep.subr.mxu0 0.0
    %1681 = vmatpush1.msra.mxu0 0.0
    %1682 = vmatprep.subr.mxu0 0.0
    %1683 = vmatpush1.msra.mxu0 0.0
    %1684 = vmatprep.mubr.f32.mxu0 0.0
    %1685 = vmatmul.mubr.f32.gmra.mrb[0].mxu0 %v1616
    %v1686 = vpop.f32.mrb[0].mxu0
    %v1687 = vadd.f32 0.0, %v1686
    %v1688 = vpop.f32.mrb[0].mxu0
    %1689 = vdwg.mxu0
    %1691 = vrot.lane.b32.xlu0 %v1353, 8
    %v1692 = vpop.permute.xlu0 %1691
    %1695 = vrot.lane.b32.xlu0 %v1520, 16
    %v1696 = vpop.permute.xlu0 %1695
    %1699 = vrot.lane.b32.xlu0 %v1687, 24
    %v1700 = vpop.permute.xlu0 %1699
    %v1702 = vsel %vm335, %v1186, %v1692
    %v1703 = vsel %vm1015, %v1702, %v1696
    %v1704 = vsel %vm1017, %v1703, %v1700
    %v1706 = vrot.slane %v1704, 3
    %v1708 = vsel %vm191, %v1018, %v1706
    %v1709 = vld [vmem:[%s9] sm:$0xff]
    %v1710 = vld [vmem:[%s9 + $0x8] sm:$0xff]
    %v1711 = vld [vmem:[%s9 + $0x10] sm:$0xff]
    %v1712 = vld [vmem:[%s9 + $0x18] sm:$0xff]
    %v1713 = vld [vmem:[%s10] sm:$0x1]
    %v1715 = vlaneseq
    %v1716 = vshrl.u32 %v1715, 7
    %v1717 = vsub.s32 0, %v1716
    %v1718 = vrot.slane %v1713, %v1717
    %v1721 = vsel %vm195, %v1708, 0
    %v1723 = vsel %vm195, %v1706, 0
    %1725 = vmatprep.subr.mxu0 0.0
    %1726 = vmatpush1.msra.mxu0 %v1709
    %1727 = vmatprep.subr.mxu0 0.0
    %1728 = vmatpush1.msra.mxu0 %v1710
    %1729 = vmatprep.subr.mxu0 0.0
    %1730 = vmatpush1.msra.mxu0 %v1711
    %1731 = vmatprep.subr.mxu0 0.0
    %1732 = vmatpush1.msra.mxu0 %v1712
    %1733 = vmatprep.subr.mxu0 0.0
    %1734 = vmatpush1.msra.mxu0 0.0
    %1735 = vmatprep.subr.mxu0 0.0
    %1736 = vmatpush1.msra.mxu0 0.0
    %1737 = vmatprep.subr.mxu0 0.0
    %1738 = vmatpush1.msra.mxu0 0.0
    %1739 = vmatprep.subr.mxu0 0.0
    %1740 = vmatpush1.msra.mxu0 0.0
    %1741 = vmatprep.subr.mxu0 0.0
    %1742 = vmatpush1.msra.mxu0 0.0
    %1743 = vmatprep.subr.mxu0 0.0
    %1744 = vmatpush1.msra.mxu0 0.0
    %1745 = vmatprep.subr.mxu0 0.0
    %1746 = vmatpush1.msra.mxu0 0.0
    %1747 = vmatprep.subr.mxu0 0.0
    %1748 = vmatpush1.msra.mxu0 0.0
    %1749 = vmatprep.subr.mxu0 0.0
    %1750 = vmatpush1.msra.mxu0 0.0
    %1751 = vmatprep.subr.mxu0 0.0
    %1752 = vmatpush1.msra.mxu0 0.0
    %1753 = vmatprep.subr.mxu0 0.0
    %1754 = vmatpush1.msra.mxu0 0.0
    %1755 = vmatprep.subr.mxu0 0.0
    %1756 = vmatpush1.msra.mxu0 0.0
    %1757 = vmatprep.subr.mxu0 0.0
    %1758 = vmatpush1.msra.mxu0 0.0
    %1759 = vmatprep.subr.mxu0 0.0
    %1760 = vmatpush1.msra.mxu0 0.0
    %1761 = vmatprep.subr.mxu0 0.0
    %1762 = vmatpush1.msra.mxu0 0.0
    %1763 = vmatprep.subr.mxu0 0.0
    %1764 = vmatpush1.msra.mxu0 0.0
    %1765 = vmatprep.subr.mxu0 0.0
    %1766 = vmatpush1.msra.mxu0 0.0
    %1767 = vmatprep.subr.mxu0 0.0
    %1768 = vmatpush1.msra.mxu0 0.0
    %1769 = vmatprep.subr.mxu0 0.0
    %1770 = vmatpush1.msra.mxu0 0.0
    %1771 = vmatprep.subr.mxu0 0.0
    %1772 = vmatpush1.msra.mxu0 0.0
    %1773 = vmatprep.subr.mxu0 0.0
    %1774 = vmatpush1.msra.mxu0 0.0
    %1775 = vmatprep.subr.mxu0 0.0
    %1776 = vmatpush1.msra.mxu0 0.0
    %1777 = vmatprep.subr.mxu0 0.0
    %1778 = vmatpush1.msra.mxu0 0.0
    %1779 = vmatprep.subr.mxu0 0.0
    %1780 = vmatpush1.msra.mxu0 0.0
    %1781 = vmatprep.subr.mxu0 0.0
    %1782 = vmatpush1.msra.mxu0 0.0
    %1783 = vmatprep.subr.mxu0 0.0
    %1784 = vmatpush1.msra.mxu0 0.0
    %1785 = vmatprep.subr.mxu0 0.0
    %1786 = vmatpush1.msra.mxu0 0.0
    %1787 = vmatprep.subr.mxu0 0.0
    %1788 = vmatpush1.msra.mxu0 0.0
    %1789 = vmatprep.mubr.f32.mxu0 0.0
    %1790 = vmatmul.mubr.f32.gmra.mrb[0].mxu0 %v1721
    %v1791 = vpop.f32.mrb[0].mxu0
    %v1792 = vadd.f32 %v1718, %v1791
    %v1793 = vpop.f32.mrb[0].mxu0
    %1794 = vmatprep.mubr.f32.mxu0 0.0
    %1795 = vmatmul.mubr.f32.gmra.mrb[0].mxu0 %v1723
    %v1796 = vpop.f32.mrb[0].mxu0
    %v1797 = vadd.f32 %v1718, %v1796
    %v1798 = vpop.f32.mrb[0].mxu0
    %1799 = vdwg.mxu0
    %v1800 = vadd.f32 %v192, %v1792
    %v1801 = vadd.f32 %v189, %v1797
    %v1802 = vld [vmem:[%s11] sm:$0x1]
    %v1803 = vld [vmem:[%s12] sm:$0x1]
    %v1804 = vsel %vm195, %v1800, 0.0
    %1805 = vadd.xlane.f32.xlu0 %v1804
    %v1806 = vpop.xlane.xlu0 %1805
    %v1807 = vsel %vm199, %v1801, 0.0
    %1808 = vadd.xlane.f32.xlu0 %v1807
    %v1809 = vpop.xlane.xlu0 %1808
    %v1810 = vmul.f32 %v1806, %v203
    %v1811 = vmul.f32 %v1809, %v203
    %v1812 = vsub.f32 %v1800, %v1810
    %v1813 = vsub.f32 %v1801, %v1811
    %v1814 = vmul.f32 %v1812, %v1812
    %v1815 = vmul.f32 %v1813, %v1813
    %v1816 = vsel %vm195, %v1814, 0.0
    %1817 = vadd.xlane.f32.xlu0 %v1816
    %v1818 = vpop.xlane.xlu0 %1817
    %v1819 = vsel %vm199, %v1815, 0.0
    %1820 = vadd.xlane.f32.xlu0 %v1819
    %v1821 = vpop.xlane.xlu0 %1820
    %v1822 = vmul.f32 %v1818, %v203
    %v1823 = vmul.f32 %v1821, %v203
    %v1824 = vadd.f32 %v1822, 1e-06
    %v1825 = vadd.f32 %v1823, 1e-06
    %v1826 = vrsqrt.pop %v1824
    %v1827 = vrsqrt.pop %v1825
    %v1828 = vmul.f32 %v1812, %v1826
    %v1829 = vmul.f32 %v1813, %v1827
    %v1831 = vlaneseq
    %v1832 = vshrl.u32 %v1831, 7
    %v1833 = vsub.s32 0, %v1832
    %v1834 = vrot.slane %v1802, %v1833
    %v1836 = vmul.f32 %v1828, %v1834
    %v1837 = vmul.f32 %v1829, %v1834
    %v1839 = vlaneseq
    %v1840 = vshrl.u32 %v1839, 7
    %v1841 = vsub.s32 0, %v1840
    %v1842 = vrot.slane %v1803, %v1841
    %v1844 = vadd.f32 %v1836, %v1842
    %v1845 = vadd.f32 %v1837, %v1842
    %v1846 = vld [vmem:[%s13] sm:$0xff]
    %v1847 = vld [vmem:[%s13 + $0x8] sm:$0xff]
    %v1848 = vld [vmem:[%s13 + $0x10] sm:$0xff]
    %v1849 = vld [vmem:[%s13 + $0x18] sm:$0xff]
    %v1850 = vld [vmem:[%s14] sm:$0x1]
    %v1852 = vlaneseq
    %v1853 = vshrl.u32 %v1852, 7
    %v1854 = vsub.s32 0, %v1853
    %v1855 = vrot.slane %v1850, %v1854
    %v1858 = vsel %vm195, %v1844, 0
    %v1861 = vsel %vm195, %v1845, 0
    %1863 = vmatprep.subr.mxu0 0.0
    %1864 = vmatpush1.msra.mxu0 %v1846
    %1865 = vmatprep.subr.mxu0 0.0
    %1866 = vmatpush1.msra.mxu0 %v1847
    %1867 = vmatprep.subr.mxu0 0.0
    %1868 = vmatpush1.msra.mxu0 %v1848
    %1869 = vmatprep.subr.mxu0 0.0
    %1870 = vmatpush1.msra.mxu0 %v1849
    %1871 = vmatprep.subr.mxu0 0.0
    %1872 = vmatpush1.msra.mxu0 0.0
    %1873 = vmatprep.subr.mxu0 0.0
    %1874 = vmatpush1.msra.mxu0 0.0
    %1875 = vmatprep.subr.mxu0 0.0
    %1876 = vmatpush1.msra.mxu0 0.0
    %1877 = vmatprep.subr.mxu0 0.0
    %1878 = vmatpush1.msra.mxu0 0.0
    %1879 = vmatprep.subr.mxu0 0.0
    %1880 = vmatpush1.msra.mxu0 0.0
    %1881 = vmatprep.subr.mxu0 0.0
    %1882 = vmatpush1.msra.mxu0 0.0
    %1883 = vmatprep.subr.mxu0 0.0
    %1884 = vmatpush1.msra.mxu0 0.0
    %1885 = vmatprep.subr.mxu0 0.0
    %1886 = vmatpush1.msra.mxu0 0.0
    %1887 = vmatprep.subr.mxu0 0.0
    %1888 = vmatpush1.msra.mxu0 0.0
    %1889 = vmatprep.subr.mxu0 0.0
    %1890 = vmatpush1.msra.mxu0 0.0
    %1891 = vmatprep.subr.mxu0 0.0
    %1892 = vmatpush1.msra.mxu0 0.0
    %1893 = vmatprep.subr.mxu0 0.0
    %1894 = vmatpush1.msra.mxu0 0.0
    %1895 = vmatprep.subr.mxu0 0.0
    %1896 = vmatpush1.msra.mxu0 0.0
    %1897 = vmatprep.subr.mxu0 0.0
    %1898 = vmatpush1.msra.mxu0 0.0
    %1899 = vmatprep.subr.mxu0 0.0
    %1900 = vmatpush1.msra.mxu0 0.0
    %1901 = vmatprep.subr.mxu0 0.0
    %1902 = vmatpush1.msra.mxu0 0.0
    %1903 = vmatprep.subr.mxu0 0.0
    %1904 = vmatpush1.msra.mxu0 0.0
    %1905 = vmatprep.subr.mxu0 0.0
    %1906 = vmatpush1.msra.mxu0 0.0
    %1907 = vmatprep.subr.mxu0 0.0
    %1908 = vmatpush1.msra.mxu0 0.0
    %1909 = vmatprep.subr.mxu0 0.0
    %1910 = vmatpush1.msra.mxu0 0.0
    %1911 = vmatprep.subr.mxu0 0.0
    %1912 = vmatpush1.msra.mxu0 0.0
    %1913 = vmatprep.subr.mxu0 0.0
    %1914 = vmatpush1.msra.mxu0 0.0
    %1915 = vmatprep.subr.mxu0 0.0
    %1916 = vmatpush1.msra.mxu0 0.0
    %1917 = vmatprep.subr.mxu0 0.0
    %1918 = vmatpush1.msra.mxu0 0.0
    %1919 = vmatprep.subr.mxu0 0.0
    %1920 = vmatpush1.msra.mxu0 0.0
    %1921 = vmatprep.subr.mxu0 0.0
    %1922 = vmatpush1.msra.mxu0 0.0
    %1923 = vmatprep.subr.mxu0 0.0
    %1924 = vmatpush1.msra.mxu0 0.0
    %1925 = vmatprep.subr.mxu0 0.0
    %1926 = vmatpush1.msra.mxu0 0.0
    %1927 = vmatprep.mubr.f32.mxu0 0.0
    %1928 = vmatmul.mubr.f32.gmra.mrb[0].mxu0 %v1858
    %v1929 = vpop.f32.mrb[0].mxu0
    %v1930 = vadd.f32 %v1855, %v1929
    %v1931 = vpop.f32.mrb[0].mxu0
    %1932 = vmatprep.mubr.f32.mxu0 0.0
    %1933 = vmatmul.mubr.f32.gmra.mrb[0].mxu0 %v1861
    %v1934 = vpop.f32.mrb[0].mxu0
    %v1935 = vadd.f32 %v1855, %v1934
    %v1936 = vpop.f32.mrb[0].mxu0
    %1937 = vdwg.mxu0
    %v1938 = vmul.f32 %v1930, 0.5
    %v1939 = vmul.f32 %v1935, 0.5
    %v1940 = vmul.f32 %v1930, 0.70710677
    %v1941 = vmul.f32 %v1935, 0.70710677
    %v1942 = vand.u32 2147483647, %v1940
    %v1943 = vand.u32 2147483647, %v1941
    %v1944 = vmul.f32 %v1942, 0.3275911
    %v1945 = vmul.f32 %v1943, 0.3275911
    %v1946 = vadd.f32 %v1944, 1.0
    %v1947 = vadd.f32 %v1945, 1.0
    %v1948 = vrcp.pop %v1946
    %v1949 = vmul.f32 1.0, %v1948
    %v1950 = vrcp.pop %v1947
    %v1951 = vmul.f32 1.0, %v1950
    %v1952 = vmul.f32 %v1949, 1.0614054
    %v1953 = vmul.f32 %v1951, 1.0614054
    %v1954 = vadd.f32 %v1952, -1.4531521
    %v1955 = vadd.f32 %v1953, -1.4531521
    %v1956 = vmul.f32 %v1954, %v1949
    %v1957 = vmul.f32 %v1955, %v1951
    %v1958 = vadd.f32 %v1956, 1.4214138
    %v1959 = vadd.f32 %v1957, 1.4214138
    %v1960 = vmul.f32 %v1958, %v1949
    %v1961 = vmul.f32 %v1959, %v1951
    %v1962 = vadd.f32 %v1960, -0.28449672
    %v1963 = vadd.f32 %v1961, -0.28449672
    %v1964 = vmul.f32 %v1962, %v1949
    %v1965 = vmul.f32 %v1963, %v1951
    %v1966 = vadd.f32 %v1964, 0.2548296
    %v1967 = vadd.f32 %v1965, 0.2548296
    %v1968 = vmul.f32 %v1966, %v1949
    %v1969 = vmul.f32 %v1967, %v1951
    %v1970 = vmul.f32 %v1942, %v1942
    %v1971 = vmul.f32 %v1943, %v1943
    %v1972 = vsub.f32 0.0, %v1970
    %v1973 = vsub.f32 0.0, %v1971
    %v1974 = vmul.f32 %v1972, 1.442695
    %v1975 = vpow.pop %v1974
    %v1976 = vmul.f32 %v1973, 1.442695
    %v1977 = vpow.pop %v1976
    %v1978 = vmul.f32 %v1968, %v1975
    %v1979 = vmul.f32 %v1969, %v1977
    %v1980 = vsub.f32 1.0, %v1978
    %v1981 = vsub.f32 1.0, %v1979
    %vm1982 = vcmp.ge.f32.partialorder %v1940, 0.0
    %vm1983 = vcmp.ge.f32.partialorder %v1941, 0.0
    %v1984 = vsub.f32 0.0, %v1980
    %v1985 = vsub.f32 0.0, %v1981
    %v1986 = vsel %vm1982, %v1980, %v1984
    %v1987 = vsel %vm1983, %v1981, %v1985
    %v1988 = vadd.f32 %v1986, 1.0
    %v1989 = vadd.f32 %v1987, 1.0
    %v1990 = vmul.f32 %v1938, %v1988
    %v1991 = vmul.f32 %v1939, %v1989
    %v1992 = vld [vmem:[%s15] sm:$0xff]
    %v1993 = vld [vmem:[%s15 + $0x8] sm:$0xff]
    %v1994 = vld [vmem:[%s15 + $0x10] sm:$0xff]
    %v1995 = vld [vmem:[%s15 + $0x18] sm:$0xff]
    %v1996 = vld [vmem:[%s15 + $0x20] sm:$0xff]
    %v1997 = vld [vmem:[%s15 + $0x28] sm:$0xff]
    %v1998 = vld [vmem:[%s15 + $0x30] sm:$0xff]
    %v1999 = vld [vmem:[%s15 + $0x38] sm:$0xff]
    %v2000 = vld [vmem:[%s16] sm:$0x1]
    %v2002 = vlaneseq
    %v2003 = vshrl.u32 %v2002, 7
    %v2004 = vsub.s32 0, %v2003
    %v2005 = vrot.slane %v2000, %v2004
    %v2008 = vsel %vm102, %v1990, 0
    %v2011 = vsel %vm102, %v1991, 0
    %2013 = vmatprep.subr.mxu0 0.0
    %2014 = vmatpush1.msra.mxu0 %v1992
    %2015 = vmatprep.subr.mxu0 0.0
    %2016 = vmatpush1.msra.mxu0 %v1993
    %2017 = vmatprep.subr.mxu0 0.0
    %2018 = vmatpush1.msra.mxu0 %v1994
    %2019 = vmatprep.subr.mxu0 0.0
    %2020 = vmatpush1.msra.mxu0 %v1995
    %2021 = vmatprep.subr.mxu0 0.0
    %2022 = vmatpush1.msra.mxu0 %v1996
    %2023 = vmatprep.subr.mxu0 0.0
    %2024 = vmatpush1.msra.mxu0 %v1997
    %2025 = vmatprep.subr.mxu0 0.0
    %2026 = vmatpush1.msra.mxu0 %v1998
    %2027 = vmatprep.subr.mxu0 0.0
    %2028 = vmatpush1.msra.mxu0 %v1999
    %2029 = vmatprep.subr.mxu0 0.0
    %2030 = vmatpush1.msra.mxu0 0.0
    %2031 = vmatprep.subr.mxu0 0.0
    %2032 = vmatpush1.msra.mxu0 0.0
    %2033 = vmatprep.subr.mxu0 0.0
    %2034 = vmatpush1.msra.mxu0 0.0
    %2035 = vmatprep.subr.mxu0 0.0
    %2036 = vmatpush1.msra.mxu0 0.0
    %2037 = vmatprep.subr.mxu0 0.0
    %2038 = vmatpush1.msra.mxu0 0.0
    %2039 = vmatprep.subr.mxu0 0.0
    %2040 = vmatpush1.msra.mxu0 0.0
    %2041 = vmatprep.subr.mxu0 0.0
    %2042 = vmatpush1.msra.mxu0 0.0
    %2043 = vmatprep.subr.mxu0 0.0
    %2044 = vmatpush1.msra.mxu0 0.0
    %2045 = vmatprep.subr.mxu0 0.0
    %2046 = vmatpush1.msra.mxu0 0.0
    %2047 = vmatprep.subr.mxu0 0.0
    %2048 = vmatpush1.msra.mxu0 0.0
    %2049 = vmatprep.subr.mxu0 0.0
    %2050 = vmatpush1.msra.mxu0 0.0
    %2051 = vmatprep.subr.mxu0 0.0
    %2052 = vmatpush1.msra.mxu0 0.0
    %2053 = vmatprep.subr.mxu0 0.0
    %2054 = vmatpush1.msra.mxu0 0.0
    %2055 = vmatprep.subr.mxu0 0.0
    %2056 = vmatpush1.msra.mxu0 0.0
    %2057 = vmatprep.subr.mxu0 0.0
    %2058 = vmatpush1.msra.mxu0 0.0
    %2059 = vmatprep.subr.mxu0 0.0
    %2060 = vmatpush1.msra.mxu0 0.0
    %2061 = vmatprep.subr.mxu0 0.0
    %2062 = vmatpush1.msra.mxu0 0.0
    %2063 = vmatprep.subr.mxu0 0.0
    %2064 = vmatpush1.msra.mxu0 0.0
    %2065 = vmatprep.subr.mxu0 0.0
    %2066 = vmatpush1.msra.mxu0 0.0
    %2067 = vmatprep.subr.mxu0 0.0
    %2068 = vmatpush1.msra.mxu0 0.0
    %2069 = vmatprep.subr.mxu0 0.0
    %2070 = vmatpush1.msra.mxu0 0.0
    %2071 = vmatprep.subr.mxu0 0.0
    %2072 = vmatpush1.msra.mxu0 0.0
    %2073 = vmatprep.subr.mxu0 0.0
    %2074 = vmatpush1.msra.mxu0 0.0
    %2075 = vmatprep.subr.mxu0 0.0
    %2076 = vmatpush1.msra.mxu0 0.0
    %2077 = vmatprep.mubr.f32.mxu0 0.0
    %2078 = vmatmul.mubr.f32.gmra.mrb[0].mxu0 %v2008
    %v2079 = vpop.f32.mrb[0].mxu0
    %v2080 = vadd.f32 %v2005, %v2079
    %v2081 = vpop.f32.mrb[0].mxu0
    %2082 = vmatprep.mubr.f32.mxu0 0.0
    %2083 = vmatmul.mubr.f32.gmra.mrb[0].mxu0 %v2011
    %v2084 = vpop.f32.mrb[0].mxu0
    %v2085 = vadd.f32 %v2005, %v2084
    %v2086 = vpop.f32.mrb[0].mxu0
    %2087 = vdwg.mxu0
    %v2088 = vadd.f32 %v1800, %v2080
    %v2089 = vadd.f32 %v1801, %v2085
    %s2090 = scalar_lea.vmem %s5, 1
    %v2091 = vld [vmem:[%s2090] sm:$0x1]
    %s2092 = scalar_lea.vmem %s6, 1
    %v2093 = vld [vmem:[%s2092] sm:$0x1]
    %v2094 = vsel %vm195, %v2088, 0.0
    %2095 = vadd.xlane.f32.xlu0 %v2094
    %v2096 = vpop.xlane.xlu0 %2095
    %v2097 = vsel %vm199, %v2089, 0.0
    %2098 = vadd.xlane.f32.xlu0 %v2097
    %v2099 = vpop.xlane.xlu0 %2098
    %v2100 = vmul.f32 %v2096, %v203
    %v2101 = vmul.f32 %v2099, %v203
    %v2102 = vsub.f32 %v2088, %v2100
    %v2103 = vsub.f32 %v2089, %v2101
    %v2104 = vmul.f32 %v2102, %v2102
    %v2105 = vmul.f32 %v2103, %v2103
    %v2106 = vsel %vm195, %v2104, 0.0
    %2107 = vadd.xlane.f32.xlu0 %v2106
    %v2108 = vpop.xlane.xlu0 %2107
    %v2109 = vsel %vm199, %v2105, 0.0
    %2110 = vadd.xlane.f32.xlu0 %v2109
    %v2111 = vpop.xlane.xlu0 %2110
    %v2112 = vmul.f32 %v2108, %v203
    %v2113 = vmul.f32 %v2111, %v203
    %v2114 = vadd.f32 %v2112, 1e-06
    %v2115 = vadd.f32 %v2113, 1e-06
    %v2116 = vrsqrt.pop %v2114
    %v2117 = vrsqrt.pop %v2115
    %v2118 = vmul.f32 %v2102, %v2116
    %v2119 = vmul.f32 %v2103, %v2117
    %v2121 = vlaneseq
    %v2122 = vshrl.u32 %v2121, 7
    %v2123 = vsub.s32 0, %v2122
    %v2124 = vrot.slane %v2091, %v2123
    %v2126 = vmul.f32 %v2118, %v2124
    %v2127 = vmul.f32 %v2119, %v2124
    %v2129 = vlaneseq
    %v2130 = vshrl.u32 %v2129, 7
    %v2131 = vsub.s32 0, %v2130
    %v2132 = vrot.slane %v2093, %v2131
    %v2134 = vadd.f32 %v2126, %v2132
    %v2135 = vadd.f32 %v2127, %v2132
    %s2136 = scalar_lea.vmem %s7, 32
    %v2137 = vld [vmem:[%s2136] sm:$0xff]
    %v2138 = vld [vmem:[%s2136 + $0x8] sm:$0xff]
    %v2139 = vld [vmem:[%s2136 + $0x10] sm:$0xff]
    %v2140 = vld [vmem:[%s2136 + $0x18] sm:$0xff]
    %s2141 = scalar_lea.vmem %s8, 1
    %v2142 = vld [vmem:[%s2141] sm:$0x1]
    %v2144 = vlaneseq
    %v2145 = vshrl.u32 %v2144, 7
    %v2146 = vsub.s32 0, %v2145
    %v2147 = vrot.slane %v2142, %v2146
    %v2150 = vsel %vm195, %v2134, 0
    %v2153 = vsel %vm195, %v2135, 0
    %2155 = vmatprep.subr.mxu0 0.0
    %2156 = vmatpush1.msra.mxu0 %v2137
    %2157 = vmatprep.subr.mxu0 0.0
    %2158 = vmatpush1.msra.mxu0 %v2138
    %2159 = vmatprep.subr.mxu0 0.0
    %2160 = vmatpush1.msra.mxu0 %v2139
    %2161 = vmatprep.subr.mxu0 0.0
    %2162 = vmatpush1.msra.mxu0 %v2140
    %2163 = vmatprep.subr.mxu0 0.0
    %2164 = vmatpush1.msra.mxu0 0.0
    %2165 = vmatprep.subr.mxu0 0.0
    %2166 = vmatpush1.msra.mxu0 0.0
    %2167 = vmatprep.subr.mxu0 0.0
    %2168 = vmatpush1.msra.mxu0 0.0
    %2169 = vmatprep.subr.mxu0 0.0
    %2170 = vmatpush1.msra.mxu0 0.0
    %2171 = vmatprep.subr.mxu0 0.0
    %2172 = vmatpush1.msra.mxu0 0.0
    %2173 = vmatprep.subr.mxu0 0.0
    %2174 = vmatpush1.msra.mxu0 0.0
    %2175 = vmatprep.subr.mxu0 0.0
    %2176 = vmatpush1.msra.mxu0 0.0
    %2177 = vmatprep.subr.mxu0 0.0
    %2178 = vmatpush1.msra.mxu0 0.0
    %2179 = vmatprep.subr.mxu0 0.0
    %2180 = vmatpush1.msra.mxu0 0.0
    %2181 = vmatprep.subr.mxu0 0.0
    %2182 = vmatpush1.msra.mxu0 0.0
    %2183 = vmatprep.subr.mxu0 0.0
    %2184 = vmatpush1.msra.mxu0 0.0
    %2185 = vmatprep.subr.mxu0 0.0
    %2186 = vmatpush1.msra.mxu0 0.0
    %2187 = vmatprep.subr.mxu0 0.0
    %2188 = vmatpush1.msra.mxu0 0.0
    %2189 = vmatprep.subr.mxu0 0.0
    %2190 = vmatpush1.msra.mxu0 0.0
    %2191 = vmatprep.subr.mxu0 0.0
    %2192 = vmatpush1.msra.mxu0 0.0
    %2193 = vmatprep.subr.mxu0 0.0
    %2194 = vmatpush1.msra.mxu0 0.0
    %2195 = vmatprep.subr.mxu0 0.0
    %2196 = vmatpush1.msra.mxu0 0.0
    %2197 = vmatprep.subr.mxu0 0.0
    %2198 = vmatpush1.msra.mxu0 0.0
    %2199 = vmatprep.subr.mxu0 0.0
    %2200 = vmatpush1.msra.mxu0 0.0
    %2201 = vmatprep.subr.mxu0 0.0
    %2202 = vmatpush1.msra.mxu0 0.0
    %2203 = vmatprep.subr.mxu0 0.0
    %2204 = vmatpush1.msra.mxu0 0.0
    %2205 = vmatprep.subr.mxu0 0.0
    %2206 = vmatpush1.msra.mxu0 0.0
    %2207 = vmatprep.subr.mxu0 0.0
    %2208 = vmatpush1.msra.mxu0 0.0
    %2209 = vmatprep.subr.mxu0 0.0
    %2210 = vmatpush1.msra.mxu0 0.0
    %2211 = vmatprep.subr.mxu0 0.0
    %2212 = vmatpush1.msra.mxu0 0.0
    %2213 = vmatprep.subr.mxu0 0.0
    %2214 = vmatpush1.msra.mxu0 0.0
    %2215 = vmatprep.subr.mxu0 0.0
    %2216 = vmatpush1.msra.mxu0 0.0
    %2217 = vmatprep.subr.mxu0 0.0
    %2218 = vmatpush1.msra.mxu0 0.0
    %2219 = vmatprep.mubr.f32.mxu0 0.0
    %2220 = vmatmul.mubr.f32.gmra.mrb[0].mxu0 %v2150
    %v2221 = vpop.f32.mrb[0].mxu0
    %v2222 = vadd.f32 %v2147, %v2221
    %v2223 = vpop.f32.mrb[0].mxu0
    %2224 = vmatprep.mubr.f32.mxu0 0.0
    %2225 = vmatmul.mubr.f32.gmra.mrb[0].mxu0 %v2153
    %v2226 = vpop.f32.mrb[0].mxu0
    %v2227 = vadd.f32 %v2147, %v2226
    %v2228 = vpop.f32.mrb[0].mxu0
    %2229 = vdwg.mxu0
    %2231 = vrot.lane.b32.xlu0 %v2222, 96
    %v2232 = vpop.permute.xlu0 %2231
    %v2233 = vsel %vm335, %v2222, 0
    %v2235 = vsel %vm335, %v2232, 0
    %2237 = vmatprep.subr.mxu0 0.0
    %2238 = vmatpush1.xpose.msra.mxu0 %v2235
    %2239 = vmatprep.subr.mxu0 0.0
    %2240 = vmatpush1.xpose.msra.mxu0 0.0
    %2241 = vmatprep.subr.mxu0 0.0
    %2242 = vmatpush1.xpose.msra.mxu0 0.0
    %2243 = vmatprep.subr.mxu0 0.0
    %2244 = vmatpush1.xpose.msra.mxu0 0.0
    %2245 = vmatprep.subr.mxu0 0.0
    %2246 = vmatpush1.xpose.msra.mxu0 0.0
    %2247 = vmatprep.subr.mxu0 0.0
    %2248 = vmatpush1.xpose.msra.mxu0 0.0
    %2249 = vmatprep.subr.mxu0 0.0
    %2250 = vmatpush1.xpose.msra.mxu0 0.0
    %2251 = vmatprep.subr.mxu0 0.0
    %2252 = vmatpush1.xpose.msra.mxu0 0.0
    %2253 = vmatprep.subr.mxu0 0.0
    %2254 = vmatpush1.xpose.msra.mxu0 0.0
    %2255 = vmatprep.subr.mxu0 0.0
    %2256 = vmatpush1.xpose.msra.mxu0 0.0
    %2257 = vmatprep.subr.mxu0 0.0
    %2258 = vmatpush1.xpose.msra.mxu0 0.0
    %2259 = vmatprep.subr.mxu0 0.0
    %2260 = vmatpush1.xpose.msra.mxu0 0.0
    %2261 = vmatprep.subr.mxu0 0.0
    %2262 = vmatpush1.xpose.msra.mxu0 0.0
    %2263 = vmatprep.subr.mxu0 0.0
    %2264 = vmatpush1.xpose.msra.mxu0 0.0
    %2265 = vmatprep.subr.mxu0 0.0
    %2266 = vmatpush1.xpose.msra.mxu0 0.0
    %2267 = vmatprep.subr.mxu0 0.0
    %2268 = vmatpush1.xpose.msra.mxu0 0.0
    %2269 = vmatprep.subr.mxu0 0.0
    %2270 = vmatpush1.xpose.msra.mxu0 0.0
    %2271 = vmatprep.subr.mxu0 0.0
    %2272 = vmatpush1.xpose.msra.mxu0 0.0
    %2273 = vmatprep.subr.mxu0 0.0
    %2274 = vmatpush1.xpose.msra.mxu0 0.0
    %2275 = vmatprep.subr.mxu0 0.0
    %2276 = vmatpush1.xpose.msra.mxu0 0.0
    %2277 = vmatprep.subr.mxu0 0.0
    %2278 = vmatpush1.xpose.msra.mxu0 0.0
    %2279 = vmatprep.subr.mxu0 0.0
    %2280 = vmatpush1.xpose.msra.mxu0 0.0
    %2281 = vmatprep.subr.mxu0 0.0
    %2282 = vmatpush1.xpose.msra.mxu0 0.0
    %2283 = vmatprep.subr.mxu0 0.0
    %2284 = vmatpush1.xpose.msra.mxu0 0.0
    %2285 = vmatprep.subr.mxu0 0.0
    %2286 = vmatpush1.xpose.msra.mxu0 0.0
    %2287 = vmatprep.subr.mxu0 0.0
    %2288 = vmatpush1.xpose.msra.mxu0 0.0
    %2289 = vmatprep.subr.mxu0 0.0
    %2290 = vmatpush1.xpose.msra.mxu0 0.0
    %2291 = vmatprep.subr.mxu0 0.0
    %2292 = vmatpush1.xpose.msra.mxu0 0.0
    %2293 = vmatprep.subr.mxu0 0.0
    %2294 = vmatpush1.xpose.msra.mxu0 0.0
    %2295 = vmatprep.subr.mxu0 0.0
    %2296 = vmatpush1.xpose.msra.mxu0 0.0
    %2297 = vmatprep.subr.mxu0 0.0
    %2298 = vmatpush1.xpose.msra.mxu0 0.0
    %2299 = vmatprep.subr.mxu0 0.0
    %2300 = vmatpush1.xpose.msra.mxu0 0.0
    %2301 = vmatprep.mubr.f32.mxu0 0.0
    %2302 = vmatmul.mubr.f32.gmra.mrb[0].mxu0 %v2233
    %v2303 = vpop.f32.mrb[0].mxu0
    %v2304 = vadd.f32 0.0, %v2303
    %v2305 = vpop.f32.mrb[0].mxu0
    %2306 = vdwg.mxu0
    %v2307 = vmul.f32 %v2304, 0.35355338
    %v2308 = vsel %vm411, %v2307, -inf
    %2309 = vmax.xlane.f32.xlu0 %v2308
    %v2310 = vpop.xlane.xlu0 %2309
    %v2311 = vsub.f32 %v2307, %v2310
    %v2312 = vmul.f32 %v2311, 1.442695
    %v2313 = vpow.pop %v2312
    %v2314 = vsel %vm411, %v2313, 0.0
    %2315 = vadd.xlane.f32.xlu0 %v2314
    %v2316 = vpop.xlane.xlu0 %2315
    %v2317 = vrcp.pop %v2316
    %v2318 = vmul.f32 %v2313, %v2317
    %2319 = vrot.lane.b32.xlu0 %v2222, 64
    %v2320 = vpop.permute.xlu0 %2319
    %v2322 = vsel %vm425, %v2318, 0
    %v2324 = vsel %vm191, %v2320, 0
    %2326 = vmatprep.subr.mxu0 0.0
    %2327 = vmatpush1.msra.mxu0 %v2324
    %2328 = vmatprep.subr.mxu0 0.0
    %2329 = vmatpush1.msra.mxu0 0.0
    %2330 = vmatprep.subr.mxu0 0.0
    %2331 = vmatpush1.msra.mxu0 0.0
    %2332 = vmatprep.subr.mxu0 0.0
    %2333 = vmatpush1.msra.mxu0 0.0
    %2334 = vmatprep.subr.mxu0 0.0
    %2335 = vmatpush1.msra.mxu0 0.0
    %2336 = vmatprep.subr.mxu0 0.0
    %2337 = vmatpush1.msra.mxu0 0.0
    %2338 = vmatprep.subr.mxu0 0.0
    %2339 = vmatpush1.msra.mxu0 0.0
    %2340 = vmatprep.subr.mxu0 0.0
    %2341 = vmatpush1.msra.mxu0 0.0
    %2342 = vmatprep.subr.mxu0 0.0
    %2343 = vmatpush1.msra.mxu0 0.0
    %2344 = vmatprep.subr.mxu0 0.0
    %2345 = vmatpush1.msra.mxu0 0.0
    %2346 = vmatprep.subr.mxu0 0.0
    %2347 = vmatpush1.msra.mxu0 0.0
    %2348 = vmatprep.subr.mxu0 0.0
    %2349 = vmatpush1.msra.mxu0 0.0
    %2350 = vmatprep.subr.mxu0 0.0
    %2351 = vmatpush1.msra.mxu0 0.0
    %2352 = vmatprep.subr.mxu0 0.0
    %2353 = vmatpush1.msra.mxu0 0.0
    %2354 = vmatprep.subr.mxu0 0.0
    %2355 = vmatpush1.msra.mxu0 0.0
    %2356 = vmatprep.subr.mxu0 0.0
    %2357 = vmatpush1.msra.mxu0 0.0
    %2358 = vmatprep.subr.mxu0 0.0
    %2359 = vmatpush1.msra.mxu0 0.0
    %2360 = vmatprep.subr.mxu0 0.0
    %2361 = vmatpush1.msra.mxu0 0.0
    %2362 = vmatprep.subr.mxu0 0.0
    %2363 = vmatpush1.msra.mxu0 0.0
    %2364 = vmatprep.subr.mxu0 0.0
    %2365 = vmatpush1.msra.mxu0 0.0
    %2366 = vmatprep.subr.mxu0 0.0
    %2367 = vmatpush1.msra.mxu0 0.0
    %2368 = vmatprep.subr.mxu0 0.0
    %2369 = vmatpush1.msra.mxu0 0.0
    %2370 = vmatprep.subr.mxu0 0.0
    %2371 = vmatpush1.msra.mxu0 0.0
    %2372 = vmatprep.subr.mxu0 0.0
    %2373 = vmatpush1.msra.mxu0 0.0
    %2374 = vmatprep.subr.mxu0 0.0
    %2375 = vmatpush1.msra.mxu0 0.0
    %2376 = vmatprep.subr.mxu0 0.0
    %2377 = vmatpush1.msra.mxu0 0.0
    %2378 = vmatprep.subr.mxu0 0.0
    %2379 = vmatpush1.msra.mxu0 0.0
    %2380 = vmatprep.subr.mxu0 0.0
    %2381 = vmatpush1.msra.mxu0 0.0
    %2382 = vmatprep.subr.mxu0 0.0
    %2383 = vmatpush1.msra.mxu0 0.0
    %2384 = vmatprep.subr.mxu0 0.0
    %2385 = vmatpush1.msra.mxu0 0.0
    %2386 = vmatprep.subr.mxu0 0.0
    %2387 = vmatpush1.msra.mxu0 0.0
    %2388 = vmatprep.subr.mxu0 0.0
    %2389 = vmatpush1.msra.mxu0 0.0
    %2390 = vmatprep.mubr.f32.mxu0 0.0
    %2391 = vmatmul.mubr.f32.gmra.mrb[0].mxu0 %v2322
    %v2392 = vpop.f32.mrb[0].mxu0
    %v2393 = vadd.f32 0.0, %v2392
    %v2394 = vpop.f32.mrb[0].mxu0
    %2395 = vdwg.mxu0
    %2396 = vrot.lane.b32.xlu0 %v2222, 120
    %v2397 = vpop.permute.xlu0 %2396
    %2398 = vrot.lane.b32.xlu0 %v2222, 88
    %v2399 = vpop.permute.xlu0 %2398
    %v2400 = vsel %vm335, %v2397, 0
    %v2402 = vsel %vm335, %v2399, 0
    %2404 = vmatprep.subr.mxu0 0.0
    %2405 = vmatpush1.xpose.msra.mxu0 %v2402
    %2406 = vmatprep.subr.mxu0 0.0
    %2407 = vmatpush1.xpose.msra.mxu0 0.0
    %2408 = vmatprep.subr.mxu0 0.0
    %2409 = vmatpush1.xpose.msra.mxu0 0.0
    %2410 = vmatprep.subr.mxu0 0.0
    %2411 = vmatpush1.xpose.msra.mxu0 0.0
    %2412 = vmatprep.subr.mxu0 0.0
    %2413 = vmatpush1.xpose.msra.mxu0 0.0
    %2414 = vmatprep.subr.mxu0 0.0
    %2415 = vmatpush1.xpose.msra.mxu0 0.0
    %2416 = vmatprep.subr.mxu0 0.0
    %2417 = vmatpush1.xpose.msra.mxu0 0.0
    %2418 = vmatprep.subr.mxu0 0.0
    %2419 = vmatpush1.xpose.msra.mxu0 0.0
    %2420 = vmatprep.subr.mxu0 0.0
    %2421 = vmatpush1.xpose.msra.mxu0 0.0
    %2422 = vmatprep.subr.mxu0 0.0
    %2423 = vmatpush1.xpose.msra.mxu0 0.0
    %2424 = vmatprep.subr.mxu0 0.0
    %2425 = vmatpush1.xpose.msra.mxu0 0.0
    %2426 = vmatprep.subr.mxu0 0.0
    %2427 = vmatpush1.xpose.msra.mxu0 0.0
    %2428 = vmatprep.subr.mxu0 0.0
    %2429 = vmatpush1.xpose.msra.mxu0 0.0
    %2430 = vmatprep.subr.mxu0 0.0
    %2431 = vmatpush1.xpose.msra.mxu0 0.0
    %2432 = vmatprep.subr.mxu0 0.0
    %2433 = vmatpush1.xpose.msra.mxu0 0.0
    %2434 = vmatprep.subr.mxu0 0.0
    %2435 = vmatpush1.xpose.msra.mxu0 0.0
    %2436 = vmatprep.subr.mxu0 0.0
    %2437 = vmatpush1.xpose.msra.mxu0 0.0
    %2438 = vmatprep.subr.mxu0 0.0
    %2439 = vmatpush1.xpose.msra.mxu0 0.0
    %2440 = vmatprep.subr.mxu0 0.0
    %2441 = vmatpush1.xpose.msra.mxu0 0.0
    %2442 = vmatprep.subr.mxu0 0.0
    %2443 = vmatpush1.xpose.msra.mxu0 0.0
    %2444 = vmatprep.subr.mxu0 0.0
    %2445 = vmatpush1.xpose.msra.mxu0 0.0
    %2446 = vmatprep.subr.mxu0 0.0
    %2447 = vmatpush1.xpose.msra.mxu0 0.0
    %2448 = vmatprep.subr.mxu0 0.0
    %2449 = vmatpush1.xpose.msra.mxu0 0.0
    %2450 = vmatprep.subr.mxu0 0.0
    %2451 = vmatpush1.xpose.msra.mxu0 0.0
    %2452 = vmatprep.subr.mxu0 0.0
    %2453 = vmatpush1.xpose.msra.mxu0 0.0
    %2454 = vmatprep.subr.mxu0 0.0
    %2455 = vmatpush1.xpose.msra.mxu0 0.0
    %2456 = vmatprep.subr.mxu0 0.0
    %2457 = vmatpush1.xpose.msra.mxu0 0.0
    %2458 = vmatprep.subr.mxu0 0.0
    %2459 = vmatpush1.xpose.msra.mxu0 0.0
    %2460 = vmatprep.subr.mxu0 0.0
    %2461 = vmatpush1.xpose.msra.mxu0 0.0
    %2462 = vmatprep.subr.mxu0 0.0
    %2463 = vmatpush1.xpose.msra.mxu0 0.0
    %2464 = vmatprep.subr.mxu0 0.0
    %2465 = vmatpush1.xpose.msra.mxu0 0.0
    %2466 = vmatprep.subr.mxu0 0.0
    %2467 = vmatpush1.xpose.msra.mxu0 0.0
    %2468 = vmatprep.mubr.f32.mxu0 0.0
    %2469 = vmatmul.mubr.f32.gmra.mrb[0].mxu0 %v2400
    %v2470 = vpop.f32.mrb[0].mxu0
    %v2471 = vadd.f32 0.0, %v2470
    %v2472 = vpop.f32.mrb[0].mxu0
    %2473 = vdwg.mxu0
    %v2474 = vmul.f32 %v2471, 0.35355338
    %v2475 = vsel %vm411, %v2474, -inf
    %2476 = vmax.xlane.f32.xlu0 %v2475
    %v2477 = vpop.xlane.xlu0 %2476
    %v2478 = vsub.f32 %v2474, %v2477
    %v2479 = vmul.f32 %v2478, 1.442695
    %v2480 = vpow.pop %v2479
    %v2481 = vsel %vm411, %v2480, 0.0
    %2482 = vadd.xlane.f32.xlu0 %v2481
    %v2483 = vpop.xlane.xlu0 %2482
    %v2484 = vrcp.pop %v2483
    %v2485 = vmul.f32 %v2480, %v2484
    %2486 = vrot.lane.b32.xlu0 %v2222, 56
    %v2487 = vpop.permute.xlu0 %2486
    %v2489 = vsel %vm425, %v2485, 0
    %v2491 = vsel %vm191, %v2487, 0
    %2493 = vmatprep.subr.mxu0 0.0
    %2494 = vmatpush1.msra.mxu0 %v2491
    %2495 = vmatprep.subr.mxu0 0.0
    %2496 = vmatpush1.msra.mxu0 0.0
    %2497 = vmatprep.subr.mxu0 0.0
    %2498 = vmatpush1.msra.mxu0 0.0
    %2499 = vmatprep.subr.mxu0 0.0
    %2500 = vmatpush1.msra.mxu0 0.0
    %2501 = vmatprep.subr.mxu0 0.0
    %2502 = vmatpush1.msra.mxu0 0.0
    %2503 = vmatprep.subr.mxu0 0.0
    %2504 = vmatpush1.msra.mxu0 0.0
    %2505 = vmatprep.subr.mxu0 0.0
    %2506 = vmatpush1.msra.mxu0 0.0
    %2507 = vmatprep.subr.mxu0 0.0
    %2508 = vmatpush1.msra.mxu0 0.0
    %2509 = vmatprep.subr.mxu0 0.0
    %2510 = vmatpush1.msra.mxu0 0.0
    %2511 = vmatprep.subr.mxu0 0.0
    %2512 = vmatpush1.msra.mxu0 0.0
    %2513 = vmatprep.subr.mxu0 0.0
    %2514 = vmatpush1.msra.mxu0 0.0
    %2515 = vmatprep.subr.mxu0 0.0
    %2516 = vmatpush1.msra.mxu0 0.0
    %2517 = vmatprep.subr.mxu0 0.0
    %2518 = vmatpush1.msra.mxu0 0.0
    %2519 = vmatprep.subr.mxu0 0.0
    %2520 = vmatpush1.msra.mxu0 0.0
    %2521 = vmatprep.subr.mxu0 0.0
    %2522 = vmatpush1.msra.mxu0 0.0
    %2523 = vmatprep.subr.mxu0 0.0
    %2524 = vmatpush1.msra.mxu0 0.0
    %2525 = vmatprep.subr.mxu0 0.0
    %2526 = vmatpush1.msra.mxu0 0.0
    %2527 = vmatprep.subr.mxu0 0.0
    %2528 = vmatpush1.msra.mxu0 0.0
    %2529 = vmatprep.subr.mxu0 0.0
    %2530 = vmatpush1.msra.mxu0 0.0
    %2531 = vmatprep.subr.mxu0 0.0
    %2532 = vmatpush1.msra.mxu0 0.0
    %2533 = vmatprep.subr.mxu0 0.0
    %2534 = vmatpush1.msra.mxu0 0.0
    %2535 = vmatprep.subr.mxu0 0.0
    %2536 = vmatpush1.msra.mxu0 0.0
    %2537 = vmatprep.subr.mxu0 0.0
    %2538 = vmatpush1.msra.mxu0 0.0
    %2539 = vmatprep.subr.mxu0 0.0
    %2540 = vmatpush1.msra.mxu0 0.0
    %2541 = vmatprep.subr.mxu0 0.0
    %2542 = vmatpush1.msra.mxu0 0.0
    %2543 = vmatprep.subr.mxu0 0.0
    %2544 = vmatpush1.msra.mxu0 0.0
    %2545 = vmatprep.subr.mxu0 0.0
    %2546 = vmatpush1.msra.mxu0 0.0
    %2547 = vmatprep.subr.mxu0 0.0
    %2548 = vmatpush1.msra.mxu0 0.0
    %2549 = vmatprep.subr.mxu0 0.0
    %2550 = vmatpush1.msra.mxu0 0.0
    %2551 = vmatprep.subr.mxu0 0.0
    %2552 = vmatpush1.msra.mxu0 0.0
    %2553 = vmatprep.subr.mxu0 0.0
    %2554 = vmatpush1.msra.mxu0 0.0
    %2555 = vmatprep.subr.mxu0 0.0
    %2556 = vmatpush1.msra.mxu0 0.0
    %2557 = vmatprep.mubr.f32.mxu0 0.0
    %2558 = vmatmul.mubr.f32.gmra.mrb[0].mxu0 %v2489
    %v2559 = vpop.f32.mrb[0].mxu0
    %v2560 = vadd.f32 0.0, %v2559
    %v2561 = vpop.f32.mrb[0].mxu0
    %2562 = vdwg.mxu0
    %2563 = vrot.lane.b32.xlu0 %v2222, 112
    %v2564 = vpop.permute.xlu0 %2563
    %2565 = vrot.lane.b32.xlu0 %v2222, 80
    %v2566 = vpop.permute.xlu0 %2565
    %v2567 = vsel %vm335, %v2564, 0
    %v2569 = vsel %vm335, %v2566, 0
    %2571 = vmatprep.subr.mxu0 0.0
    %2572 = vmatpush1.xpose.msra.mxu0 %v2569
    %2573 = vmatprep.subr.mxu0 0.0
    %2574 = vmatpush1.xpose.msra.mxu0 0.0
    %2575 = vmatprep.subr.mxu0 0.0
    %2576 = vmatpush1.xpose.msra.mxu0 0.0
    %2577 = vmatprep.subr.mxu0 0.0
    %2578 = vmatpush1.xpose.msra.mxu0 0.0
    %2579 = vmatprep.subr.mxu0 0.0
    %2580 = vmatpush1.xpose.msra.mxu0 0.0
    %2581 = vmatprep.subr.mxu0 0.0
    %2582 = vmatpush1.xpose.msra.mxu0 0.0
    %2583 = vmatprep.subr.mxu0 0.0
    %2584 = vmatpush1.xpose.msra.mxu0 0.0
    %2585 = vmatprep.subr.mxu0 0.0
    %2586 = vmatpush1.xpose.msra.mxu0 0.0
    %2587 = vmatprep.subr.mxu0 0.0
    %2588 = vmatpush1.xpose.msra.mxu0 0.0
    %2589 = vmatprep.subr.mxu0 0.0
    %2590 = vmatpush1.xpose.msra.mxu0 0.0
    %2591 = vmatprep.subr.mxu0 0.0
    %2592 = vmatpush1.xpose.msra.mxu0 0.0
    %2593 = vmatprep.subr.mxu0 0.0
    %2594 = vmatpush1.xpose.msra.mxu0 0.0
    %2595 = vmatprep.subr.mxu0 0.0
    %2596 = vmatpush1.xpose.msra.mxu0 0.0
    %2597 = vmatprep.subr.mxu0 0.0
    %2598 = vmatpush1.xpose.msra.mxu0 0.0
    %2599 = vmatprep.subr.mxu0 0.0
    %2600 = vmatpush1.xpose.msra.mxu0 0.0
    %2601 = vmatprep.subr.mxu0 0.0
    %2602 = vmatpush1.xpose.msra.mxu0 0.0
    %2603 = vmatprep.subr.mxu0 0.0
    %2604 = vmatpush1.xpose.msra.mxu0 0.0
    %2605 = vmatprep.subr.mxu0 0.0
    %2606 = vmatpush1.xpose.msra.mxu0 0.0
    %2607 = vmatprep.subr.mxu0 0.0
    %2608 = vmatpush1.xpose.msra.mxu0 0.0
    %2609 = vmatprep.subr.mxu0 0.0
    %2610 = vmatpush1.xpose.msra.mxu0 0.0
    %2611 = vmatprep.subr.mxu0 0.0
    %2612 = vmatpush1.xpose.msra.mxu0 0.0
    %2613 = vmatprep.subr.mxu0 0.0
    %2614 = vmatpush1.xpose.msra.mxu0 0.0
    %2615 = vmatprep.subr.mxu0 0.0
    %2616 = vmatpush1.xpose.msra.mxu0 0.0
    %2617 = vmatprep.subr.mxu0 0.0
    %2618 = vmatpush1.xpose.msra.mxu0 0.0
    %2619 = vmatprep.subr.mxu0 0.0
    %2620 = vmatpush1.xpose.msra.mxu0 0.0
    %2621 = vmatprep.subr.mxu0 0.0
    %2622 = vmatpush1.xpose.msra.mxu0 0.0
    %2623 = vmatprep.subr.mxu0 0.0
    %2624 = vmatpush1.xpose.msra.mxu0 0.0
    %2625 = vmatprep.subr.mxu0 0.0
    %2626 = vmatpush1.xpose.msra.mxu0 0.0
    %2627 = vmatprep.subr.mxu0 0.0
    %2628 = vmatpush1.xpose.msra.mxu0 0.0
    %2629 = vmatprep.subr.mxu0 0.0
    %2630 = vmatpush1.xpose.msra.mxu0 0.0
    %2631 = vmatprep.subr.mxu0 0.0
    %2632 = vmatpush1.xpose.msra.mxu0 0.0
    %2633 = vmatprep.subr.mxu0 0.0
    %2634 = vmatpush1.xpose.msra.mxu0 0.0
    %2635 = vmatprep.mubr.f32.mxu0 0.0
    %2636 = vmatmul.mubr.f32.gmra.mrb[0].mxu0 %v2567
    %v2637 = vpop.f32.mrb[0].mxu0
    %v2638 = vadd.f32 0.0, %v2637
    %v2639 = vpop.f32.mrb[0].mxu0
    %2640 = vdwg.mxu0
    %v2641 = vmul.f32 %v2638, 0.35355338
    %v2642 = vsel %vm411, %v2641, -inf
    %2643 = vmax.xlane.f32.xlu0 %v2642
    %v2644 = vpop.xlane.xlu0 %2643
    %v2645 = vsub.f32 %v2641, %v2644
    %v2646 = vmul.f32 %v2645, 1.442695
    %v2647 = vpow.pop %v2646
    %v2648 = vsel %vm411, %v2647, 0.0
    %2649 = vadd.xlane.f32.xlu0 %v2648
    %v2650 = vpop.xlane.xlu0 %2649
    %v2651 = vrcp.pop %v2650
    %v2652 = vmul.f32 %v2647, %v2651
    %2653 = vrot.lane.b32.xlu0 %v2222, 48
    %v2654 = vpop.permute.xlu0 %2653
    %v2656 = vsel %vm425, %v2652, 0
    %v2658 = vsel %vm191, %v2654, 0
    %2660 = vmatprep.subr.mxu0 0.0
    %2661 = vmatpush1.msra.mxu0 %v2658
    %2662 = vmatprep.subr.mxu0 0.0
    %2663 = vmatpush1.msra.mxu0 0.0
    %2664 = vmatprep.subr.mxu0 0.0
    %2665 = vmatpush1.msra.mxu0 0.0
    %2666 = vmatprep.subr.mxu0 0.0
    %2667 = vmatpush1.msra.mxu0 0.0
    %2668 = vmatprep.subr.mxu0 0.0
    %2669 = vmatpush1.msra.mxu0 0.0
    %2670 = vmatprep.subr.mxu0 0.0
    %2671 = vmatpush1.msra.mxu0 0.0
    %2672 = vmatprep.subr.mxu0 0.0
    %2673 = vmatpush1.msra.mxu0 0.0
    %2674 = vmatprep.subr.mxu0 0.0
    %2675 = vmatpush1.msra.mxu0 0.0
    %2676 = vmatprep.subr.mxu0 0.0
    %2677 = vmatpush1.msra.mxu0 0.0
    %2678 = vmatprep.subr.mxu0 0.0
    %2679 = vmatpush1.msra.mxu0 0.0
    %2680 = vmatprep.subr.mxu0 0.0
    %2681 = vmatpush1.msra.mxu0 0.0
    %2682 = vmatprep.subr.mxu0 0.0
    %2683 = vmatpush1.msra.mxu0 0.0
    %2684 = vmatprep.subr.mxu0 0.0
    %2685 = vmatpush1.msra.mxu0 0.0
    %2686 = vmatprep.subr.mxu0 0.0
    %2687 = vmatpush1.msra.mxu0 0.0
    %2688 = vmatprep.subr.mxu0 0.0
    %2689 = vmatpush1.msra.mxu0 0.0
    %2690 = vmatprep.subr.mxu0 0.0
    %2691 = vmatpush1.msra.mxu0 0.0
    %2692 = vmatprep.subr.mxu0 0.0
    %2693 = vmatpush1.msra.mxu0 0.0
    %2694 = vmatprep.subr.mxu0 0.0
    %2695 = vmatpush1.msra.mxu0 0.0
    %2696 = vmatprep.subr.mxu0 0.0
    %2697 = vmatpush1.msra.mxu0 0.0
    %2698 = vmatprep.subr.mxu0 0.0
    %2699 = vmatpush1.msra.mxu0 0.0
    %2700 = vmatprep.subr.mxu0 0.0
    %2701 = vmatpush1.msra.mxu0 0.0
    %2702 = vmatprep.subr.mxu0 0.0
    %2703 = vmatpush1.msra.mxu0 0.0
    %2704 = vmatprep.subr.mxu0 0.0
    %2705 = vmatpush1.msra.mxu0 0.0
    %2706 = vmatprep.subr.mxu0 0.0
    %2707 = vmatpush1.msra.mxu0 0.0
    %2708 = vmatprep.subr.mxu0 0.0
    %2709 = vmatpush1.msra.mxu0 0.0
    %2710 = vmatprep.subr.mxu0 0.0
    %2711 = vmatpush1.msra.mxu0 0.0
    %2712 = vmatprep.subr.mxu0 0.0
    %2713 = vmatpush1.msra.mxu0 0.0
    %2714 = vmatprep.subr.mxu0 0.0
    %2715 = vmatpush1.msra.mxu0 0.0
    %2716 = vmatprep.subr.mxu0 0.0
    %2717 = vmatpush1.msra.mxu0 0.0
    %2718 = vmatprep.subr.mxu0 0.0
    %2719 = vmatpush1.msra.mxu0 0.0
    %2720 = vmatprep.subr.mxu0 0.0
    %2721 = vmatpush1.msra.mxu0 0.0
    %2722 = vmatprep.subr.mxu0 0.0
    %2723 = vmatpush1.msra.mxu0 0.0
    %2724 = vmatprep.mubr.f32.mxu0 0.0
    %2725 = vmatmul.mubr.f32.gmra.mrb[0].mxu0 %v2656
    %v2726 = vpop.f32.mrb[0].mxu0
    %v2727 = vadd.f32 0.0, %v2726
    %v2728 = vpop.f32.mrb[0].mxu0
    %2729 = vdwg.mxu0
    %2730 = vrot.lane.b32.xlu0 %v2222, 104
    %v2731 = vpop.permute.xlu0 %2730
    %2732 = vrot.lane.b32.xlu0 %v2222, 72
    %v2733 = vpop.permute.xlu0 %2732
    %v2734 = vsel %vm335, %v2731, 0
    %v2736 = vsel %vm335, %v2733, 0
    %2738 = vmatprep.subr.mxu0 0.0
    %2739 = vmatpush1.xpose.msra.mxu0 %v2736
    %2740 = vmatprep.subr.mxu0 0.0
    %2741 = vmatpush1.xpose.msra.mxu0 0.0
    %2742 = vmatprep.subr.mxu0 0.0
    %2743 = vmatpush1.xpose.msra.mxu0 0.0
    %2744 = vmatprep.subr.mxu0 0.0
    %2745 = vmatpush1.xpose.msra.mxu0 0.0
    %2746 = vmatprep.subr.mxu0 0.0
    %2747 = vmatpush1.xpose.msra.mxu0 0.0
    %2748 = vmatprep.subr.mxu0 0.0
    %2749 = vmatpush1.xpose.msra.mxu0 0.0
    %2750 = vmatprep.subr.mxu0 0.0
    %2751 = vmatpush1.xpose.msra.mxu0 0.0
    %2752 = vmatprep.subr.mxu0 0.0
    %2753 = vmatpush1.xpose.msra.mxu0 0.0
    %2754 = vmatprep.subr.mxu0 0.0
    %2755 = vmatpush1.xpose.msra.mxu0 0.0
    %2756 = vmatprep.subr.mxu0 0.0
    %2757 = vmatpush1.xpose.msra.mxu0 0.0
    %2758 = vmatprep.subr.mxu0 0.0
    %2759 = vmatpush1.xpose.msra.mxu0 0.0
    %2760 = vmatprep.subr.mxu0 0.0
    %2761 = vmatpush1.xpose.msra.mxu0 0.0
    %2762 = vmatprep.subr.mxu0 0.0
    %2763 = vmatpush1.xpose.msra.mxu0 0.0
    %2764 = vmatprep.subr.mxu0 0.0
    %2765 = vmatpush1.xpose.msra.mxu0 0.0
    %2766 = vmatprep.subr.mxu0 0.0
    %2767 = vmatpush1.xpose.msra.mxu0 0.0
    %2768 = vmatprep.subr.mxu0 0.0
    %2769 = vmatpush1.xpose.msra.mxu0 0.0
    %2770 = vmatprep.subr.mxu0 0.0
    %2771 = vmatpush1.xpose.msra.mxu0 0.0
    %2772 = vmatprep.subr.mxu0 0.0
    %2773 = vmatpush1.xpose.msra.mxu0 0.0
    %2774 = vmatprep.subr.mxu0 0.0
    %2775 = vmatpush1.xpose.msra.mxu0 0.0
    %2776 = vmatprep.subr.mxu0 0.0
    %2777 = vmatpush1.xpose.msra.mxu0 0.0
    %2778 = vmatprep.subr.mxu0 0.0
    %2779 = vmatpush1.xpose.msra.mxu0 0.0
    %2780 = vmatprep.subr.mxu0 0.0
    %2781 = vmatpush1.xpose.msra.mxu0 0.0
    %2782 = vmatprep.subr.mxu0 0.0
    %2783 = vmatpush1.xpose.msra.mxu0 0.0
    %2784 = vmatprep.subr.mxu0 0.0
    %2785 = vmatpush1.xpose.msra.mxu0 0.0
    %2786 = vmatprep.subr.mxu0 0.0
    %2787 = vmatpush1.xpose.msra.mxu0 0.0
    %2788 = vmatprep.subr.mxu0 0.0
    %2789 = vmatpush1.xpose.msra.mxu0 0.0
    %2790 = vmatprep.subr.mxu0 0.0
    %2791 = vmatpush1.xpose.msra.mxu0 0.0
    %2792 = vmatprep.subr.mxu0 0.0
    %2793 = vmatpush1.xpose.msra.mxu0 0.0
    %2794 = vmatprep.subr.mxu0 0.0
    %2795 = vmatpush1.xpose.msra.mxu0 0.0
    %2796 = vmatprep.subr.mxu0 0.0
    %2797 = vmatpush1.xpose.msra.mxu0 0.0
    %2798 = vmatprep.subr.mxu0 0.0
    %2799 = vmatpush1.xpose.msra.mxu0 0.0
    %2800 = vmatprep.subr.mxu0 0.0
    %2801 = vmatpush1.xpose.msra.mxu0 0.0
    %2802 = vmatprep.mubr.f32.mxu0 0.0
    %2803 = vmatmul.mubr.f32.gmra.mrb[0].mxu0 %v2734
    %v2804 = vpop.f32.mrb[0].mxu0
    %v2805 = vadd.f32 0.0, %v2804
    %v2806 = vpop.f32.mrb[0].mxu0
    %2807 = vdwg.mxu0
    %v2808 = vmul.f32 %v2805, 0.35355338
    %v2809 = vsel %vm411, %v2808, -inf
    %2810 = vmax.xlane.f32.xlu0 %v2809
    %v2811 = vpop.xlane.xlu0 %2810
    %v2812 = vsub.f32 %v2808, %v2811
    %v2813 = vmul.f32 %v2812, 1.442695
    %v2814 = vpow.pop %v2813
    %v2815 = vsel %vm411, %v2814, 0.0
    %2816 = vadd.xlane.f32.xlu0 %v2815
    %v2817 = vpop.xlane.xlu0 %2816
    %v2818 = vrcp.pop %v2817
    %v2819 = vmul.f32 %v2814, %v2818
    %2820 = vrot.lane.b32.xlu0 %v2222, 40
    %v2821 = vpop.permute.xlu0 %2820
    %v2823 = vsel %vm425, %v2819, 0
    %v2825 = vsel %vm191, %v2821, 0
    %2827 = vmatprep.subr.mxu0 0.0
    %2828 = vmatpush1.msra.mxu0 %v2825
    %2829 = vmatprep.subr.mxu0 0.0
    %2830 = vmatpush1.msra.mxu0 0.0
    %2831 = vmatprep.subr.mxu0 0.0
    %2832 = vmatpush1.msra.mxu0 0.0
    %2833 = vmatprep.subr.mxu0 0.0
    %2834 = vmatpush1.msra.mxu0 0.0
    %2835 = vmatprep.subr.mxu0 0.0
    %2836 = vmatpush1.msra.mxu0 0.0
    %2837 = vmatprep.subr.mxu0 0.0
    %2838 = vmatpush1.msra.mxu0 0.0
    %2839 = vmatprep.subr.mxu0 0.0
    %2840 = vmatpush1.msra.mxu0 0.0
    %2841 = vmatprep.subr.mxu0 0.0
    %2842 = vmatpush1.msra.mxu0 0.0
    %2843 = vmatprep.subr.mxu0 0.0
    %2844 = vmatpush1.msra.mxu0 0.0
    %2845 = vmatprep.subr.mxu0 0.0
    %2846 = vmatpush1.msra.mxu0 0.0
    %2847 = vmatprep.subr.mxu0 0.0
    %2848 = vmatpush1.msra.mxu0 0.0
    %2849 = vmatprep.subr.mxu0 0.0
    %2850 = vmatpush1.msra.mxu0 0.0
    %2851 = vmatprep.subr.mxu0 0.0
    %2852 = vmatpush1.msra.mxu0 0.0
    %2853 = vmatprep.subr.mxu0 0.0
    %2854 = vmatpush1.msra.mxu0 0.0
    %2855 = vmatprep.subr.mxu0 0.0
    %2856 = vmatpush1.msra.mxu0 0.0
    %2857 = vmatprep.subr.mxu0 0.0
    %2858 = vmatpush1.msra.mxu0 0.0
    %2859 = vmatprep.subr.mxu0 0.0
    %2860 = vmatpush1.msra.mxu0 0.0
    %2861 = vmatprep.subr.mxu0 0.0
    %2862 = vmatpush1.msra.mxu0 0.0
    %2863 = vmatprep.subr.mxu0 0.0
    %2864 = vmatpush1.msra.mxu0 0.0
    %2865 = vmatprep.subr.mxu0 0.0
    %2866 = vmatpush1.msra.mxu0 0.0
    %2867 = vmatprep.subr.mxu0 0.0
    %2868 = vmatpush1.msra.mxu0 0.0
    %2869 = vmatprep.subr.mxu0 0.0
    %2870 = vmatpush1.msra.mxu0 0.0
    %2871 = vmatprep.subr.mxu0 0.0
    %2872 = vmatpush1.msra.mxu0 0.0
    %2873 = vmatprep.subr.mxu0 0.0
    %2874 = vmatpush1.msra.mxu0 0.0
    %2875 = vmatprep.subr.mxu0 0.0
    %2876 = vmatpush1.msra.mxu0 0.0
    %2877 = vmatprep.subr.mxu0 0.0
    %2878 = vmatpush1.msra.mxu0 0.0
    %2879 = vmatprep.subr.mxu0 0.0
    %2880 = vmatpush1.msra.mxu0 0.0
    %2881 = vmatprep.subr.mxu0 0.0
    %2882 = vmatpush1.msra.mxu0 0.0
    %2883 = vmatprep.subr.mxu0 0.0
    %2884 = vmatpush1.msra.mxu0 0.0
    %2885 = vmatprep.subr.mxu0 0.0
    %2886 = vmatpush1.msra.mxu0 0.0
    %2887 = vmatprep.subr.mxu0 0.0
    %2888 = vmatpush1.msra.mxu0 0.0
    %2889 = vmatprep.subr.mxu0 0.0
    %2890 = vmatpush1.msra.mxu0 0.0
    %2891 = vmatprep.mubr.f32.mxu0 0.0
    %2892 = vmatmul.mubr.f32.gmra.mrb[0].mxu0 %v2823
    %v2893 = vpop.f32.mrb[0].mxu0
    %v2894 = vadd.f32 0.0, %v2893
    %v2895 = vpop.f32.mrb[0].mxu0
    %2896 = vdwg.mxu0
    %2898 = vrot.lane.b32.xlu0 %v2560, 8
    %v2899 = vpop.permute.xlu0 %2898
    %2902 = vrot.lane.b32.xlu0 %v2727, 16
    %v2903 = vpop.permute.xlu0 %2902
    %2906 = vrot.lane.b32.xlu0 %v2894, 24
    %v2907 = vpop.permute.xlu0 %2906
    %v2909 = vsel %vm335, %v2393, %v2899
    %v2910 = vsel %vm1015, %v2909, %v2903
    %v2911 = vsel %vm1017, %v2910, %v2907
    %v2913 = vrot.slane %v2222, 5
    %v2914 = vrot.slane %v2227, 5
    %v2915 = vsel %vm1020, %v2913, %v2914
    %2916 = vrot.lane.b32.xlu0 %v2915, 96
    %v2917 = vpop.permute.xlu0 %2916
    %v2918 = vsel %vm335, %v2915, 0
    %v2920 = vsel %vm335, %v2917, 0
    %2922 = vmatprep.subr.mxu0 0.0
    %2923 = vmatpush1.xpose.msra.mxu0 %v2920
    %2924 = vmatprep.subr.mxu0 0.0
    %2925 = vmatpush1.xpose.msra.mxu0 0.0
    %2926 = vmatprep.subr.mxu0 0.0
    %2927 = vmatpush1.xpose.msra.mxu0 0.0
    %2928 = vmatprep.subr.mxu0 0.0
    %2929 = vmatpush1.xpose.msra.mxu0 0.0
    %2930 = vmatprep.subr.mxu0 0.0
    %2931 = vmatpush1.xpose.msra.mxu0 0.0
    %2932 = vmatprep.subr.mxu0 0.0
    %2933 = vmatpush1.xpose.msra.mxu0 0.0
    %2934 = vmatprep.subr.mxu0 0.0
    %2935 = vmatpush1.xpose.msra.mxu0 0.0
    %2936 = vmatprep.subr.mxu0 0.0
    %2937 = vmatpush1.xpose.msra.mxu0 0.0
    %2938 = vmatprep.subr.mxu0 0.0
    %2939 = vmatpush1.xpose.msra.mxu0 0.0
    %2940 = vmatprep.subr.mxu0 0.0
    %2941 = vmatpush1.xpose.msra.mxu0 0.0
    %2942 = vmatprep.subr.mxu0 0.0
    %2943 = vmatpush1.xpose.msra.mxu0 0.0
    %2944 = vmatprep.subr.mxu0 0.0
    %2945 = vmatpush1.xpose.msra.mxu0 0.0
    %2946 = vmatprep.subr.mxu0 0.0
    %2947 = vmatpush1.xpose.msra.mxu0 0.0
    %2948 = vmatprep.subr.mxu0 0.0
    %2949 = vmatpush1.xpose.msra.mxu0 0.0
    %2950 = vmatprep.subr.mxu0 0.0
    %2951 = vmatpush1.xpose.msra.mxu0 0.0
    %2952 = vmatprep.subr.mxu0 0.0
    %2953 = vmatpush1.xpose.msra.mxu0 0.0
    %2954 = vmatprep.subr.mxu0 0.0
    %2955 = vmatpush1.xpose.msra.mxu0 0.0
    %2956 = vmatprep.subr.mxu0 0.0
    %2957 = vmatpush1.xpose.msra.mxu0 0.0
    %2958 = vmatprep.subr.mxu0 0.0
    %2959 = vmatpush1.xpose.msra.mxu0 0.0
    %2960 = vmatprep.subr.mxu0 0.0
    %2961 = vmatpush1.xpose.msra.mxu0 0.0
    %2962 = vmatprep.subr.mxu0 0.0
    %2963 = vmatpush1.xpose.msra.mxu0 0.0
    %2964 = vmatprep.subr.mxu0 0.0
    %2965 = vmatpush1.xpose.msra.mxu0 0.0
    %2966 = vmatprep.subr.mxu0 0.0
    %2967 = vmatpush1.xpose.msra.mxu0 0.0
    %2968 = vmatprep.subr.mxu0 0.0
    %2969 = vmatpush1.xpose.msra.mxu0 0.0
    %2970 = vmatprep.subr.mxu0 0.0
    %2971 = vmatpush1.xpose.msra.mxu0 0.0
    %2972 = vmatprep.subr.mxu0 0.0
    %2973 = vmatpush1.xpose.msra.mxu0 0.0
    %2974 = vmatprep.subr.mxu0 0.0
    %2975 = vmatpush1.xpose.msra.mxu0 0.0
    %2976 = vmatprep.subr.mxu0 0.0
    %2977 = vmatpush1.xpose.msra.mxu0 0.0
    %2978 = vmatprep.subr.mxu0 0.0
    %2979 = vmatpush1.xpose.msra.mxu0 0.0
    %2980 = vmatprep.subr.mxu0 0.0
    %2981 = vmatpush1.xpose.msra.mxu0 0.0
    %2982 = vmatprep.subr.mxu0 0.0
    %2983 = vmatpush1.xpose.msra.mxu0 0.0
    %2984 = vmatprep.subr.mxu0 0.0
    %2985 = vmatpush1.xpose.msra.mxu0 0.0
    %2986 = vmatprep.mubr.f32.mxu0 0.0
    %2987 = vmatmul.mubr.f32.gmra.mrb[0].mxu0 %v2918
    %v2988 = vpop.f32.mrb[0].mxu0
    %v2989 = vadd.f32 0.0, %v2988
    %v2990 = vpop.f32.mrb[0].mxu0
    %2991 = vdwg.mxu0
    %v2992 = vmul.f32 %v2989, 0.35355338
    %v2993 = vsel %vm411, %v2992, -inf
    %2994 = vmax.xlane.f32.xlu0 %v2993
    %v2995 = vpop.xlane.xlu0 %2994
    %v2996 = vsub.f32 %v2992, %v2995
    %v2997 = vmul.f32 %v2996, 1.442695
    %v2998 = vpow.pop %v2997
    %v2999 = vsel %vm411, %v2998, 0.0
    %3000 = vadd.xlane.f32.xlu0 %v2999
    %v3001 = vpop.xlane.xlu0 %3000
    %v3002 = vrcp.pop %v3001
    %v3003 = vmul.f32 %v2998, %v3002
    %3004 = vrot.lane.b32.xlu0 %v2915, 64
    %v3005 = vpop.permute.xlu0 %3004
    %v3007 = vsel %vm425, %v3003, 0
    %v3009 = vsel %vm191, %v3005, 0
    %3011 = vmatprep.subr.mxu0 0.0
    %3012 = vmatpush1.msra.mxu0 %v3009
    %3013 = vmatprep.subr.mxu0 0.0
    %3014 = vmatpush1.msra.mxu0 0.0
    %3015 = vmatprep.subr.mxu0 0.0
    %3016 = vmatpush1.msra.mxu0 0.0
    %3017 = vmatprep.subr.mxu0 0.0
    %3018 = vmatpush1.msra.mxu0 0.0
    %3019 = vmatprep.subr.mxu0 0.0
    %3020 = vmatpush1.msra.mxu0 0.0
    %3021 = vmatprep.subr.mxu0 0.0
    %3022 = vmatpush1.msra.mxu0 0.0
    %3023 = vmatprep.subr.mxu0 0.0
    %3024 = vmatpush1.msra.mxu0 0.0
    %3025 = vmatprep.subr.mxu0 0.0
    %3026 = vmatpush1.msra.mxu0 0.0
    %3027 = vmatprep.subr.mxu0 0.0
    %3028 = vmatpush1.msra.mxu0 0.0
    %3029 = vmatprep.subr.mxu0 0.0
    %3030 = vmatpush1.msra.mxu0 0.0
    %3031 = vmatprep.subr.mxu0 0.0
    %3032 = vmatpush1.msra.mxu0 0.0
    %3033 = vmatprep.subr.mxu0 0.0
    %3034 = vmatpush1.msra.mxu0 0.0
    %3035 = vmatprep.subr.mxu0 0.0
    %3036 = vmatpush1.msra.mxu0 0.0
    %3037 = vmatprep.subr.mxu0 0.0
    %3038 = vmatpush1.msra.mxu0 0.0
    %3039 = vmatprep.subr.mxu0 0.0
    %3040 = vmatpush1.msra.mxu0 0.0
    %3041 = vmatprep.subr.mxu0 0.0
    %3042 = vmatpush1.msra.mxu0 0.0
    %3043 = vmatprep.subr.mxu0 0.0
    %3044 = vmatpush1.msra.mxu0 0.0
    %3045 = vmatprep.subr.mxu0 0.0
    %3046 = vmatpush1.msra.mxu0 0.0
    %3047 = vmatprep.subr.mxu0 0.0
    %3048 = vmatpush1.msra.mxu0 0.0
    %3049 = vmatprep.subr.mxu0 0.0
    %3050 = vmatpush1.msra.mxu0 0.0
    %3051 = vmatprep.subr.mxu0 0.0
    %3052 = vmatpush1.msra.mxu0 0.0
    %3053 = vmatprep.subr.mxu0 0.0
    %3054 = vmatpush1.msra.mxu0 0.0
    %3055 = vmatprep.subr.mxu0 0.0
    %3056 = vmatpush1.msra.mxu0 0.0
    %3057 = vmatprep.subr.mxu0 0.0
    %3058 = vmatpush1.msra.mxu0 0.0
    %3059 = vmatprep.subr.mxu0 0.0
    %3060 = vmatpush1.msra.mxu0 0.0
    %3061 = vmatprep.subr.mxu0 0.0
    %3062 = vmatpush1.msra.mxu0 0.0
    %3063 = vmatprep.subr.mxu0 0.0
    %3064 = vmatpush1.msra.mxu0 0.0
    %3065 = vmatprep.subr.mxu0 0.0
    %3066 = vmatpush1.msra.mxu0 0.0
    %3067 = vmatprep.subr.mxu0 0.0
    %3068 = vmatpush1.msra.mxu0 0.0
    %3069 = vmatprep.subr.mxu0 0.0
    %3070 = vmatpush1.msra.mxu0 0.0
    %3071 = vmatprep.subr.mxu0 0.0
    %3072 = vmatpush1.msra.mxu0 0.0
    %3073 = vmatprep.subr.mxu0 0.0
    %3074 = vmatpush1.msra.mxu0 0.0
    %3075 = vmatprep.mubr.f32.mxu0 0.0
    %3076 = vmatmul.mubr.f32.gmra.mrb[0].mxu0 %v3007
    %v3077 = vpop.f32.mrb[0].mxu0
    %v3078 = vadd.f32 0.0, %v3077
    %v3079 = vpop.f32.mrb[0].mxu0
    %3080 = vdwg.mxu0
    %3081 = vrot.lane.b32.xlu0 %v2915, 120
    %v3082 = vpop.permute.xlu0 %3081
    %3083 = vrot.lane.b32.xlu0 %v2915, 88
    %v3084 = vpop.permute.xlu0 %3083
    %v3085 = vsel %vm335, %v3082, 0
    %v3087 = vsel %vm335, %v3084, 0
    %3089 = vmatprep.subr.mxu0 0.0
    %3090 = vmatpush1.xpose.msra.mxu0 %v3087
    %3091 = vmatprep.subr.mxu0 0.0
    %3092 = vmatpush1.xpose.msra.mxu0 0.0
    %3093 = vmatprep.subr.mxu0 0.0
    %3094 = vmatpush1.xpose.msra.mxu0 0.0
    %3095 = vmatprep.subr.mxu0 0.0
    %3096 = vmatpush1.xpose.msra.mxu0 0.0
    %3097 = vmatprep.subr.mxu0 0.0
    %3098 = vmatpush1.xpose.msra.mxu0 0.0
    %3099 = vmatprep.subr.mxu0 0.0
    %3100 = vmatpush1.xpose.msra.mxu0 0.0
    %3101 = vmatprep.subr.mxu0 0.0
    %3102 = vmatpush1.xpose.msra.mxu0 0.0
    %3103 = vmatprep.subr.mxu0 0.0
    %3104 = vmatpush1.xpose.msra.mxu0 0.0
    %3105 = vmatprep.subr.mxu0 0.0
    %3106 = vmatpush1.xpose.msra.mxu0 0.0
    %3107 = vmatprep.subr.mxu0 0.0
    %3108 = vmatpush1.xpose.msra.mxu0 0.0
    %3109 = vmatprep.subr.mxu0 0.0
    %3110 = vmatpush1.xpose.msra.mxu0 0.0
    %3111 = vmatprep.subr.mxu0 0.0
    %3112 = vmatpush1.xpose.msra.mxu0 0.0
    %3113 = vmatprep.subr.mxu0 0.0
    %3114 = vmatpush1.xpose.msra.mxu0 0.0
    %3115 = vmatprep.subr.mxu0 0.0
    %3116 = vmatpush1.xpose.msra.mxu0 0.0
    %3117 = vmatprep.subr.mxu0 0.0
    %3118 = vmatpush1.xpose.msra.mxu0 0.0
    %3119 = vmatprep.subr.mxu0 0.0
    %3120 = vmatpush1.xpose.msra.mxu0 0.0
    %3121 = vmatprep.subr.mxu0 0.0
    %3122 = vmatpush1.xpose.msra.mxu0 0.0
    %3123 = vmatprep.subr.mxu0 0.0
    %3124 = vmatpush1.xpose.msra.mxu0 0.0
    %3125 = vmatprep.subr.mxu0 0.0
    %3126 = vmatpush1.xpose.msra.mxu0 0.0
    %3127 = vmatprep.subr.mxu0 0.0
    %3128 = vmatpush1.xpose.msra.mxu0 0.0
    %3129 = vmatprep.subr.mxu0 0.0
    %3130 = vmatpush1.xpose.msra.mxu0 0.0
    %3131 = vmatprep.subr.mxu0 0.0
    %3132 = vmatpush1.xpose.msra.mxu0 0.0
    %3133 = vmatprep.subr.mxu0 0.0
    %3134 = vmatpush1.xpose.msra.mxu0 0.0
    %3135 = vmatprep.subr.mxu0 0.0
    %3136 = vmatpush1.xpose.msra.mxu0 0.0
    %3137 = vmatprep.subr.mxu0 0.0
    %3138 = vmatpush1.xpose.msra.mxu0 0.0
    %3139 = vmatprep.subr.mxu0 0.0
    %3140 = vmatpush1.xpose.msra.mxu0 0.0
    %3141 = vmatprep.subr.mxu0 0.0
    %3142 = vmatpush1.xpose.msra.mxu0 0.0
    %3143 = vmatprep.subr.mxu0 0.0
    %3144 = vmatpush1.xpose.msra.mxu0 0.0
    %3145 = vmatprep.subr.mxu0 0.0
    %3146 = vmatpush1.xpose.msra.mxu0 0.0
    %3147 = vmatprep.subr.mxu0 0.0
    %3148 = vmatpush1.xpose.msra.mxu0 0.0
    %3149 = vmatprep.subr.mxu0 0.0
    %3150 = vmatpush1.xpose.msra.mxu0 0.0
    %3151 = vmatprep.subr.mxu0 0.0
    %3152 = vmatpush1.xpose.msra.mxu0 0.0
    %3153 = vmatprep.mubr.f32.mxu0 0.0
    %3154 = vmatmul.mubr.f32.gmra.mrb[0].mxu0 %v3085
    %v3155 = vpop.f32.mrb[0].mxu0
    %v3156 = vadd.f32 0.0, %v3155
    %v3157 = vpop.f32.mrb[0].mxu0
    %3158 = vdwg.mxu0
    %v3159 = vmul.f32 %v3156, 0.35355338
    %v3160 = vsel %vm411, %v3159, -inf
    %3161 = vmax.xlane.f32.xlu0 %v3160
    %v3162 = vpop.xlane.xlu0 %3161
    %v3163 = vsub.f32 %v3159, %v3162
    %v3164 = vmul.f32 %v3163, 1.442695
    %v3165 = vpow.pop %v3164
    %v3166 = vsel %vm411, %v3165, 0.0
    %3167 = vadd.xlane.f32.xlu0 %v3166
    %v3168 = vpop.xlane.xlu0 %3167
    %v3169 = vrcp.pop %v3168
    %v3170 = vmul.f32 %v3165, %v3169
    %3171 = vrot.lane.b32.xlu0 %v2915, 56
    %v3172 = vpop.permute.xlu0 %3171
    %v3174 = vsel %vm425, %v3170, 0
    %v3176 = vsel %vm191, %v3172, 0
    %3178 = vmatprep.subr.mxu0 0.0
    %3179 = vmatpush1.msra.mxu0 %v3176
    %3180 = vmatprep.subr.mxu0 0.0
    %3181 = vmatpush1.msra.mxu0 0.0
    %3182 = vmatprep.subr.mxu0 0.0
    %3183 = vmatpush1.msra.mxu0 0.0
    %3184 = vmatprep.subr.mxu0 0.0
    %3185 = vmatpush1.msra.mxu0 0.0
    %3186 = vmatprep.subr.mxu0 0.0
    %3187 = vmatpush1.msra.mxu0 0.0
    %3188 = vmatprep.subr.mxu0 0.0
    %3189 = vmatpush1.msra.mxu0 0.0
    %3190 = vmatprep.subr.mxu0 0.0
    %3191 = vmatpush1.msra.mxu0 0.0
    %3192 = vmatprep.subr.mxu0 0.0
    %3193 = vmatpush1.msra.mxu0 0.0
    %3194 = vmatprep.subr.mxu0 0.0
    %3195 = vmatpush1.msra.mxu0 0.0
    %3196 = vmatprep.subr.mxu0 0.0
    %3197 = vmatpush1.msra.mxu0 0.0
    %3198 = vmatprep.subr.mxu0 0.0
    %3199 = vmatpush1.msra.mxu0 0.0
    %3200 = vmatprep.subr.mxu0 0.0
    %3201 = vmatpush1.msra.mxu0 0.0
    %3202 = vmatprep.subr.mxu0 0.0
    %3203 = vmatpush1.msra.mxu0 0.0
    %3204 = vmatprep.subr.mxu0 0.0
    %3205 = vmatpush1.msra.mxu0 0.0
    %3206 = vmatprep.subr.mxu0 0.0
    %3207 = vmatpush1.msra.mxu0 0.0
    %3208 = vmatprep.subr.mxu0 0.0
    %3209 = vmatpush1.msra.mxu0 0.0
    %3210 = vmatprep.subr.mxu0 0.0
    %3211 = vmatpush1.msra.mxu0 0.0
    %3212 = vmatprep.subr.mxu0 0.0
    %3213 = vmatpush1.msra.mxu0 0.0
    %3214 = vmatprep.subr.mxu0 0.0
    %3215 = vmatpush1.msra.mxu0 0.0
    %3216 = vmatprep.subr.mxu0 0.0
    %3217 = vmatpush1.msra.mxu0 0.0
    %3218 = vmatprep.subr.mxu0 0.0
    %3219 = vmatpush1.msra.mxu0 0.0
    %3220 = vmatprep.subr.mxu0 0.0
    %3221 = vmatpush1.msra.mxu0 0.0
    %3222 = vmatprep.subr.mxu0 0.0
    %3223 = vmatpush1.msra.mxu0 0.0
    %3224 = vmatprep.subr.mxu0 0.0
    %3225 = vmatpush1.msra.mxu0 0.0
    %3226 = vmatprep.subr.mxu0 0.0
    %3227 = vmatpush1.msra.mxu0 0.0
    %3228 = vmatprep.subr.mxu0 0.0
    %3229 = vmatpush1.msra.mxu0 0.0
    %3230 = vmatprep.subr.mxu0 0.0
    %3231 = vmatpush1.msra.mxu0 0.0
    %3232 = vmatprep.subr.mxu0 0.0
    %3233 = vmatpush1.msra.mxu0 0.0
    %3234 = vmatprep.subr.mxu0 0.0
    %3235 = vmatpush1.msra.mxu0 0.0
    %3236 = vmatprep.subr.mxu0 0.0
    %3237 = vmatpush1.msra.mxu0 0.0
    %3238 = vmatprep.subr.mxu0 0.0
    %3239 = vmatpush1.msra.mxu0 0.0
    %3240 = vmatprep.subr.mxu0 0.0
    %3241 = vmatpush1.msra.mxu0 0.0
    %3242 = vmatprep.mubr.f32.mxu0 0.0
    %3243 = vmatmul.mubr.f32.gmra.mrb[0].mxu0 %v3174
    %v3244 = vpop.f32.mrb[0].mxu0
    %v3245 = vadd.f32 0.0, %v3244
    %v3246 = vpop.f32.mrb[0].mxu0
    %3247 = vdwg.mxu0
    %3248 = vrot.lane.b32.xlu0 %v2915, 112
    %v3249 = vpop.permute.xlu0 %3248
    %3250 = vrot.lane.b32.xlu0 %v2915, 80
    %v3251 = vpop.permute.xlu0 %3250
    %v3252 = vsel %vm335, %v3249, 0
    %v3254 = vsel %vm335, %v3251, 0
    %3256 = vmatprep.subr.mxu0 0.0
    %3257 = vmatpush1.xpose.msra.mxu0 %v3254
    %3258 = vmatprep.subr.mxu0 0.0
    %3259 = vmatpush1.xpose.msra.mxu0 0.0
    %3260 = vmatprep.subr.mxu0 0.0
    %3261 = vmatpush1.xpose.msra.mxu0 0.0
    %3262 = vmatprep.subr.mxu0 0.0
    %3263 = vmatpush1.xpose.msra.mxu0 0.0
    %3264 = vmatprep.subr.mxu0 0.0
    %3265 = vmatpush1.xpose.msra.mxu0 0.0
    %3266 = vmatprep.subr.mxu0 0.0
    %3267 = vmatpush1.xpose.msra.mxu0 0.0
    %3268 = vmatprep.subr.mxu0 0.0
    %3269 = vmatpush1.xpose.msra.mxu0 0.0
    %3270 = vmatprep.subr.mxu0 0.0
    %3271 = vmatpush1.xpose.msra.mxu0 0.0
    %3272 = vmatprep.subr.mxu0 0.0
    %3273 = vmatpush1.xpose.msra.mxu0 0.0
    %3274 = vmatprep.subr.mxu0 0.0
    %3275 = vmatpush1.xpose.msra.mxu0 0.0
    %3276 = vmatprep.subr.mxu0 0.0
    %3277 = vmatpush1.xpose.msra.mxu0 0.0
    %3278 = vmatprep.subr.mxu0 0.0
    %3279 = vmatpush1.xpose.msra.mxu0 0.0
    %3280 = vmatprep.subr.mxu0 0.0
    %3281 = vmatpush1.xpose.msra.mxu0 0.0
    %3282 = vmatprep.subr.mxu0 0.0
    %3283 = vmatpush1.xpose.msra.mxu0 0.0
    %3284 = vmatprep.subr.mxu0 0.0
    %3285 = vmatpush1.xpose.msra.mxu0 0.0
    %3286 = vmatprep.subr.mxu0 0.0
    %3287 = vmatpush1.xpose.msra.mxu0 0.0
    %3288 = vmatprep.subr.mxu0 0.0
    %3289 = vmatpush1.xpose.msra.mxu0 0.0
    %3290 = vmatprep.subr.mxu0 0.0
    %3291 = vmatpush1.xpose.msra.mxu0 0.0
    %3292 = vmatprep.subr.mxu0 0.0
    %3293 = vmatpush1.xpose.msra.mxu0 0.0
    %3294 = vmatprep.subr.mxu0 0.0
    %3295 = vmatpush1.xpose.msra.mxu0 0.0
    %3296 = vmatprep.subr.mxu0 0.0
    %3297 = vmatpush1.xpose.msra.mxu0 0.0
    %3298 = vmatprep.subr.mxu0 0.0
    %3299 = vmatpush1.xpose.msra.mxu0 0.0
    %3300 = vmatprep.subr.mxu0 0.0
    %3301 = vmatpush1.xpose.msra.mxu0 0.0
    %3302 = vmatprep.subr.mxu0 0.0
    %3303 = vmatpush1.xpose.msra.mxu0 0.0
    %3304 = vmatprep.subr.mxu0 0.0
    %3305 = vmatpush1.xpose.msra.mxu0 0.0
    %3306 = vmatprep.subr.mxu0 0.0
    %3307 = vmatpush1.xpose.msra.mxu0 0.0
    %3308 = vmatprep.subr.mxu0 0.0
    %3309 = vmatpush1.xpose.msra.mxu0 0.0
    %3310 = vmatprep.subr.mxu0 0.0
    %3311 = vmatpush1.xpose.msra.mxu0 0.0
    %3312 = vmatprep.subr.mxu0 0.0
    %3313 = vmatpush1.xpose.msra.mxu0 0.0
    %3314 = vmatprep.subr.mxu0 0.0
    %3315 = vmatpush1.xpose.msra.mxu0 0.0
    %3316 = vmatprep.subr.mxu0 0.0
    %3317 = vmatpush1.xpose.msra.mxu0 0.0
    %3318 = vmatprep.subr.mxu0 0.0
    %3319 = vmatpush1.xpose.msra.mxu0 0.0
    %3320 = vmatprep.mubr.f32.mxu0 0.0
    %3321 = vmatmul.mubr.f32.gmra.mrb[0].mxu0 %v3252
    %v3322 = vpop.f32.mrb[0].mxu0
    %v3323 = vadd.f32 0.0, %v3322
    %v3324 = vpop.f32.mrb[0].mxu0
    %3325 = vdwg.mxu0
    %v3326 = vmul.f32 %v3323, 0.35355338
    %v3327 = vsel %vm411, %v3326, -inf
    %3328 = vmax.xlane.f32.xlu0 %v3327
    %v3329 = vpop.xlane.xlu0 %3328
    %v3330 = vsub.f32 %v3326, %v3329
    %v3331 = vmul.f32 %v3330, 1.442695
    %v3332 = vpow.pop %v3331
    %v3333 = vsel %vm411, %v3332, 0.0
    %3334 = vadd.xlane.f32.xlu0 %v3333
    %v3335 = vpop.xlane.xlu0 %3334
    %v3336 = vrcp.pop %v3335
    %v3337 = vmul.f32 %v3332, %v3336
    %3338 = vrot.lane.b32.xlu0 %v2915, 48
    %v3339 = vpop.permute.xlu0 %3338
    %v3341 = vsel %vm425, %v3337, 0
    %v3343 = vsel %vm191, %v3339, 0
    %3345 = vmatprep.subr.mxu0 0.0
    %3346 = vmatpush1.msra.mxu0 %v3343
    %3347 = vmatprep.subr.mxu0 0.0
    %3348 = vmatpush1.msra.mxu0 0.0
    %3349 = vmatprep.subr.mxu0 0.0
    %3350 = vmatpush1.msra.mxu0 0.0
    %3351 = vmatprep.subr.mxu0 0.0
    %3352 = vmatpush1.msra.mxu0 0.0
    %3353 = vmatprep.subr.mxu0 0.0
    %3354 = vmatpush1.msra.mxu0 0.0
    %3355 = vmatprep.subr.mxu0 0.0
    %3356 = vmatpush1.msra.mxu0 0.0
    %3357 = vmatprep.subr.mxu0 0.0
    %3358 = vmatpush1.msra.mxu0 0.0
    %3359 = vmatprep.subr.mxu0 0.0
    %3360 = vmatpush1.msra.mxu0 0.0
    %3361 = vmatprep.subr.mxu0 0.0
    %3362 = vmatpush1.msra.mxu0 0.0
    %3363 = vmatprep.subr.mxu0 0.0
    %3364 = vmatpush1.msra.mxu0 0.0
    %3365 = vmatprep.subr.mxu0 0.0
    %3366 = vmatpush1.msra.mxu0 0.0
    %3367 = vmatprep.subr.mxu0 0.0
    %3368 = vmatpush1.msra.mxu0 0.0
    %3369 = vmatprep.subr.mxu0 0.0
    %3370 = vmatpush1.msra.mxu0 0.0
    %3371 = vmatprep.subr.mxu0 0.0
    %3372 = vmatpush1.msra.mxu0 0.0
    %3373 = vmatprep.subr.mxu0 0.0
    %3374 = vmatpush1.msra.mxu0 0.0
    %3375 = vmatprep.subr.mxu0 0.0
    %3376 = vmatpush1.msra.mxu0 0.0
    %3377 = vmatprep.subr.mxu0 0.0
    %3378 = vmatpush1.msra.mxu0 0.0
    %3379 = vmatprep.subr.mxu0 0.0
    %3380 = vmatpush1.msra.mxu0 0.0
    %3381 = vmatprep.subr.mxu0 0.0
    %3382 = vmatpush1.msra.mxu0 0.0
    %3383 = vmatprep.subr.mxu0 0.0
    %3384 = vmatpush1.msra.mxu0 0.0
    %3385 = vmatprep.subr.mxu0 0.0
    %3386 = vmatpush1.msra.mxu0 0.0
    %3387 = vmatprep.subr.mxu0 0.0
    %3388 = vmatpush1.msra.mxu0 0.0
    %3389 = vmatprep.subr.mxu0 0.0
    %3390 = vmatpush1.msra.mxu0 0.0
    %3391 = vmatprep.subr.mxu0 0.0
    %3392 = vmatpush1.msra.mxu0 0.0
    %3393 = vmatprep.subr.mxu0 0.0
    %3394 = vmatpush1.msra.mxu0 0.0
    %3395 = vmatprep.subr.mxu0 0.0
    %3396 = vmatpush1.msra.mxu0 0.0
    %3397 = vmatprep.subr.mxu0 0.0
    %3398 = vmatpush1.msra.mxu0 0.0
    %3399 = vmatprep.subr.mxu0 0.0
    %3400 = vmatpush1.msra.mxu0 0.0
    %3401 = vmatprep.subr.mxu0 0.0
    %3402 = vmatpush1.msra.mxu0 0.0
    %3403 = vmatprep.subr.mxu0 0.0
    %3404 = vmatpush1.msra.mxu0 0.0
    %3405 = vmatprep.subr.mxu0 0.0
    %3406 = vmatpush1.msra.mxu0 0.0
    %3407 = vmatprep.subr.mxu0 0.0
    %3408 = vmatpush1.msra.mxu0 0.0
    %3409 = vmatprep.mubr.f32.mxu0 0.0
    %3410 = vmatmul.mubr.f32.gmra.mrb[0].mxu0 %v3341
    %v3411 = vpop.f32.mrb[0].mxu0
    %v3412 = vadd.f32 0.0, %v3411
    %v3413 = vpop.f32.mrb[0].mxu0
    %3414 = vdwg.mxu0
    %3415 = vrot.lane.b32.xlu0 %v2915, 104
    %v3416 = vpop.permute.xlu0 %3415
    %3417 = vrot.lane.b32.xlu0 %v2915, 72
    %v3418 = vpop.permute.xlu0 %3417
    %v3419 = vsel %vm335, %v3416, 0
    %v3421 = vsel %vm335, %v3418, 0
    %3423 = vmatprep.subr.mxu0 0.0
    %3424 = vmatpush1.xpose.msra.mxu0 %v3421
    %3425 = vmatprep.subr.mxu0 0.0
    %3426 = vmatpush1.xpose.msra.mxu0 0.0
    %3427 = vmatprep.subr.mxu0 0.0
    %3428 = vmatpush1.xpose.msra.mxu0 0.0
    %3429 = vmatprep.subr.mxu0 0.0
    %3430 = vmatpush1.xpose.msra.mxu0 0.0
    %3431 = vmatprep.subr.mxu0 0.0
    %3432 = vmatpush1.xpose.msra.mxu0 0.0
    %3433 = vmatprep.subr.mxu0 0.0
    %3434 = vmatpush1.xpose.msra.mxu0 0.0
    %3435 = vmatprep.subr.mxu0 0.0
    %3436 = vmatpush1.xpose.msra.mxu0 0.0
    %3437 = vmatprep.subr.mxu0 0.0
    %3438 = vmatpush1.xpose.msra.mxu0 0.0
    %3439 = vmatprep.subr.mxu0 0.0
    %3440 = vmatpush1.xpose.msra.mxu0 0.0
    %3441 = vmatprep.subr.mxu0 0.0
    %3442 = vmatpush1.xpose.msra.mxu0 0.0
    %3443 = vmatprep.subr.mxu0 0.0
    %3444 = vmatpush1.xpose.msra.mxu0 0.0
    %3445 = vmatprep.subr.mxu0 0.0
    %3446 = vmatpush1.xpose.msra.mxu0 0.0
    %3447 = vmatprep.subr.mxu0 0.0
    %3448 = vmatpush1.xpose.msra.mxu0 0.0
    %3449 = vmatprep.subr.mxu0 0.0
    %3450 = vmatpush1.xpose.msra.mxu0 0.0
    %3451 = vmatprep.subr.mxu0 0.0
    %3452 = vmatpush1.xpose.msra.mxu0 0.0
    %3453 = vmatprep.subr.mxu0 0.0
    %3454 = vmatpush1.xpose.msra.mxu0 0.0
    %3455 = vmatprep.subr.mxu0 0.0
    %3456 = vmatpush1.xpose.msra.mxu0 0.0
    %3457 = vmatprep.subr.mxu0 0.0
    %3458 = vmatpush1.xpose.msra.mxu0 0.0
    %3459 = vmatprep.subr.mxu0 0.0
    %3460 = vmatpush1.xpose.msra.mxu0 0.0
    %3461 = vmatprep.subr.mxu0 0.0
    %3462 = vmatpush1.xpose.msra.mxu0 0.0
    %3463 = vmatprep.subr.mxu0 0.0
    %3464 = vmatpush1.xpose.msra.mxu0 0.0
    %3465 = vmatprep.subr.mxu0 0.0
    %3466 = vmatpush1.xpose.msra.mxu0 0.0
    %3467 = vmatprep.subr.mxu0 0.0
    %3468 = vmatpush1.xpose.msra.mxu0 0.0
    %3469 = vmatprep.subr.mxu0 0.0
    %3470 = vmatpush1.xpose.msra.mxu0 0.0
    %3471 = vmatprep.subr.mxu0 0.0
    %3472 = vmatpush1.xpose.msra.mxu0 0.0
    %3473 = vmatprep.subr.mxu0 0.0
    %3474 = vmatpush1.xpose.msra.mxu0 0.0
    %3475 = vmatprep.subr.mxu0 0.0
    %3476 = vmatpush1.xpose.msra.mxu0 0.0
    %3477 = vmatprep.subr.mxu0 0.0
    %3478 = vmatpush1.xpose.msra.mxu0 0.0
    %3479 = vmatprep.subr.mxu0 0.0
    %3480 = vmatpush1.xpose.msra.mxu0 0.0
    %3481 = vmatprep.subr.mxu0 0.0
    %3482 = vmatpush1.xpose.msra.mxu0 0.0
    %3483 = vmatprep.subr.mxu0 0.0
    %3484 = vmatpush1.xpose.msra.mxu0 0.0
    %3485 = vmatprep.subr.mxu0 0.0
    %3486 = vmatpush1.xpose.msra.mxu0 0.0
    %3487 = vmatprep.mubr.f32.mxu0 0.0
    %3488 = vmatmul.mubr.f32.gmra.mrb[0].mxu0 %v3419
    %v3489 = vpop.f32.mrb[0].mxu0
    %v3490 = vadd.f32 0.0, %v3489
    %v3491 = vpop.f32.mrb[0].mxu0
    %3492 = vdwg.mxu0
    %v3493 = vmul.f32 %v3490, 0.35355338
    %v3494 = vsel %vm411, %v3493, -inf
    %3495 = vmax.xlane.f32.xlu0 %v3494
    %v3496 = vpop.xlane.xlu0 %3495
    %v3497 = vsub.f32 %v3493, %v3496
    %v3498 = vmul.f32 %v3497, 1.442695
    %v3499 = vpow.pop %v3498
    %v3500 = vsel %vm411, %v3499, 0.0
    %3501 = vadd.xlane.f32.xlu0 %v3500
    %v3502 = vpop.xlane.xlu0 %3501
    %v3503 = vrcp.pop %v3502
    %v3504 = vmul.f32 %v3499, %v3503
    %3505 = vrot.lane.b32.xlu0 %v2915, 40
    %v3506 = vpop.permute.xlu0 %3505
    %v3508 = vsel %vm425, %v3504, 0
    %v3510 = vsel %vm191, %v3506, 0
    %3512 = vmatprep.subr.mxu0 0.0
    %3513 = vmatpush1.msra.mxu0 %v3510
    %3514 = vmatprep.subr.mxu0 0.0
    %3515 = vmatpush1.msra.mxu0 0.0
    %3516 = vmatprep.subr.mxu0 0.0
    %3517 = vmatpush1.msra.mxu0 0.0
    %3518 = vmatprep.subr.mxu0 0.0
    %3519 = vmatpush1.msra.mxu0 0.0
    %3520 = vmatprep.subr.mxu0 0.0
    %3521 = vmatpush1.msra.mxu0 0.0
    %3522 = vmatprep.subr.mxu0 0.0
    %3523 = vmatpush1.msra.mxu0 0.0
    %3524 = vmatprep.subr.mxu0 0.0
    %3525 = vmatpush1.msra.mxu0 0.0
    %3526 = vmatprep.subr.mxu0 0.0
    %3527 = vmatpush1.msra.mxu0 0.0
    %3528 = vmatprep.subr.mxu0 0.0
    %3529 = vmatpush1.msra.mxu0 0.0
    %3530 = vmatprep.subr.mxu0 0.0
    %3531 = vmatpush1.msra.mxu0 0.0
    %3532 = vmatprep.subr.mxu0 0.0
    %3533 = vmatpush1.msra.mxu0 0.0
    %3534 = vmatprep.subr.mxu0 0.0
    %3535 = vmatpush1.msra.mxu0 0.0
    %3536 = vmatprep.subr.mxu0 0.0
    %3537 = vmatpush1.msra.mxu0 0.0
    %3538 = vmatprep.subr.mxu0 0.0
    %3539 = vmatpush1.msra.mxu0 0.0
    %3540 = vmatprep.subr.mxu0 0.0
    %3541 = vmatpush1.msra.mxu0 0.0
    %3542 = vmatprep.subr.mxu0 0.0
    %3543 = vmatpush1.msra.mxu0 0.0
    %3544 = vmatprep.subr.mxu0 0.0
    %3545 = vmatpush1.msra.mxu0 0.0
    %3546 = vmatprep.subr.mxu0 0.0
    %3547 = vmatpush1.msra.mxu0 0.0
    %3548 = vmatprep.subr.mxu0 0.0
    %3549 = vmatpush1.msra.mxu0 0.0
    %3550 = vmatprep.subr.mxu0 0.0
    %3551 = vmatpush1.msra.mxu0 0.0
    %3552 = vmatprep.subr.mxu0 0.0
    %3553 = vmatpush1.msra.mxu0 0.0
    %3554 = vmatprep.subr.mxu0 0.0
    %3555 = vmatpush1.msra.mxu0 0.0
    %3556 = vmatprep.subr.mxu0 0.0
    %3557 = vmatpush1.msra.mxu0 0.0
    %3558 = vmatprep.subr.mxu0 0.0
    %3559 = vmatpush1.msra.mxu0 0.0
    %3560 = vmatprep.subr.mxu0 0.0
    %3561 = vmatpush1.msra.mxu0 0.0
    %3562 = vmatprep.subr.mxu0 0.0
    %3563 = vmatpush1.msra.mxu0 0.0
    %3564 = vmatprep.subr.mxu0 0.0
    %3565 = vmatpush1.msra.mxu0 0.0
    %3566 = vmatprep.subr.mxu0 0.0
    %3567 = vmatpush1.msra.mxu0 0.0
    %3568 = vmatprep.subr.mxu0 0.0
    %3569 = vmatpush1.msra.mxu0 0.0
    %3570 = vmatprep.subr.mxu0 0.0
    %3571 = vmatpush1.msra.mxu0 0.0
    %3572 = vmatprep.subr.mxu0 0.0
    %3573 = vmatpush1.msra.mxu0 0.0
    %3574 = vmatprep.subr.mxu0 0.0
    %3575 = vmatpush1.msra.mxu0 0.0
    %3576 = vmatprep.mubr.f32.mxu0 0.0
    %3577 = vmatmul.mubr.f32.gmra.mrb[0].mxu0 %v3508
    %v3578 = vpop.f32.mrb[0].mxu0
    %v3579 = vadd.f32 0.0, %v3578
    %v3580 = vpop.f32.mrb[0].mxu0
    %3581 = vdwg.mxu0
    %3583 = vrot.lane.b32.xlu0 %v3245, 8
    %v3584 = vpop.permute.xlu0 %3583
    %3587 = vrot.lane.b32.xlu0 %v3412, 16
    %v3588 = vpop.permute.xlu0 %3587
    %3591 = vrot.lane.b32.xlu0 %v3579, 24
    %v3592 = vpop.permute.xlu0 %3591
    %v3594 = vsel %vm335, %v3078, %v3584
    %v3595 = vsel %vm1015, %v3594, %v3588
    %v3596 = vsel %vm1017, %v3595, %v3592
    %v3598 = vrot.slane %v3596, 3
    %v3600 = vsel %vm191, %v2911, %v3598
    %s3601 = scalar_lea.vmem %s9, 32
    %v3602 = vld [vmem:[%s3601] sm:$0xff]
    %v3603 = vld [vmem:[%s3601 + $0x8] sm:$0xff]
    %v3604 = vld [vmem:[%s3601 + $0x10] sm:$0xff]
    %v3605 = vld [vmem:[%s3601 + $0x18] sm:$0xff]
    %s3606 = scalar_lea.vmem %s10, 1
    %v3607 = vld [vmem:[%s3606] sm:$0x1]
    %v3609 = vlaneseq
    %v3610 = vshrl.u32 %v3609, 7
    %v3611 = vsub.s32 0, %v3610
    %v3612 = vrot.slane %v3607, %v3611
    %v3615 = vsel %vm195, %v3600, 0
    %v3617 = vsel %vm195, %v3598, 0
    %3619 = vmatprep.subr.mxu0 0.0
    %3620 = vmatpush1.msra.mxu0 %v3602
    %3621 = vmatprep.subr.mxu0 0.0
    %3622 = vmatpush1.msra.mxu0 %v3603
    %3623 = vmatprep.subr.mxu0 0.0
    %3624 = vmatpush1.msra.mxu0 %v3604
    %3625 = vmatprep.subr.mxu0 0.0
    %3626 = vmatpush1.msra.mxu0 %v3605
    %3627 = vmatprep.subr.mxu0 0.0
    %3628 = vmatpush1.msra.mxu0 0.0
    %3629 = vmatprep.subr.mxu0 0.0
    %3630 = vmatpush1.msra.mxu0 0.0
    %3631 = vmatprep.subr.mxu0 0.0
    %3632 = vmatpush1.msra.mxu0 0.0
    %3633 = vmatprep.subr.mxu0 0.0
    %3634 = vmatpush1.msra.mxu0 0.0
    %3635 = vmatprep.subr.mxu0 0.0
    %3636 = vmatpush1.msra.mxu0 0.0
    %3637 = vmatprep.subr.mxu0 0.0
    %3638 = vmatpush1.msra.mxu0 0.0
    %3639 = vmatprep.subr.mxu0 0.0
    %3640 = vmatpush1.msra.mxu0 0.0
    %3641 = vmatprep.subr.mxu0 0.0
    %3642 = vmatpush1.msra.mxu0 0.0
    %3643 = vmatprep.subr.mxu0 0.0
    %3644 = vmatpush1.msra.mxu0 0.0
    %3645 = vmatprep.subr.mxu0 0.0
    %3646 = vmatpush1.msra.mxu0 0.0
    %3647 = vmatprep.subr.mxu0 0.0
    %3648 = vmatpush1.msra.mxu0 0.0
    %3649 = vmatprep.subr.mxu0 0.0
    %3650 = vmatpush1.msra.mxu0 0.0
    %3651 = vmatprep.subr.mxu0 0.0
    %3652 = vmatpush1.msra.mxu0 0.0
    %3653 = vmatprep.subr.mxu0 0.0
    %3654 = vmatpush1.msra.mxu0 0.0
    %3655 = vmatprep.subr.mxu0 0.0
    %3656 = vmatpush1.msra.mxu0 0.0
    %3657 = vmatprep.subr.mxu0 0.0
    %3658 = vmatpush1.msra.mxu0 0.0
    %3659 = vmatprep.subr.mxu0 0.0
    %3660 = vmatpush1.msra.mxu0 0.0
    %3661 = vmatprep.subr.mxu0 0.0
    %3662 = vmatpush1.msra.mxu0 0.0
    %3663 = vmatprep.subr.mxu0 0.0
    %3664 = vmatpush1.msra.mxu0 0.0
    %3665 = vmatprep.subr.mxu0 0.0
    %3666 = vmatpush1.msra.mxu0 0.0
    %3667 = vmatprep.subr.mxu0 0.0
    %3668 = vmatpush1.msra.mxu0 0.0
    %3669 = vmatprep.subr.mxu0 0.0
    %3670 = vmatpush1.msra.mxu0 0.0
    %3671 = vmatprep.subr.mxu0 0.0
    %3672 = vmatpush1.msra.mxu0 0.0
    %3673 = vmatprep.subr.mxu0 0.0
    %3674 = vmatpush1.msra.mxu0 0.0
    %3675 = vmatprep.subr.mxu0 0.0
    %3676 = vmatpush1.msra.mxu0 0.0
    %3677 = vmatprep.subr.mxu0 0.0
    %3678 = vmatpush1.msra.mxu0 0.0
    %3679 = vmatprep.subr.mxu0 0.0
    %3680 = vmatpush1.msra.mxu0 0.0
    %3681 = vmatprep.subr.mxu0 0.0
    %3682 = vmatpush1.msra.mxu0 0.0
    %3683 = vmatprep.mubr.f32.mxu0 0.0
    %3684 = vmatmul.mubr.f32.gmra.mrb[0].mxu0 %v3615
    %v3685 = vpop.f32.mrb[0].mxu0
    %v3686 = vadd.f32 %v3612, %v3685
    %v3687 = vpop.f32.mrb[0].mxu0
    %3688 = vmatprep.mubr.f32.mxu0 0.0
    %3689 = vmatmul.mubr.f32.gmra.mrb[0].mxu0 %v3617
    %v3690 = vpop.f32.mrb[0].mxu0
    %v3691 = vadd.f32 %v3612, %v3690
    %v3692 = vpop.f32.mrb[0].mxu0
    %3693 = vdwg.mxu0
    %v3694 = vadd.f32 %v2088, %v3686
    %v3695 = vadd.f32 %v2089, %v3691
    %s3696 = scalar_lea.vmem %s11, 1
    %v3697 = vld [vmem:[%s3696] sm:$0x1]
    %s3698 = scalar_lea.vmem %s12, 1
    %v3699 = vld [vmem:[%s3698] sm:$0x1]
    %v3700 = vsel %vm195, %v3694, 0.0
    %3701 = vadd.xlane.f32.xlu0 %v3700
    %v3702 = vpop.xlane.xlu0 %3701
    %v3703 = vsel %vm199, %v3695, 0.0
    %3704 = vadd.xlane.f32.xlu0 %v3703
    %v3705 = vpop.xlane.xlu0 %3704
    %v3706 = vmul.f32 %v3702, %v203
    %v3707 = vmul.f32 %v3705, %v203
    %v3708 = vsub.f32 %v3694, %v3706
    %v3709 = vsub.f32 %v3695, %v3707
    %v3710 = vmul.f32 %v3708, %v3708
    %v3711 = vmul.f32 %v3709, %v3709
    %v3712 = vsel %vm195, %v3710, 0.0
    %3713 = vadd.xlane.f32.xlu0 %v3712
    %v3714 = vpop.xlane.xlu0 %3713
    %v3715 = vsel %vm199, %v3711, 0.0
    %3716 = vadd.xlane.f32.xlu0 %v3715
    %v3717 = vpop.xlane.xlu0 %3716
    %v3718 = vmul.f32 %v3714, %v203
    %v3719 = vmul.f32 %v3717, %v203
    %v3720 = vadd.f32 %v3718, 1e-06
    %v3721 = vadd.f32 %v3719, 1e-06
    %v3722 = vrsqrt.pop %v3720
    %v3723 = vrsqrt.pop %v3721
    %v3724 = vmul.f32 %v3708, %v3722
    %v3725 = vmul.f32 %v3709, %v3723
    %v3727 = vlaneseq
    %v3728 = vshrl.u32 %v3727, 7
    %v3729 = vsub.s32 0, %v3728
    %v3730 = vrot.slane %v3697, %v3729
    %v3732 = vmul.f32 %v3724, %v3730
    %v3733 = vmul.f32 %v3725, %v3730
    %v3735 = vlaneseq
    %v3736 = vshrl.u32 %v3735, 7
    %v3737 = vsub.s32 0, %v3736
    %v3738 = vrot.slane %v3699, %v3737
    %v3740 = vadd.f32 %v3732, %v3738
    %v3741 = vadd.f32 %v3733, %v3738
    %s3742 = scalar_lea.vmem %s13, 32
    %v3743 = vld [vmem:[%s3742] sm:$0xff]
    %v3744 = vld [vmem:[%s3742 + $0x8] sm:$0xff]
    %v3745 = vld [vmem:[%s3742 + $0x10] sm:$0xff]
    %v3746 = vld [vmem:[%s3742 + $0x18] sm:$0xff]
    %s3747 = scalar_lea.vmem %s14, 1
    %v3748 = vld [vmem:[%s3747] sm:$0x1]
    %v3750 = vlaneseq
    %v3751 = vshrl.u32 %v3750, 7
    %v3752 = vsub.s32 0, %v3751
    %v3753 = vrot.slane %v3748, %v3752
    %v3756 = vsel %vm195, %v3740, 0
    %v3759 = vsel %vm195, %v3741, 0
    %3761 = vmatprep.subr.mxu0 0.0
    %3762 = vmatpush1.msra.mxu0 %v3743
    %3763 = vmatprep.subr.mxu0 0.0
    %3764 = vmatpush1.msra.mxu0 %v3744
    %3765 = vmatprep.subr.mxu0 0.0
    %3766 = vmatpush1.msra.mxu0 %v3745
    %3767 = vmatprep.subr.mxu0 0.0
    %3768 = vmatpush1.msra.mxu0 %v3746
    %3769 = vmatprep.subr.mxu0 0.0
    %3770 = vmatpush1.msra.mxu0 0.0
    %3771 = vmatprep.subr.mxu0 0.0
    %3772 = vmatpush1.msra.mxu0 0.0
    %3773 = vmatprep.subr.mxu0 0.0
    %3774 = vmatpush1.msra.mxu0 0.0
    %3775 = vmatprep.subr.mxu0 0.0
    %3776 = vmatpush1.msra.mxu0 0.0
    %3777 = vmatprep.subr.mxu0 0.0
    %3778 = vmatpush1.msra.mxu0 0.0
    %3779 = vmatprep.subr.mxu0 0.0
    %3780 = vmatpush1.msra.mxu0 0.0
    %3781 = vmatprep.subr.mxu0 0.0
    %3782 = vmatpush1.msra.mxu0 0.0
    %3783 = vmatprep.subr.mxu0 0.0
    %3784 = vmatpush1.msra.mxu0 0.0
    %3785 = vmatprep.subr.mxu0 0.0
    %3786 = vmatpush1.msra.mxu0 0.0
    %3787 = vmatprep.subr.mxu0 0.0
    %3788 = vmatpush1.msra.mxu0 0.0
    %3789 = vmatprep.subr.mxu0 0.0
    %3790 = vmatpush1.msra.mxu0 0.0
    %3791 = vmatprep.subr.mxu0 0.0
    %3792 = vmatpush1.msra.mxu0 0.0
    %3793 = vmatprep.subr.mxu0 0.0
    %3794 = vmatpush1.msra.mxu0 0.0
    %3795 = vmatprep.subr.mxu0 0.0
    %3796 = vmatpush1.msra.mxu0 0.0
    %3797 = vmatprep.subr.mxu0 0.0
    %3798 = vmatpush1.msra.mxu0 0.0
    %3799 = vmatprep.subr.mxu0 0.0
    %3800 = vmatpush1.msra.mxu0 0.0
    %3801 = vmatprep.subr.mxu0 0.0
    %3802 = vmatpush1.msra.mxu0 0.0
    %3803 = vmatprep.subr.mxu0 0.0
    %3804 = vmatpush1.msra.mxu0 0.0
    %3805 = vmatprep.subr.mxu0 0.0
    %3806 = vmatpush1.msra.mxu0 0.0
    %3807 = vmatprep.subr.mxu0 0.0
    %3808 = vmatpush1.msra.mxu0 0.0
    %3809 = vmatprep.subr.mxu0 0.0
    %3810 = vmatpush1.msra.mxu0 0.0
    %3811 = vmatprep.subr.mxu0 0.0
    %3812 = vmatpush1.msra.mxu0 0.0
    %3813 = vmatprep.subr.mxu0 0.0
    %3814 = vmatpush1.msra.mxu0 0.0
    %3815 = vmatprep.subr.mxu0 0.0
    %3816 = vmatpush1.msra.mxu0 0.0
    %3817 = vmatprep.subr.mxu0 0.0
    %3818 = vmatpush1.msra.mxu0 0.0
    %3819 = vmatprep.subr.mxu0 0.0
    %3820 = vmatpush1.msra.mxu0 0.0
    %3821 = vmatprep.subr.mxu0 0.0
    %3822 = vmatpush1.msra.mxu0 0.0
    %3823 = vmatprep.subr.mxu0 0.0
    %3824 = vmatpush1.msra.mxu0 0.0
    %3825 = vmatprep.mubr.f32.mxu0 0.0
    %3826 = vmatmul.mubr.f32.gmra.mrb[0].mxu0 %v3756
    %v3827 = vpop.f32.mrb[0].mxu0
    %v3828 = vadd.f32 %v3753, %v3827
    %v3829 = vpop.f32.mrb[0].mxu0
    %3830 = vmatprep.mubr.f32.mxu0 0.0
    %3831 = vmatmul.mubr.f32.gmra.mrb[0].mxu0 %v3759
    %v3832 = vpop.f32.mrb[0].mxu0
    %v3833 = vadd.f32 %v3753, %v3832
    %v3834 = vpop.f32.mrb[0].mxu0
    %3835 = vdwg.mxu0
    %v3836 = vmul.f32 %v3828, 0.5
    %v3837 = vmul.f32 %v3833, 0.5
    %v3838 = vmul.f32 %v3828, 0.70710677
    %v3839 = vmul.f32 %v3833, 0.70710677
    %v3840 = vand.u32 2147483647, %v3838
    %v3841 = vand.u32 2147483647, %v3839
    %v3842 = vmul.f32 %v3840, 0.3275911
    %v3843 = vmul.f32 %v3841, 0.3275911
    %v3844 = vadd.f32 %v3842, 1.0
    %v3845 = vadd.f32 %v3843, 1.0
    %v3846 = vrcp.pop %v3844
    %v3847 = vmul.f32 1.0, %v3846
    %v3848 = vrcp.pop %v3845
    %v3849 = vmul.f32 1.0, %v3848
    %v3850 = vmul.f32 %v3847, 1.0614054
    %v3851 = vmul.f32 %v3849, 1.0614054
    %v3852 = vadd.f32 %v3850, -1.4531521
    %v3853 = vadd.f32 %v3851, -1.4531521
    %v3854 = vmul.f32 %v3852, %v3847
    %v3855 = vmul.f32 %v3853, %v3849
    %v3856 = vadd.f32 %v3854, 1.4214138
    %v3857 = vadd.f32 %v3855, 1.4214138
    %v3858 = vmul.f32 %v3856, %v3847
    %v3859 = vmul.f32 %v3857, %v3849
    %v3860 = vadd.f32 %v3858, -0.28449672
    %v3861 = vadd.f32 %v3859, -0.28449672
    %v3862 = vmul.f32 %v3860, %v3847
    %v3863 = vmul.f32 %v3861, %v3849
    %v3864 = vadd.f32 %v3862, 0.2548296
    %v3865 = vadd.f32 %v3863, 0.2548296
    %v3866 = vmul.f32 %v3864, %v3847
    %v3867 = vmul.f32 %v3865, %v3849
    %v3868 = vmul.f32 %v3840, %v3840
    %v3869 = vmul.f32 %v3841, %v3841
    %v3870 = vsub.f32 0.0, %v3868
    %v3871 = vsub.f32 0.0, %v3869
    %v3872 = vmul.f32 %v3870, 1.442695
    %v3873 = vpow.pop %v3872
    %v3874 = vmul.f32 %v3871, 1.442695
    %v3875 = vpow.pop %v3874
    %v3876 = vmul.f32 %v3866, %v3873
    %v3877 = vmul.f32 %v3867, %v3875
    %v3878 = vsub.f32 1.0, %v3876
    %v3879 = vsub.f32 1.0, %v3877
    %vm3880 = vcmp.ge.f32.partialorder %v3838, 0.0
    %vm3881 = vcmp.ge.f32.partialorder %v3839, 0.0
    %v3882 = vsub.f32 0.0, %v3878
    %v3883 = vsub.f32 0.0, %v3879
    %v3884 = vsel %vm3880, %v3878, %v3882
    %v3885 = vsel %vm3881, %v3879, %v3883
    %v3886 = vadd.f32 %v3884, 1.0
    %v3887 = vadd.f32 %v3885, 1.0
    %v3888 = vmul.f32 %v3836, %v3886
    %v3889 = vmul.f32 %v3837, %v3887
    %s3890 = scalar_lea.vmem %s15, 64
    %v3891 = vld [vmem:[%s3890] sm:$0xff]
    %v3892 = vld [vmem:[%s3890 + $0x8] sm:$0xff]
    %v3893 = vld [vmem:[%s3890 + $0x10] sm:$0xff]
    %v3894 = vld [vmem:[%s3890 + $0x18] sm:$0xff]
    %v3895 = vld [vmem:[%s3890 + $0x20] sm:$0xff]
    %v3896 = vld [vmem:[%s3890 + $0x28] sm:$0xff]
    %v3897 = vld [vmem:[%s3890 + $0x30] sm:$0xff]
    %v3898 = vld [vmem:[%s3890 + $0x38] sm:$0xff]
    %s3899 = scalar_lea.vmem %s16, 1
    %v3900 = vld [vmem:[%s3899] sm:$0x1]
    %v3902 = vlaneseq
    %v3903 = vshrl.u32 %v3902, 7
    %v3904 = vsub.s32 0, %v3903
    %v3905 = vrot.slane %v3900, %v3904
    %v3908 = vsel %vm102, %v3888, 0
    %v3911 = vsel %vm102, %v3889, 0
    %3913 = vmatprep.subr.mxu0 0.0
    %3914 = vmatpush1.msra.mxu0 %v3891
    %3915 = vmatprep.subr.mxu0 0.0
    %3916 = vmatpush1.msra.mxu0 %v3892
    %3917 = vmatprep.subr.mxu0 0.0
    %3918 = vmatpush1.msra.mxu0 %v3893
    %3919 = vmatprep.subr.mxu0 0.0
    %3920 = vmatpush1.msra.mxu0 %v3894
    %3921 = vmatprep.subr.mxu0 0.0
    %3922 = vmatpush1.msra.mxu0 %v3895
    %3923 = vmatprep.subr.mxu0 0.0
    %3924 = vmatpush1.msra.mxu0 %v3896
    %3925 = vmatprep.subr.mxu0 0.0
    %3926 = vmatpush1.msra.mxu0 %v3897
    %3927 = vmatprep.subr.mxu0 0.0
    %3928 = vmatpush1.msra.mxu0 %v3898
    %3929 = vmatprep.subr.mxu0 0.0
    %3930 = vmatpush1.msra.mxu0 0.0
    %3931 = vmatprep.subr.mxu0 0.0
    %3932 = vmatpush1.msra.mxu0 0.0
    %3933 = vmatprep.subr.mxu0 0.0
    %3934 = vmatpush1.msra.mxu0 0.0
    %3935 = vmatprep.subr.mxu0 0.0
    %3936 = vmatpush1.msra.mxu0 0.0
    %3937 = vmatprep.subr.mxu0 0.0
    %3938 = vmatpush1.msra.mxu0 0.0
    %3939 = vmatprep.subr.mxu0 0.0
    %3940 = vmatpush1.msra.mxu0 0.0
    %3941 = vmatprep.subr.mxu0 0.0
    %3942 = vmatpush1.msra.mxu0 0.0
    %3943 = vmatprep.subr.mxu0 0.0
    %3944 = vmatpush1.msra.mxu0 0.0
    %3945 = vmatprep.subr.mxu0 0.0
    %3946 = vmatpush1.msra.mxu0 0.0
    %3947 = vmatprep.subr.mxu0 0.0
    %3948 = vmatpush1.msra.mxu0 0.0
    %3949 = vmatprep.subr.mxu0 0.0
    %3950 = vmatpush1.msra.mxu0 0.0
    %3951 = vmatprep.subr.mxu0 0.0
    %3952 = vmatpush1.msra.mxu0 0.0
    %3953 = vmatprep.subr.mxu0 0.0
    %3954 = vmatpush1.msra.mxu0 0.0
    %3955 = vmatprep.subr.mxu0 0.0
    %3956 = vmatpush1.msra.mxu0 0.0
    %3957 = vmatprep.subr.mxu0 0.0
    %3958 = vmatpush1.msra.mxu0 0.0
    %3959 = vmatprep.subr.mxu0 0.0
    %3960 = vmatpush1.msra.mxu0 0.0
    %3961 = vmatprep.subr.mxu0 0.0
    %3962 = vmatpush1.msra.mxu0 0.0
    %3963 = vmatprep.subr.mxu0 0.0
    %3964 = vmatpush1.msra.mxu0 0.0
    %3965 = vmatprep.subr.mxu0 0.0
    %3966 = vmatpush1.msra.mxu0 0.0
    %3967 = vmatprep.subr.mxu0 0.0
    %3968 = vmatpush1.msra.mxu0 0.0
    %3969 = vmatprep.subr.mxu0 0.0
    %3970 = vmatpush1.msra.mxu0 0.0
    %3971 = vmatprep.subr.mxu0 0.0
    %3972 = vmatpush1.msra.mxu0 0.0
    %3973 = vmatprep.subr.mxu0 0.0
    %3974 = vmatpush1.msra.mxu0 0.0
    %3975 = vmatprep.subr.mxu0 0.0
    %3976 = vmatpush1.msra.mxu0 0.0
    %3977 = vmatprep.mubr.f32.mxu0 0.0
    %3978 = vmatmul.mubr.f32.gmra.mrb[0].mxu0 %v3908
    %v3979 = vpop.f32.mrb[0].mxu0
    %v3980 = vadd.f32 %v3905, %v3979
    %v3981 = vpop.f32.mrb[0].mxu0
    %3982 = vmatprep.mubr.f32.mxu0 0.0
    %3983 = vmatmul.mubr.f32.gmra.mrb[0].mxu0 %v3911
    %v3984 = vpop.f32.mrb[0].mxu0
    %v3985 = vpop.f32.mrb[0].mxu0
    %3986 = vdwg.mxu0
    %v3987 = vadd.f32 %v3694, %v3980
    %v3988 = vld [vmem:[%s17] sm:$0x1]
    %v3989 = vld [vmem:[%s18] sm:$0x1]
    %v3990 = vsel %vm195, %v3987, 0.0
    %3991 = vadd.xlane.f32.xlu0 %v3990
    %v3992 = vpop.xlane.xlu0 %3991
    %v3993 = vmul.f32 %v3992, %v203
    %v3994 = vsub.f32 %v3987, %v3993
    %v3995 = vmul.f32 %v3994, %v3994
    %v3996 = vsel %vm195, %v3995, 0.0
    %3997 = vadd.xlane.f32.xlu0 %v3996
    %v3998 = vpop.xlane.xlu0 %3997
    %v3999 = vmul.f32 %v3998, %v203
    %v4000 = vadd.f32 %v3999, 1e-06
    %v4001 = vrsqrt.pop %v4000
    %v4002 = vmul.f32 %v3994, %v4001
    %v4004 = vlaneseq
    %v4005 = vshrl.u32 %v4004, 7
    %v4006 = vsub.s32 0, %v4005
    %v4007 = vrot.slane %v3988, %v4006
    %v4009 = vmul.f32 %v4002, %v4007
    %v4011 = vlaneseq
    %v4012 = vshrl.u32 %v4011, 7
    %v4013 = vsub.s32 0, %v4012
    %v4014 = vrot.slane %v3989, %v4013
    %v4016 = vadd.f32 %v4009, %v4014
    %v4018 = vrot.slane %v4016, 4
    %v4020 = vsel %vm181, %v4016, %v4018
    %v4021 = vld [vmem:[%s19] sm:$0xff]
    %v4022 = vld [vmem:[%s19 + $0x8] sm:$0xff]
    %v4023 = vld [vmem:[%s19 + $0x10] sm:$0xff]
    %v4024 = vld [vmem:[%s19 + $0x18] sm:$0xff]
    %v4025 = vld [vmem:[%s20] sm:$0x1]
    %v4027 = vlaneseq
    %v4028 = vshrl.u32 %v4027, 7
    %v4029 = vsub.s32 0, %v4028
    %v4030 = vrot.slane %v4025, %v4029
    %v4033 = vsel %vm195, %v4020, 0
    %4035 = vmatprep.subr.mxu0 0.0
    %4036 = vmatpush1.msra.mxu0 %v4021
    %4037 = vmatprep.subr.mxu0 0.0
    %4038 = vmatpush1.msra.mxu0 %v4022
    %4039 = vmatprep.subr.mxu0 0.0
    %4040 = vmatpush1.msra.mxu0 %v4023
    %4041 = vmatprep.subr.mxu0 0.0
    %4042 = vmatpush1.msra.mxu0 %v4024
    %4043 = vmatprep.subr.mxu0 0.0
    %4044 = vmatpush1.msra.mxu0 0.0
    %4045 = vmatprep.subr.mxu0 0.0
    %4046 = vmatpush1.msra.mxu0 0.0
    %4047 = vmatprep.subr.mxu0 0.0
    %4048 = vmatpush1.msra.mxu0 0.0
    %4049 = vmatprep.subr.mxu0 0.0
    %4050 = vmatpush1.msra.mxu0 0.0
    %4051 = vmatprep.subr.mxu0 0.0
    %4052 = vmatpush1.msra.mxu0 0.0
    %4053 = vmatprep.subr.mxu0 0.0
    %4054 = vmatpush1.msra.mxu0 0.0
    %4055 = vmatprep.subr.mxu0 0.0
    %4056 = vmatpush1.msra.mxu0 0.0
    %4057 = vmatprep.subr.mxu0 0.0
    %4058 = vmatpush1.msra.mxu0 0.0
    %4059 = vmatprep.subr.mxu0 0.0
    %4060 = vmatpush1.msra.mxu0 0.0
    %4061 = vmatprep.subr.mxu0 0.0
    %4062 = vmatpush1.msra.mxu0 0.0
    %4063 = vmatprep.subr.mxu0 0.0
    %4064 = vmatpush1.msra.mxu0 0.0
    %4065 = vmatprep.subr.mxu0 0.0
    %4066 = vmatpush1.msra.mxu0 0.0
    %4067 = vmatprep.subr.mxu0 0.0
    %4068 = vmatpush1.msra.mxu0 0.0
    %4069 = vmatprep.subr.mxu0 0.0
    %4070 = vmatpush1.msra.mxu0 0.0
    %4071 = vmatprep.subr.mxu0 0.0
    %4072 = vmatpush1.msra.mxu0 0.0
    %4073 = vmatprep.subr.mxu0 0.0
    %4074 = vmatpush1.msra.mxu0 0.0
    %4075 = vmatprep.subr.mxu0 0.0
    %4076 = vmatpush1.msra.mxu0 0.0
    %4077 = vmatprep.subr.mxu0 0.0
    %4078 = vmatpush1.msra.mxu0 0.0
    %4079 = vmatprep.subr.mxu0 0.0
    %4080 = vmatpush1.msra.mxu0 0.0
    %4081 = vmatprep.subr.mxu0 0.0
    %4082 = vmatpush1.msra.mxu0 0.0
    %4083 = vmatprep.subr.mxu0 0.0
    %4084 = vmatpush1.msra.mxu0 0.0
    %4085 = vmatprep.subr.mxu0 0.0
    %4086 = vmatpush1.msra.mxu0 0.0
    %4087 = vmatprep.subr.mxu0 0.0
    %4088 = vmatpush1.msra.mxu0 0.0
    %4089 = vmatprep.subr.mxu0 0.0
    %4090 = vmatpush1.msra.mxu0 0.0
    %4091 = vmatprep.subr.mxu0 0.0
    %4092 = vmatpush1.msra.mxu0 0.0
    %4093 = vmatprep.subr.mxu0 0.0
    %4094 = vmatpush1.msra.mxu0 0.0
    %4095 = vmatprep.subr.mxu0 0.0
    %4096 = vmatpush1.msra.mxu0 0.0
    %4097 = vmatprep.subr.mxu0 0.0
    %4098 = vmatpush1.msra.mxu0 0.0
    %4099 = vmatprep.mubr.f32.mxu0 0.0
    %4100 = vmatmul.mubr.f32.gmra.mrb[0].mxu0 %v4033
    %v4101 = vpop.f32.mrb[0].mxu0
    %v4102 = vadd.f32 %v4030, %v4101
    %v4103 = vpop.f32.mrb[0].mxu0
    %4104 = vdwg.mxu0
    %4105 = vst [vmem:[#allocation2] sm:$0x3] %v4102
    // Predicated region
    $region86: #{vit_forward.1} parent=1 // pred_check
      _
    $region87: #{vit_forward.1} parent=1 // pred_check_branch
      %4107 = sbr.rel (0) target = $region89
    $region88: #{vit_forward.1} parent=1 // pred_region
      %s4109 = ssub.s32 32, 32
      %4110 = vsyncadd [#allocation3], %s4109
      %s4112 = sshll.u32 [#allocation2], 4
      %s4113 = int_to_ptr.vmem [resolvable:$true] %s4112
      %4115 = dma.vmem_to_hbm [thread:$0]  %s4113, 32, %s21, [#allocation3]
    $region89: #{vit_forward.1} parent=1 // pred_fallthru
      _
    // Predicated region
    $region90: #{vit_forward.1} parent=1 // pred_check
      _
    $region91: #{vit_forward.1} parent=1 // pred_check_branch
      %4117 = sbr.rel (0) target = $region93
    $region92: #{vit_forward.1} parent=1 // pred_region
      %4118 = dma.done [#allocation3], 32
    $region93: #{vit_forward.1} parent=1 // pred_fallthru
      _
    %4119 = vsyncpa [#allocation3], 1

</llo_original>
